<compile_context>
chip_gen: v5e
topology: v5e:2x2
jax: 0.10.0
libtpu: 0.0.40
codegen_flags: <defaults>
</compile_context>

<pallas_src>
import functools

import jax
import jax.numpy as jnp
from jax.experimental import pallas as pl
from jax.experimental.pallas import tpu as pltpu

BN_EPS = 1e-5
LRELU_SLOPE = 0.1           # nn.LeakyReLU(0.1) in the original module

KH, KW = 20, 40             # conv1 kernel
C1, C1P = 12, 16            # conv1 out channels, padded to 16 (bf16 tile)
C2, C2P = 5, 16             # conv2 out channels, padded to 16 (so conv3's
                            # stacked taps stay 16-row aligned)
C3, C3P = 5, 8              # conv3 out channels, padded to 8
K_STACK = 9 * C1P           # stacked-tap contraction size (== 9 * C2P == 144)
assert C1P == C2P           # conv2/conv3 reuse the same (144, Lpad) scratch


def _lrelu(v):
    return jnp.where(v >= 0, v, LRELU_SLOPE * v)


def _tcrnet_fused_kernel(p_ref, w1_ref, t1_ref, w2_ref, t2_ref,
                         w3_ref, t3_ref, w4_ref, t4_ref, o_ref, s_ref,
                         *, row_stride, lpad):
    """Whole tcrNet_lite forward for ONE image; lane axis = flat (h, w1) grid.

    p_ref : (1, KW, Lpad) bf16   KW-only im2col: p[kw, h*W1+w1] = x[h, w1+kw]
    w1_ref: (KH*C1P, KW) bf16    conv1 weight (BN1 scale folded), row = dh*16+c
    t1_ref: (C1P, 1)  f32        folded conv1 bias + BN1 shift
    w2_ref: (C2P, 144) bf16      conv2 weight (BN2 folded), col = (dh*3+dw)*16+cin
    w3_ref: (C3P, 144) bf16      conv3 weight (BN3 folded)
    w4_ref: (1, C3P)  bf16       conv4 1x1 weight;  t4_ref: (1, 1) conv4 bias
    o_ref : (1, 1, Lpad) f32     conv4 output on the same flat grid
    s_ref : (144, Lpad) bf16     scratch: stacked rolled taps (reused by conv2/conv3)
    row_stride = W1 (lane distance of one image row on the flat grid).
    """

    def shifted(a, s):
        # shifted[:, j] = a[:, (j + s) % lpad].  Wrap-around only touches
        # columns whose outputs are discarded by the wrapper-side slice.
        if s == 0:
            return a
        return pltpu.roll(a, lpad - s, axis=1)

    # ---- conv1 + BN1 + LeakyReLU -------------------------------------------
    # ONE fat-output matmul over all 20 kernel rows (MXU contracts KW=40),
    # then 20 lane-rolls of the (16, Lpad) f32 partials summed on the VPU.
    q1 = jnp.dot(w1_ref[...], p_ref[0], preferred_element_type=jnp.float32)
    acc = q1[0:C1P, :]
    for dh in range(1, KH):
        acc = acc + shifted(q1[dh * C1P:(dh + 1) * C1P, :], dh * row_stride)
    a1 = _lrelu(acc + t1_ref[...])                       # (C1P, Lpad) f32

    # ---- conv2 + BN2 + LeakyReLU: stack 9 rolled taps -> ONE K=144 matmul ---
    for kk in range(9):
        dh, dw = divmod(kk, 3)
        s_ref[kk * C1P:(kk + 1) * C1P, :] = (
            shifted(a1, dh * row_stride + dw).astype(jnp.bfloat16))
    a2 = _lrelu(jnp.dot(w2_ref[...], s_ref[...],
                        preferred_element_type=jnp.float32) + t2_ref[...])

    # ---- conv3 + BN3 + LeakyReLU: same trick, scratch reused ----------------
    for kk in range(9):
        dh, dw = divmod(kk, 3)
        s_ref[kk * C2P:(kk + 1) * C2P, :] = (
            shifted(a2, dh * row_stride + dw).astype(jnp.bfloat16))
    a3 = _lrelu(jnp.dot(w3_ref[...], s_ref[...],
                        preferred_element_type=jnp.float32) + t3_ref[...])

    # ---- conv4: 1x1, no BN, no activation -----------------------------------
    o = jnp.dot(w4_ref[...], a3.astype(jnp.bfloat16),
                preferred_element_type=jnp.float32) + t4_ref[...]
    o_ref[0] = o


def fold_bn(gamma, beta, running_mean, running_var, eps=BN_EPS):
    scale = gamma / jnp.sqrt(running_var + eps)
    shift = beta - running_mean * scale
    return scale, shift


def init_params(key):
    ks = jax.random.split(key, 16)
    p = {}
    # conv1: (12, 1, 20, 40) -- stands in for the QCF filter bank
    p["w1"] = 0.05 * jax.random.normal(ks[0], (C1, 1, KH, KW), jnp.float32)
    p["b1"] = 0.01 * jax.random.normal(ks[1], (C1,), jnp.float32)
    # conv2: (5, 12, 3, 3)
    p["w2"] = 0.1 * jax.random.normal(ks[2], (C2, C1, 3, 3), jnp.float32)
    p["b2"] = 0.01 * jax.random.normal(ks[3], (C2,), jnp.float32)
    # conv3: (5, 5, 3, 3)
    p["w3"] = 0.1 * jax.random.normal(ks[4], (C3, C2, 3, 3), jnp.float32)
    p["b3"] = 0.01 * jax.random.normal(ks[5], (C3,), jnp.float32)
    # conv4: (1, 5, 1, 1)
    p["w4"] = 0.1 * jax.random.normal(ks[6], (1, C3, 1, 1), jnp.float32)
    p["b4"] = 0.01 * jax.random.normal(ks[7], (1,), jnp.float32)
    # BatchNorm params (eval mode), folded to per-channel scale/shift.
    for i, c, kbase in ((1, C1, 8), (2, C2, 10), (3, C3, 12)):
        gamma = 1.0 + 0.1 * jax.random.normal(ks[kbase], (c,), jnp.float32)
        beta = 0.1 * jax.random.normal(ks[kbase + 1], (c,), jnp.float32)
        rmean = 0.05 * jax.random.normal(jax.random.fold_in(ks[kbase], 7), (c,), jnp.float32)
        rvar = 1.0 + 0.1 * jax.random.uniform(jax.random.fold_in(ks[kbase + 1], 7), (c,), jnp.float32)
        s, t = fold_bn(gamma, beta, rmean, rvar)
        p[f"s{i}"], p[f"t{i}"] = s, t
    return p


@jax.jit
def tcrnet_lite_forward(x, p):
    """x: (N, 1, H, W) float32 NCHW -> (N, 1, H-23, W-43) float32."""
    N, C, H, W = x.shape
    assert C == 1 and H >= KH + 4 and W >= KW + 4, (N, C, H, W)
    H1, W1 = H - KH + 1, W - KW + 1                # conv1 output spatial dims
    Ho, Wo = H1 - 4, W1 - 4                        # final output spatial dims
    L = H * W1                                     # per-image flat grid length
    Lpad = max(128, ((L + 127) // 128) * 128)      # lane-dense padded width

    # ---- KW-only im2col (40x, vs the old 800x): P[n, kw, h*W1+w1] = x[n,0,h,w1+kw]
    pat = jnp.stack([x[:, 0, :, kw:kw + W1] for kw in range(KW)], axis=1)  # (N,KW,H,W1)
    pat = pat.reshape(N, KW, L)
    pat = jnp.pad(pat, ((0, 0), (0, 0), (0, Lpad - L))).astype(jnp.bfloat16)

    # ---- fold conv bias + eval-mode BN into lane/sublane-aligned 2D weights ----
    # conv1: (KH*C1P, KW), row = dh*16 + c   (padded channels have zero weight)
    w1s = p["w1"][:, 0] * p["s1"][:, None, None]                     # (12, 20, 40)
    w1s = jnp.pad(w1s, ((0, C1P - C1), (0, 0), (0, 0)))              # (16, 20, 40)
    w1f = w1s.transpose(1, 0, 2).reshape(KH * C1P, KW).astype(jnp.bfloat16)
    t1 = jnp.pad(p["b1"] * p["s1"] + p["t1"], (0, C1P - C1)).reshape(C1P, 1).astype(jnp.float32)

    # conv2: (C2P, 9*C1P), col = (dh*3+dw)*16 + cin
    w2s = (p["w2"] * p["s2"][:, None, None, None]).transpose(0, 2, 3, 1)   # (5,3,3,12)
    w2s = jnp.pad(w2s, ((0, C2P - C2), (0, 0), (0, 0), (0, C1P - C1)))     # (16,3,3,16)
    w2f = w2s.reshape(C2P, 9 * C1P).astype(jnp.bfloat16)
    t2 = jnp.pad(p["b2"] * p["s2"] + p["t2"], (0, C2P - C2)).reshape(C2P, 1).astype(jnp.float32)

    # conv3: (C3P, 9*C2P)
    w3s = (p["w3"] * p["s3"][:, None, None, None]).transpose(0, 2, 3, 1)   # (5,3,3,5)
    w3s = jnp.pad(w3s, ((0, C3P - C3), (0, 0), (0, 0), (0, C2P - C2)))     # (8,3,3,16)
    w3f = w3s.reshape(C3P, 9 * C2P).astype(jnp.bfloat16)
    t3 = jnp.pad(p["b3"] * p["s3"] + p["t3"], (0, C3P - C3)).reshape(C3P, 1).astype(jnp.float32)

    # conv4: 1x1, no BN
    w4f = jnp.pad(p["w4"].reshape(1, C3), ((0, 0), (0, C3P - C3))).astype(jnp.bfloat16)
    t4 = p["b4"].reshape(1, 1).astype(jnp.float32)

    out = pl.pallas_call(
        functools.partial(_tcrnet_fused_kernel, row_stride=W1, lpad=Lpad),
        out_shape=jax.ShapeDtypeStruct((N, 1, Lpad), jnp.float32),
        grid=(N,),                                   # one image per grid step
        in_specs=[
            pl.BlockSpec((1, KW, Lpad), lambda n: (n, 0, 0)),     # patches (per image)
            pl.BlockSpec((KH * C1P, KW), lambda n: (0, 0)),       # conv1 weight
            pl.BlockSpec((C1P, 1), lambda n: (0, 0)),             # folded shift 1
            pl.BlockSpec((C2P, 9 * C1P), lambda n: (0, 0)),       # conv2 weight
            pl.BlockSpec((C2P, 1), lambda n: (0, 0)),             # folded shift 2
            pl.BlockSpec((C3P, 9 * C2P), lambda n: (0, 0)),       # conv3 weight
            pl.BlockSpec((C3P, 1), lambda n: (0, 0)),             # folded shift 3
            pl.BlockSpec((1, C3P), lambda n: (0, 0)),             # conv4 weight
            pl.BlockSpec((1, 1), lambda n: (0, 0)),               # conv4 bias
        ],
        out_specs=pl.BlockSpec((1, 1, Lpad), lambda n: (n, 0, 0)),
        scratch_shapes=[pltpu.VMEM((K_STACK, Lpad), jnp.bfloat16)],
        compiler_params=pltpu.CompilerParams(
            dimension_semantics=("parallel",),        # dual-TC on v7x
            vmem_limit_bytes=32 * 1024 * 1024,        # fits all generations
        ),
    )(pat, w1f, t1, w2f, t2, w3f, t3, w4f, t4)

    # Output lives on conv1's flat per-image grid; slice the valid window.
    # TODO(synk): could be written lane-dense (N*Ho, Wo_pad) in-kernel; the
    # strided relayout is not worth it at these sizes.
    y = out[:, 0, :L].reshape(N, H, W1)[:, :Ho, :Wo]
    return y[:, None, :, :]


def _ref_forward(x, p):
    """Pure-JAX (XLA) reference of tcrNet_lite in eval mode, for tolerance check."""
    def conv(h, w, b):
        y = jax.lax.conv_general_dilated(h, w, window_strides=(1, 1), padding="VALID",
                                         dimension_numbers=("NCHW", "OIHW", "NCHW"))
        return y + b[None, :, None, None]

    def bn(h, s, t):
        return h * s[None, :, None, None] + t[None, :, None, None]

    h = _lrelu(bn(conv(x, p["w1"], p["b1"]), p["s1"], p["t1"]))
    h = _lrelu(bn(conv(h, p["w2"], p["b2"]), p["s2"], p["t2"]))
    h = _lrelu(bn(conv(h, p["w3"], p["b3"]), p["s3"], p["t3"]))
    return conv(h, p["w4"], p["b4"])


if __name__ == "__main__":
    key = jax.random.PRNGKey(0)
    kx, kp = jax.random.split(key)
    # 1 input channel, spatial size large enough for the (20, 40) first kernel.
    # Output: (2, 1, 9, 13).
    x = jax.random.normal(kx, (2, 1, 32, 56), jnp.float32)
    params = init_params(kp)

    y = jax.block_until_ready(tcrnet_lite_forward(x, params))
    assert y.shape == (2, 1, 32 - 23, 56 - 43), y.shape
    assert y.dtype == jnp.float32

    # Tolerance-checked comparison against the pure-JAX reference (bf16 MXU
    # inputs with f32 accumulation -> sub-percent error expected).
    y_ref = jax.block_until_ready(_ref_forward(x, params))
    rel_err = float(jnp.max(jnp.abs(y - y_ref)) / (jnp.max(jnp.abs(y_ref)) + 1e-6))
    assert rel_err < 5e-2, rel_err

    print("KERNEL_OK")
</pallas_src>

<mosaic_0001>
module attributes {stable_mosaic.version = 11 : i64} {
  func.func @_tcrnet_fused_kernel(%arg0: i32, %arg1: memref<1x40x640xbf16, #tpu.memory_space<vmem>>, %arg2: memref<320x40xbf16, #tpu.memory_space<vmem>>, %arg3: memref<16x1xf32, #tpu.memory_space<vmem>>, %arg4: memref<16x144xbf16, #tpu.memory_space<vmem>>, %arg5: memref<16x1xf32, #tpu.memory_space<vmem>>, %arg6: memref<8x144xbf16, #tpu.memory_space<vmem>>, %arg7: memref<8x1xf32, #tpu.memory_space<vmem>>, %arg8: memref<1x8xbf16, #tpu.memory_space<vmem>>, %arg9: memref<1x1xf32, #tpu.memory_space<vmem>>, %arg10: memref<1x1x640xf32, #tpu.memory_space<vmem>>, %arg11: memref<144x640xbf16, #tpu.memory_space<vmem>>) attributes {dimension_semantics = [#tpu.dimension_semantics<parallel>], iteration_bounds = array<i64: 2>, scalar_prefetch = 0 : i64, scratch_operands = 1 : i64, tpu.core_type = #tpu.core_type<tc>, window_params = [{transform_indices = @transform_0, window_bounds = array<i64: 1, 40, 640>}, {pipeline_mode = #tpu.pipeline_mode<synchronous>, transform_indices = @transform_1, window_bounds = array<i64: 320, 40>}, {pipeline_mode = #tpu.pipeline_mode<synchronous>, transform_indices = @transform_2, window_bounds = array<i64: 16, 1>}, {pipeline_mode = #tpu.pipeline_mode<synchronous>, transform_indices = @transform_3, window_bounds = array<i64: 16, 144>}, {pipeline_mode = #tpu.pipeline_mode<synchronous>, transform_indices = @transform_4, window_bounds = array<i64: 16, 1>}, {pipeline_mode = #tpu.pipeline_mode<synchronous>, transform_indices = @transform_5, window_bounds = array<i64: 8, 144>}, {pipeline_mode = #tpu.pipeline_mode<synchronous>, transform_indices = @transform_6, window_bounds = array<i64: 8, 1>}, {pipeline_mode = #tpu.pipeline_mode<synchronous>, transform_indices = @transform_7, window_bounds = array<i64: 1, 8>}, {pipeline_mode = #tpu.pipeline_mode<synchronous>, transform_indices = @transform_8, window_bounds = array<i64: 1, 1>}, {transform_indices = @transform_9, window_bounds = array<i64: 1, 1, 640>}]} {
    %c0 = arith.constant 0 : index
    %c0_0 = arith.constant 0 : index
    %0 = vector.load %arg2[%c0, %c0_0] : memref<320x40xbf16, #tpu.memory_space<vmem>>, vector<320x40xbf16>
    %c0_1 = arith.constant 0 : index
    %c0_2 = arith.constant 0 : index
    %c0_3 = arith.constant 0 : index
    %1 = vector.load %arg1[%c0_1, %c0_2, %c0_3] : memref<1x40x640xbf16, #tpu.memory_space<vmem>>, vector<1x40x640xbf16>
    %2 = vector.shape_cast %1 : vector<1x40x640xbf16> to vector<40x640xbf16>
    %cst = arith.constant dense<0.000000e+00> : vector<320x640xf32>
    %3 = tpu.matmul %0, %2, %cst {dimension_numbers = #tpu.dot_dimension_numbers<[1], [0], [0], [1], [0, 0, 1, 1], [], []>} : vector<320x40xbf16>, vector<40x640xbf16>, vector<320x640xf32> -> vector<320x640xf32>
    %4 = vector.extract_strided_slice %3 {offsets = [0, 0], sizes = [16, 640], strides = [1, 1]} : vector<320x640xf32> to vector<16x640xf32>
    %5 = vector.extract_strided_slice %3 {offsets = [16, 0], sizes = [16, 640], strides = [1, 1]} : vector<320x640xf32> to vector<16x640xf32>
    %c623_i32 = arith.constant 623 : i32
    %6 = tpu.dynamic_rotate %5 by %c623_i32 dim 1 : vector<16x640xf32>, i32 -> vector<16x640xf32>
    %7 = arith.addf %4, %6 : vector<16x640xf32>
    %8 = vector.extract_strided_slice %3 {offsets = [32, 0], sizes = [16, 640], strides = [1, 1]} : vector<320x640xf32> to vector<16x640xf32>
    %c606_i32 = arith.constant 606 : i32
    %9 = tpu.dynamic_rotate %8 by %c606_i32 dim 1 : vector<16x640xf32>, i32 -> vector<16x640xf32>
    %10 = arith.addf %7, %9 : vector<16x640xf32>
    %11 = vector.extract_strided_slice %3 {offsets = [48, 0], sizes = [16, 640], strides = [1, 1]} : vector<320x640xf32> to vector<16x640xf32>
    %c589_i32 = arith.constant 589 : i32
    %12 = tpu.dynamic_rotate %11 by %c589_i32 dim 1 : vector<16x640xf32>, i32 -> vector<16x640xf32>
    %13 = arith.addf %10, %12 : vector<16x640xf32>
    %14 = vector.extract_strided_slice %3 {offsets = [64, 0], sizes = [16, 640], strides = [1, 1]} : vector<320x640xf32> to vector<16x640xf32>
    %c572_i32 = arith.constant 572 : i32
    %15 = tpu.dynamic_rotate %14 by %c572_i32 dim 1 : vector<16x640xf32>, i32 -> vector<16x640xf32>
    %16 = arith.addf %13, %15 : vector<16x640xf32>
    %17 = vector.extract_strided_slice %3 {offsets = [80, 0], sizes = [16, 640], strides = [1, 1]} : vector<320x640xf32> to vector<16x640xf32>
    %c555_i32 = arith.constant 555 : i32
    %18 = tpu.dynamic_rotate %17 by %c555_i32 dim 1 : vector<16x640xf32>, i32 -> vector<16x640xf32>
    %19 = arith.addf %16, %18 : vector<16x640xf32>
    %20 = vector.extract_strided_slice %3 {offsets = [96, 0], sizes = [16, 640], strides = [1, 1]} : vector<320x640xf32> to vector<16x640xf32>
    %c538_i32 = arith.constant 538 : i32
    %21 = tpu.dynamic_rotate %20 by %c538_i32 dim 1 : vector<16x640xf32>, i32 -> vector<16x640xf32>
    %22 = arith.addf %19, %21 : vector<16x640xf32>
    %23 = vector.extract_strided_slice %3 {offsets = [112, 0], sizes = [16, 640], strides = [1, 1]} : vector<320x640xf32> to vector<16x640xf32>
    %c521_i32 = arith.constant 521 : i32
    %24 = tpu.dynamic_rotate %23 by %c521_i32 dim 1 : vector<16x640xf32>, i32 -> vector<16x640xf32>
    %25 = arith.addf %22, %24 : vector<16x640xf32>
    %26 = vector.extract_strided_slice %3 {offsets = [128, 0], sizes = [16, 640], strides = [1, 1]} : vector<320x640xf32> to vector<16x640xf32>
    %c504_i32 = arith.constant 504 : i32
    %27 = tpu.dynamic_rotate %26 by %c504_i32 dim 1 : vector<16x640xf32>, i32 -> vector<16x640xf32>
    %28 = arith.addf %25, %27 : vector<16x640xf32>
    %29 = vector.extract_strided_slice %3 {offsets = [144, 0], sizes = [16, 640], strides = [1, 1]} : vector<320x640xf32> to vector<16x640xf32>
    %c487_i32 = arith.constant 487 : i32
    %30 = tpu.dynamic_rotate %29 by %c487_i32 dim 1 : vector<16x640xf32>, i32 -> vector<16x640xf32>
    %31 = arith.addf %28, %30 : vector<16x640xf32>
    %32 = vector.extract_strided_slice %3 {offsets = [160, 0], sizes = [16, 640], strides = [1, 1]} : vector<320x640xf32> to vector<16x640xf32>
    %c470_i32 = arith.constant 470 : i32
    %33 = tpu.dynamic_rotate %32 by %c470_i32 dim 1 : vector<16x640xf32>, i32 -> vector<16x640xf32>
    %34 = arith.addf %31, %33 : vector<16x640xf32>
    %35 = vector.extract_strided_slice %3 {offsets = [176, 0], sizes = [16, 640], strides = [1, 1]} : vector<320x640xf32> to vector<16x640xf32>
    %c453_i32 = arith.constant 453 : i32
    %36 = tpu.dynamic_rotate %35 by %c453_i32 dim 1 : vector<16x640xf32>, i32 -> vector<16x640xf32>
    %37 = arith.addf %34, %36 : vector<16x640xf32>
    %38 = vector.extract_strided_slice %3 {offsets = [192, 0], sizes = [16, 640], strides = [1, 1]} : vector<320x640xf32> to vector<16x640xf32>
    %c436_i32 = arith.constant 436 : i32
    %39 = tpu.dynamic_rotate %38 by %c436_i32 dim 1 : vector<16x640xf32>, i32 -> vector<16x640xf32>
    %40 = arith.addf %37, %39 : vector<16x640xf32>
    %41 = vector.extract_strided_slice %3 {offsets = [208, 0], sizes = [16, 640], strides = [1, 1]} : vector<320x640xf32> to vector<16x640xf32>
    %c419_i32 = arith.constant 419 : i32
    %42 = tpu.dynamic_rotate %41 by %c419_i32 dim 1 : vector<16x640xf32>, i32 -> vector<16x640xf32>
    %43 = arith.addf %40, %42 : vector<16x640xf32>
    %44 = vector.extract_strided_slice %3 {offsets = [224, 0], sizes = [16, 640], strides = [1, 1]} : vector<320x640xf32> to vector<16x640xf32>
    %c402_i32 = arith.constant 402 : i32
    %45 = tpu.dynamic_rotate %44 by %c402_i32 dim 1 : vector<16x640xf32>, i32 -> vector<16x640xf32>
    %46 = arith.addf %43, %45 : vector<16x640xf32>
    %47 = vector.extract_strided_slice %3 {offsets = [240, 0], sizes = [16, 640], strides = [1, 1]} : vector<320x640xf32> to vector<16x640xf32>
    %c385_i32 = arith.constant 385 : i32
    %48 = tpu.dynamic_rotate %47 by %c385_i32 dim 1 : vector<16x640xf32>, i32 -> vector<16x640xf32>
    %49 = arith.addf %46, %48 : vector<16x640xf32>
    %50 = vector.extract_strided_slice %3 {offsets = [256, 0], sizes = [16, 640], strides = [1, 1]} : vector<320x640xf32> to vector<16x640xf32>
    %c368_i32 = arith.constant 368 : i32
    %51 = tpu.dynamic_rotate %50 by %c368_i32 dim 1 : vector<16x640xf32>, i32 -> vector<16x640xf32>
    %52 = arith.addf %49, %51 : vector<16x640xf32>
    %53 = vector.extract_strided_slice %3 {offsets = [272, 0], sizes = [16, 640], strides = [1, 1]} : vector<320x640xf32> to vector<16x640xf32>
    %c351_i32 = arith.constant 351 : i32
    %54 = tpu.dynamic_rotate %53 by %c351_i32 dim 1 : vector<16x640xf32>, i32 -> vector<16x640xf32>
    %55 = arith.addf %52, %54 : vector<16x640xf32>
    %56 = vector.extract_strided_slice %3 {offsets = [288, 0], sizes = [16, 640], strides = [1, 1]} : vector<320x640xf32> to vector<16x640xf32>
    %c334_i32 = arith.constant 334 : i32
    %57 = tpu.dynamic_rotate %56 by %c334_i32 dim 1 : vector<16x640xf32>, i32 -> vector<16x640xf32>
    %58 = arith.addf %55, %57 : vector<16x640xf32>
    %59 = vector.extract_strided_slice %3 {offsets = [304, 0], sizes = [16, 640], strides = [1, 1]} : vector<320x640xf32> to vector<16x640xf32>
    %c317_i32 = arith.constant 317 : i32
    %60 = tpu.dynamic_rotate %59 by %c317_i32 dim 1 : vector<16x640xf32>, i32 -> vector<16x640xf32>
    %61 = arith.addf %58, %60 : vector<16x640xf32>
    %c0_4 = arith.constant 0 : index
    %c0_5 = arith.constant 0 : index
    %62 = vector.load %arg3[%c0_4, %c0_5] : memref<16x1xf32, #tpu.memory_space<vmem>>, vector<16x1xf32>
    %63 = vector.broadcast %62 : vector<16x1xf32> to vector<16x640xf32>
    %64 = arith.addf %61, %63 : vector<16x640xf32>
    %cst_6 = arith.constant 0.000000e+00 : f32
    %65 = vector.broadcast %cst_6 : f32 to vector<16x640xf32>
    %66 = arith.cmpf oge, %64, %65 : vector<16x640xf32>
    %cst_7 = arith.constant 1.000000e-01 : f32
    %67 = vector.broadcast %cst_7 : f32 to vector<16x640xf32>
    %68 = arith.mulf %67, %64 : vector<16x640xf32>
    %69 = arith.select %66, %64, %68 : vector<16x640xi1>, vector<16x640xf32>
    %70 = arith.truncf %69 : vector<16x640xf32> to vector<16x640xbf16>
    %c0_8 = arith.constant 0 : index
    %c0_9 = arith.constant 0 : index
    %71 = vector.load %arg11[%c0_8, %c0_9] : memref<144x640xbf16, #tpu.memory_space<vmem>>, vector<16x640xbf16>
    tpu.vector_store %arg11[%c0_8, %c0_9], %70 {strides = array<i32>} : memref<144x640xbf16, #tpu.memory_space<vmem>>, vector<16x640xbf16>,
    %c639_i32 = arith.constant 639 : i32
    %72 = tpu.dynamic_rotate %69 by %c639_i32 dim 1 : vector<16x640xf32>, i32 -> vector<16x640xf32>
    %73 = arith.truncf %72 : vector<16x640xf32> to vector<16x640xbf16>
    %c16 = arith.constant 16 : index
    %c0_10 = arith.constant 0 : index
    %74 = vector.load %arg11[%c16, %c0_10] : memref<144x640xbf16, #tpu.memory_space<vmem>>, vector<16x640xbf16>
    tpu.vector_store %arg11[%c16, %c0_10], %73 {strides = array<i32>} : memref<144x640xbf16, #tpu.memory_space<vmem>>, vector<16x640xbf16>,
    %c638_i32 = arith.constant 638 : i32
    %75 = tpu.dynamic_rotate %69 by %c638_i32 dim 1 : vector<16x640xf32>, i32 -> vector<16x640xf32>
    %76 = arith.truncf %75 : vector<16x640xf32> to vector<16x640xbf16>
    %c32 = arith.constant 32 : index
    %c0_11 = arith.constant 0 : index
    %77 = vector.load %arg11[%c32, %c0_11] : memref<144x640xbf16, #tpu.memory_space<vmem>>, vector<16x640xbf16>
    tpu.vector_store %arg11[%c32, %c0_11], %76 {strides = array<i32>} : memref<144x640xbf16, #tpu.memory_space<vmem>>, vector<16x640xbf16>,
    %c623_i32_12 = arith.constant 623 : i32
    %78 = tpu.dynamic_rotate %69 by %c623_i32_12 dim 1 : vector<16x640xf32>, i32 -> vector<16x640xf32>
    %79 = arith.truncf %78 : vector<16x640xf32> to vector<16x640xbf16>
    %c48 = arith.constant 48 : index
    %c0_13 = arith.constant 0 : index
    %80 = vector.load %arg11[%c48, %c0_13] : memref<144x640xbf16, #tpu.memory_space<vmem>>, vector<16x640xbf16>
    tpu.vector_store %arg11[%c48, %c0_13], %79 {strides = array<i32>} : memref<144x640xbf16, #tpu.memory_space<vmem>>, vector<16x640xbf16>,
    %c622_i32 = arith.constant 622 : i32
    %81 = tpu.dynamic_rotate %69 by %c622_i32 dim 1 : vector<16x640xf32>, i32 -> vector<16x640xf32>
    %82 = arith.truncf %81 : vector<16x640xf32> to vector<16x640xbf16>
    %c64 = arith.constant 64 : index
    %c0_14 = arith.constant 0 : index
    %83 = vector.load %arg11[%c64, %c0_14] : memref<144x640xbf16, #tpu.memory_space<vmem>>, vector<16x640xbf16>
    tpu.vector_store %arg11[%c64, %c0_14], %82 {strides = array<i32>} : memref<144x640xbf16, #tpu.memory_space<vmem>>, vector<16x640xbf16>,
    %c621_i32 = arith.constant 621 : i32
    %84 = tpu.dynamic_rotate %69 by %c621_i32 dim 1 : vector<16x640xf32>, i32 -> vector<16x640xf32>
    %85 = arith.truncf %84 : vector<16x640xf32> to vector<16x640xbf16>
    %c80 = arith.constant 80 : index
    %c0_15 = arith.constant 0 : index
    %86 = vector.load %arg11[%c80, %c0_15] : memref<144x640xbf16, #tpu.memory_space<vmem>>, vector<16x640xbf16>
    tpu.vector_store %arg11[%c80, %c0_15], %85 {strides = array<i32>} : memref<144x640xbf16, #tpu.memory_space<vmem>>, vector<16x640xbf16>,
    %c606_i32_16 = arith.constant 606 : i32
    %87 = tpu.dynamic_rotate %69 by %c606_i32_16 dim 1 : vector<16x640xf32>, i32 -> vector<16x640xf32>
    %88 = arith.truncf %87 : vector<16x640xf32> to vector<16x640xbf16>
    %c96 = arith.constant 96 : index
    %c0_17 = arith.constant 0 : index
    %89 = vector.load %arg11[%c96, %c0_17] : memref<144x640xbf16, #tpu.memory_space<vmem>>, vector<16x640xbf16>
    tpu.vector_store %arg11[%c96, %c0_17], %88 {strides = array<i32>} : memref<144x640xbf16, #tpu.memory_space<vmem>>, vector<16x640xbf16>,
    %c605_i32 = arith.constant 605 : i32
    %90 = tpu.dynamic_rotate %69 by %c605_i32 dim 1 : vector<16x640xf32>, i32 -> vector<16x640xf32>
    %91 = arith.truncf %90 : vector<16x640xf32> to vector<16x640xbf16>
    %c112 = arith.constant 112 : index
    %c0_18 = arith.constant 0 : index
    %92 = vector.load %arg11[%c112, %c0_18] : memref<144x640xbf16, #tpu.memory_space<vmem>>, vector<16x640xbf16>
    tpu.vector_store %arg11[%c112, %c0_18], %91 {strides = array<i32>} : memref<144x640xbf16, #tpu.memory_space<vmem>>, vector<16x640xbf16>,
    %c604_i32 = arith.constant 604 : i32
    %93 = tpu.dynamic_rotate %69 by %c604_i32 dim 1 : vector<16x640xf32>, i32 -> vector<16x640xf32>
    %94 = arith.truncf %93 : vector<16x640xf32> to vector<16x640xbf16>
    %c128 = arith.constant 128 : index
    %c0_19 = arith.constant 0 : index
    %95 = vector.load %arg11[%c128, %c0_19] : memref<144x640xbf16, #tpu.memory_space<vmem>>, vector<16x640xbf16>
    tpu.vector_store %arg11[%c128, %c0_19], %94 {strides = array<i32>} : memref<144x640xbf16, #tpu.memory_space<vmem>>, vector<16x640xbf16>,
    %c0_20 = arith.constant 0 : index
    %c0_21 = arith.constant 0 : index
    %96 = vector.load %arg4[%c0_20, %c0_21] : memref<16x144xbf16, #tpu.memory_space<vmem>>, vector<16x144xbf16>
    %c0_22 = arith.constant 0 : index
    %c0_23 = arith.constant 0 : index
    %97 = vector.load %arg11[%c0_22, %c0_23] : memref<144x640xbf16, #tpu.memory_space<vmem>>, vector<144x640xbf16>
    %cst_24 = arith.constant dense<0.000000e+00> : vector<16x640xf32>
    %98 = tpu.matmul %96, %97, %cst_24 {dimension_numbers = #tpu.dot_dimension_numbers<[1], [0], [0], [1], [0, 0, 1, 1], [], []>} : vector<16x144xbf16>, vector<144x640xbf16>, vector<16x640xf32> -> vector<16x640xf32>
    %c0_25 = arith.constant 0 : index
    %c0_26 = arith.constant 0 : index
    %99 = vector.load %arg5[%c0_25, %c0_26] : memref<16x1xf32, #tpu.memory_space<vmem>>, vector<16x1xf32>
    %100 = vector.broadcast %99 : vector<16x1xf32> to vector<16x640xf32>
    %101 = arith.addf %98, %100 : vector<16x640xf32>
    %cst_27 = arith.constant 0.000000e+00 : f32
    %102 = vector.broadcast %cst_27 : f32 to vector<16x640xf32>
    %103 = arith.cmpf oge, %101, %102 : vector<16x640xf32>
    %cst_28 = arith.constant 1.000000e-01 : f32
    %104 = vector.broadcast %cst_28 : f32 to vector<16x640xf32>
    %105 = arith.mulf %104, %101 : vector<16x640xf32>
    %106 = arith.select %103, %101, %105 : vector<16x640xi1>, vector<16x640xf32>
    %107 = arith.truncf %106 : vector<16x640xf32> to vector<16x640xbf16>
    %c0_29 = arith.constant 0 : index
    %c0_30 = arith.constant 0 : index
    %108 = vector.load %arg11[%c0_29, %c0_30] : memref<144x640xbf16, #tpu.memory_space<vmem>>, vector<16x640xbf16>
    tpu.vector_store %arg11[%c0_29, %c0_30], %107 {strides = array<i32>} : memref<144x640xbf16, #tpu.memory_space<vmem>>, vector<16x640xbf16>,
    %c639_i32_31 = arith.constant 639 : i32
    %109 = tpu.dynamic_rotate %106 by %c639_i32_31 dim 1 : vector<16x640xf32>, i32 -> vector<16x640xf32>
    %110 = arith.truncf %109 : vector<16x640xf32> to vector<16x640xbf16>
    %c16_32 = arith.constant 16 : index
    %c0_33 = arith.constant 0 : index
    %111 = vector.load %arg11[%c16_32, %c0_33] : memref<144x640xbf16, #tpu.memory_space<vmem>>, vector<16x640xbf16>
    tpu.vector_store %arg11[%c16_32, %c0_33], %110 {strides = array<i32>} : memref<144x640xbf16, #tpu.memory_space<vmem>>, vector<16x640xbf16>,
    %c638_i32_34 = arith.constant 638 : i32
    %112 = tpu.dynamic_rotate %106 by %c638_i32_34 dim 1 : vector<16x640xf32>, i32 -> vector<16x640xf32>
    %113 = arith.truncf %112 : vector<16x640xf32> to vector<16x640xbf16>
    %c32_35 = arith.constant 32 : index
    %c0_36 = arith.constant 0 : index
    %114 = vector.load %arg11[%c32_35, %c0_36] : memref<144x640xbf16, #tpu.memory_space<vmem>>, vector<16x640xbf16>
    tpu.vector_store %arg11[%c32_35, %c0_36], %113 {strides = array<i32>} : memref<144x640xbf16, #tpu.memory_space<vmem>>, vector<16x640xbf16>,
    %c623_i32_37 = arith.constant 623 : i32
    %115 = tpu.dynamic_rotate %106 by %c623_i32_37 dim 1 : vector<16x640xf32>, i32 -> vector<16x640xf32>
    %116 = arith.truncf %115 : vector<16x640xf32> to vector<16x640xbf16>
    %c48_38 = arith.constant 48 : index
    %c0_39 = arith.constant 0 : index
    %117 = vector.load %arg11[%c48_38, %c0_39] : memref<144x640xbf16, #tpu.memory_space<vmem>>, vector<16x640xbf16>
    tpu.vector_store %arg11[%c48_38, %c0_39], %116 {strides = array<i32>} : memref<144x640xbf16, #tpu.memory_space<vmem>>, vector<16x640xbf16>,
    %c622_i32_40 = arith.constant 622 : i32
    %118 = tpu.dynamic_rotate %106 by %c622_i32_40 dim 1 : vector<16x640xf32>, i32 -> vector<16x640xf32>
    %119 = arith.truncf %118 : vector<16x640xf32> to vector<16x640xbf16>
    %c64_41 = arith.constant 64 : index
    %c0_42 = arith.constant 0 : index
    %120 = vector.load %arg11[%c64_41, %c0_42] : memref<144x640xbf16, #tpu.memory_space<vmem>>, vector<16x640xbf16>
    tpu.vector_store %arg11[%c64_41, %c0_42], %119 {strides = array<i32>} : memref<144x640xbf16, #tpu.memory_space<vmem>>, vector<16x640xbf16>,
    %c621_i32_43 = arith.constant 621 : i32
    %121 = tpu.dynamic_rotate %106 by %c621_i32_43 dim 1 : vector<16x640xf32>, i32 -> vector<16x640xf32>
    %122 = arith.truncf %121 : vector<16x640xf32> to vector<16x640xbf16>
    %c80_44 = arith.constant 80 : index
    %c0_45 = arith.constant 0 : index
    %123 = vector.load %arg11[%c80_44, %c0_45] : memref<144x640xbf16, #tpu.memory_space<vmem>>, vector<16x640xbf16>
    tpu.vector_store %arg11[%c80_44, %c0_45], %122 {strides = array<i32>} : memref<144x640xbf16, #tpu.memory_space<vmem>>, vector<16x640xbf16>,
    %c606_i32_46 = arith.constant 606 : i32
    %124 = tpu.dynamic_rotate %106 by %c606_i32_46 dim 1 : vector<16x640xf32>, i32 -> vector<16x640xf32>
    %125 = arith.truncf %124 : vector<16x640xf32> to vector<16x640xbf16>
    %c96_47 = arith.constant 96 : index
    %c0_48 = arith.constant 0 : index
    %126 = vector.load %arg11[%c96_47, %c0_48] : memref<144x640xbf16, #tpu.memory_space<vmem>>, vector<16x640xbf16>
    tpu.vector_store %arg11[%c96_47, %c0_48], %125 {strides = array<i32>} : memref<144x640xbf16, #tpu.memory_space<vmem>>, vector<16x640xbf16>,
    %c605_i32_49 = arith.constant 605 : i32
    %127 = tpu.dynamic_rotate %106 by %c605_i32_49 dim 1 : vector<16x640xf32>, i32 -> vector<16x640xf32>
    %128 = arith.truncf %127 : vector<16x640xf32> to vector<16x640xbf16>
    %c112_50 = arith.constant 112 : index
    %c0_51 = arith.constant 0 : index
    %129 = vector.load %arg11[%c112_50, %c0_51] : memref<144x640xbf16, #tpu.memory_space<vmem>>, vector<16x640xbf16>
    tpu.vector_store %arg11[%c112_50, %c0_51], %128 {strides = array<i32>} : memref<144x640xbf16, #tpu.memory_space<vmem>>, vector<16x640xbf16>,
    %c604_i32_52 = arith.constant 604 : i32
    %130 = tpu.dynamic_rotate %106 by %c604_i32_52 dim 1 : vector<16x640xf32>, i32 -> vector<16x640xf32>
    %131 = arith.truncf %130 : vector<16x640xf32> to vector<16x640xbf16>
    %c128_53 = arith.constant 128 : index
    %c0_54 = arith.constant 0 : index
    %132 = vector.load %arg11[%c128_53, %c0_54] : memref<144x640xbf16, #tpu.memory_space<vmem>>, vector<16x640xbf16>
    tpu.vector_store %arg11[%c128_53, %c0_54], %131 {strides = array<i32>} : memref<144x640xbf16, #tpu.memory_space<vmem>>, vector<16x640xbf16>,
    %c0_55 = arith.constant 0 : index
    %c0_56 = arith.constant 0 : index
    %133 = vector.load %arg6[%c0_55, %c0_56] : memref<8x144xbf16, #tpu.memory_space<vmem>>, vector<8x144xbf16>
    %c0_57 = arith.constant 0 : index
    %c0_58 = arith.constant 0 : index
    %134 = vector.load %arg11[%c0_57, %c0_58] : memref<144x640xbf16, #tpu.memory_space<vmem>>, vector<144x640xbf16>
    %cst_59 = arith.constant dense<0.000000e+00> : vector<8x640xf32>
    %135 = tpu.matmul %133, %134, %cst_59 {dimension_numbers = #tpu.dot_dimension_numbers<[1], [0], [0], [1], [0, 0, 1, 1], [], []>} : vector<8x144xbf16>, vector<144x640xbf16>, vector<8x640xf32> -> vector<8x640xf32>
    %c0_60 = arith.constant 0 : index
    %c0_61 = arith.constant 0 : index
    %136 = vector.load %arg7[%c0_60, %c0_61] : memref<8x1xf32, #tpu.memory_space<vmem>>, vector<8x1xf32>
    %137 = vector.broadcast %136 : vector<8x1xf32> to vector<8x640xf32>
    %138 = arith.addf %135, %137 : vector<8x640xf32>
    %cst_62 = arith.constant 0.000000e+00 : f32
    %139 = vector.broadcast %cst_62 : f32 to vector<8x640xf32>
    %140 = arith.cmpf oge, %138, %139 : vector<8x640xf32>
    %cst_63 = arith.constant 1.000000e-01 : f32
    %141 = vector.broadcast %cst_63 : f32 to vector<8x640xf32>
    %142 = arith.mulf %141, %138 : vector<8x640xf32>
    %143 = arith.select %140, %138, %142 : vector<8x640xi1>, vector<8x640xf32>
    %c0_64 = arith.constant 0 : index
    %c0_65 = arith.constant 0 : index
    %144 = vector.load %arg8[%c0_64, %c0_65] : memref<1x8xbf16, #tpu.memory_space<vmem>>, vector<1x8xbf16>
    %145 = arith.truncf %143 : vector<8x640xf32> to vector<8x640xbf16>
    %cst_66 = arith.constant dense<0.000000e+00> : vector<1x640xf32>
    %146 = tpu.matmul %144, %145, %cst_66 {dimension_numbers = #tpu.dot_dimension_numbers<[1], [0], [0], [1], [0, 0, 1, 1], [], []>} : vector<1x8xbf16>, vector<8x640xbf16>, vector<1x640xf32> -> vector<1x640xf32>
    %c0_67 = arith.constant 0 : index
    %c0_68 = arith.constant 0 : index
    %147 = vector.load %arg9[%c0_67, %c0_68] : memref<1x1xf32, #tpu.memory_space<vmem>>, vector<1x1xf32>
    %148 = vector.broadcast %147 : vector<1x1xf32> to vector<1x640xf32>
    %149 = arith.addf %146, %148 : vector<1x640xf32>
    %c0_69 = arith.constant 0 : index
    %c0_70 = arith.constant 0 : index
    %c0_71 = arith.constant 0 : index
    %150 = vector.load %arg10[%c0_69, %c0_70, %c0_71] : memref<1x1x640xf32, #tpu.memory_space<vmem>>, vector<1x1x640xf32>
    %151 = vector.shape_cast %150 : vector<1x1x640xf32> to vector<1x640xf32>
    %152 = vector.shape_cast %149 : vector<1x640xf32> to vector<1x1x640xf32>
    tpu.vector_store %arg10[%c0_69, %c0_70, %c0_71], %152 {strides = array<i32>} : memref<1x1x640xf32, #tpu.memory_space<vmem>>, vector<1x1x640xf32>,
    return
  }
  func.func @transform_0(%arg0: i32) -> (i32, i32, i32) {
    %c0_i32 = arith.constant 0 : i32
    %c0_i32_0 = arith.constant 0 : i32
    %c0_i32_1 = arith.constant 0 : i32
    return %arg0, %c0_i32, %c0_i32_0 : i32, i32, i32
  }
  func.func @transform_1(%arg0: i32) -> (i32, i32) {
    %c0_i32 = arith.constant 0 : i32
    %c0_i32_0 = arith.constant 0 : i32
    %c0_i32_1 = arith.constant 0 : i32
    return %c0_i32, %c0_i32_0 : i32, i32
  }
  func.func @transform_2(%arg0: i32) -> (i32, i32) {
    %c0_i32 = arith.constant 0 : i32
    %c0_i32_0 = arith.constant 0 : i32
    %c0_i32_1 = arith.constant 0 : i32
    return %c0_i32, %c0_i32_0 : i32, i32
  }
  func.func @transform_3(%arg0: i32) -> (i32, i32) {
    %c0_i32 = arith.constant 0 : i32
    %c0_i32_0 = arith.constant 0 : i32
    %c0_i32_1 = arith.constant 0 : i32
    return %c0_i32, %c0_i32_0 : i32, i32
  }
  func.func @transform_4(%arg0: i32) -> (i32, i32) {
    %c0_i32 = arith.constant 0 : i32
    %c0_i32_0 = arith.constant 0 : i32
    %c0_i32_1 = arith.constant 0 : i32
    return %c0_i32, %c0_i32_0 : i32, i32
  }
  func.func @transform_5(%arg0: i32) -> (i32, i32) {
    %c0_i32 = arith.constant 0 : i32
    %c0_i32_0 = arith.constant 0 : i32
    %c0_i32_1 = arith.constant 0 : i32
    return %c0_i32, %c0_i32_0 : i32, i32
  }
  func.func @transform_6(%arg0: i32) -> (i32, i32) {
    %c0_i32 = arith.constant 0 : i32
    %c0_i32_0 = arith.constant 0 : i32
    %c0_i32_1 = arith.constant 0 : i32
    return %c0_i32, %c0_i32_0 : i32, i32
  }
  func.func @transform_7(%arg0: i32) -> (i32, i32) {
    %c0_i32 = arith.constant 0 : i32
    %c0_i32_0 = arith.constant 0 : i32
    %c0_i32_1 = arith.constant 0 : i32
    return %c0_i32, %c0_i32_0 : i32, i32
  }
  func.func @transform_8(%arg0: i32) -> (i32, i32) {
    %c0_i32 = arith.constant 0 : i32
    %c0_i32_0 = arith.constant 0 : i32
    %c0_i32_1 = arith.constant 0 : i32
    return %c0_i32, %c0_i32_0 : i32, i32
  }
  func.func @transform_9(%arg0: i32) -> (i32, i32, i32) {
    %c0_i32 = arith.constant 0 : i32
    %c0_i32_0 = arith.constant 0 : i32
    %c0_i32_1 = arith.constant 0 : i32
    return %arg0, %c0_i32, %c0_i32_0 : i32, i32, i32
  }
}

</mosaic_0001>

<llo_original>
// kernel: squeeze.3
$region0: #{squeeze.3}
  %s0 = inlined_call_operand.vmem [shape: f32[2,544], index: 0, kind: input, shape index: {}]
  %s1 = inlined_call_operand.vmem [shape: f32[2,32,17], index: 1, kind: output, shape index: {}]
  $region1: #{squeeze.3} parent=0
    #allocation0 [shape = 'u8[20480]{0}', space=vmem, size = 0x5000, scoped, tag = 'scoped mem for input reshape']
    %s3 = ssub.s32 4, 1
    %s4 = scalar_lea.vmem %s0, 8
    %v5 = vld [vmem:[%s4] sm:%s3]
    %s6 = scalar_lea.vmem [#allocation0], 32
    %7 = vst [vmem:[%s6] sm:%s3] %v5
    %s8 = scalar_lea.vmem %s0, 6
    %v9 = vld [vmem:[%s8] sm:%s3]
    %s10 = scalar_lea.vmem [#allocation0], 24
    %11 = vst [vmem:[%s10] sm:%s3] %v9
    %s12 = scalar_lea.vmem %s0, 4
    %v13 = vld [vmem:[%s12] sm:%s3]
    %s14 = scalar_lea.vmem [#allocation0], 16
    %15 = vst [vmem:[%s14] sm:%s3] %v13
    %s16 = scalar_lea.vmem %s0, 2
    %v17 = vld [vmem:[%s16] sm:%s3]
    %s18 = scalar_lea.vmem [#allocation0], 8
    %19 = vst [vmem:[%s18] sm:%s3] %v17
    %v20 = vld [vmem:[%s0] sm:%s3]
    %21 = vst [vmem:[#allocation0] sm:%s3] %v20
    %v22 = vld [vmem:[#allocation0] sm:$0x3]
    %vm23 = vcmask 138240
    %24 = vst.msk [vmem:[%s1] sm:$0x1] %vm23, %v22
    %s25 = scalar_lea.vmem %s1, 31
    %26 = vst.msk [vmem:[%s25] sm:$0x2] %vm23, %v22
    %s27 = scalar_lea.vmem [#allocation0], 24
    %v28 = vld [vmem:[%s27] sm:$0x3]
    %29 = vrot.lane.b32.xlu0 %v28, 121
    %v30 = vpop.permute.xlu0 %29
    %vm31 = vcmask 138240
    %s32 = scalar_lea.vmem %s1, 23
    %33 = vst.msk [vmem:[%s32] sm:$0x1] %vm31, %v30
    %s34 = scalar_lea.vmem %s1, 54
    %35 = vst.msk [vmem:[%s34] sm:$0x2] %vm31, %v30
    %s36 = scalar_lea.vmem [#allocation0], 8
    %v37 = vld [vmem:[%s36] sm:$0x3]
    %38 = vrot.lane.b32.xlu0 %v37, 120
    %v39 = vpop.permute.xlu0 %38
    %vm40 = vcmask 138240
    %s41 = scalar_lea.vmem %s1, 8
    %42 = vst.msk [vmem:[%s41] sm:$0x1] %vm40, %v39
    %s43 = scalar_lea.vmem %s1, 39
    %44 = vst.msk [vmem:[%s43] sm:$0x2] %vm40, %v39
    %s45 = scalar_lea.vmem [#allocation0], 32
    %v46 = vld [vmem:[%s45] sm:$0x3]
    %47 = vrot.lane.b32.xlu0 %v46, 113
    %v48 = vpop.permute.xlu0 %47
    %vm49 = vcmask 138240
    %s50 = scalar_lea.vmem %s1, 31
    %51 = vst.msk [vmem:[%s50] sm:$0x1] %vm49, %v48
    %s52 = scalar_lea.vmem %s1, 62
    %53 = vst.msk [vmem:[%s52] sm:$0x2] %vm49, %v48
    %s54 = scalar_lea.vmem [#allocation0], 16
    %v55 = vld [vmem:[%s54] sm:$0x3]
    %56 = vrot.lane.b32.xlu0 %v55, 112
    %v57 = vpop.permute.xlu0 %56
    %vm58 = vcmask 138240
    %s59 = scalar_lea.vmem %s1, 16
    %60 = vst.msk [vmem:[%s59] sm:$0x1] %vm58, %v57
    %s61 = scalar_lea.vmem %s1, 47
    %62 = vst.msk [vmem:[%s61] sm:$0x2] %vm58, %v57
    %v63 = vld [vmem:[#allocation0] sm:$0x3]
    %64 = vrot.lane.b32.xlu0 %v63, 111
    %v65 = vpop.permute.xlu0 %64
    %vm66 = vcmask 138240
    %s67 = scalar_lea.vmem %s1, 1
    %68 = vst.msk [vmem:[%s67] sm:$0x1] %vm66, %v65
    %s69 = scalar_lea.vmem %s1, 32
    %70 = vst.msk [vmem:[%s69] sm:$0x2] %vm66, %v65
    %s71 = scalar_lea.vmem [#allocation0], 24
    %v72 = vld [vmem:[%s71] sm:$0x3]
    %73 = vrot.lane.b32.xlu0 %v72, 104
    %v74 = vpop.permute.xlu0 %73
    %vm75 = vcmask 138240
    %s76 = scalar_lea.vmem %s1, 24
    %77 = vst.msk [vmem:[%s76] sm:$0x1] %vm75, %v74
    %s78 = scalar_lea.vmem %s1, 55
    %79 = vst.msk [vmem:[%s78] sm:$0x2] %vm75, %v74
    %s80 = scalar_lea.vmem [#allocation0], 8
    %v81 = vld [vmem:[%s80] sm:$0x3]
    %82 = vrot.lane.b32.xlu0 %v81, 103
    %v83 = vpop.permute.xlu0 %82
    %vm84 = vcmask 138240
    %s85 = scalar_lea.vmem %s1, 9
    %86 = vst.msk [vmem:[%s85] sm:$0x1] %vm84, %v83
    %s87 = scalar_lea.vmem %s1, 40
    %88 = vst.msk [vmem:[%s87] sm:$0x2] %vm84, %v83
    %s89 = scalar_lea.vmem [#allocation0], 16
    %v90 = vld [vmem:[%s89] sm:$0x3]
    %91 = vrot.lane.b32.xlu0 %v90, 95
    %v92 = vpop.permute.xlu0 %91
    %vm93 = vcmask 138240
    %s94 = scalar_lea.vmem %s1, 17
    %95 = vst.msk [vmem:[%s94] sm:$0x1] %vm93, %v92
    %s96 = scalar_lea.vmem %s1, 48
    %97 = vst.msk [vmem:[%s96] sm:$0x2] %vm93, %v92
    %v98 = vld [vmem:[#allocation0] sm:$0x3]
    %99 = vrot.lane.b32.xlu0 %v98, 94
    %v100 = vpop.permute.xlu0 %99
    %vm101 = vcmask 138240
    %s102 = scalar_lea.vmem %s1, 2
    %103 = vst.msk [vmem:[%s102] sm:$0x1] %vm101, %v100
    %s104 = scalar_lea.vmem %s1, 33
    %105 = vst.msk [vmem:[%s104] sm:$0x2] %vm101, %v100
    %s106 = scalar_lea.vmem [#allocation0], 24
    %v107 = vld [vmem:[%s106] sm:$0x3]
    %108 = vrot.lane.b32.xlu0 %v107, 87
    %v109 = vpop.permute.xlu0 %108
    %vm110 = vcmask 138240
    %s111 = scalar_lea.vmem %s1, 25
    %112 = vst.msk [vmem:[%s111] sm:$0x1] %vm110, %v109
    %s113 = scalar_lea.vmem %s1, 56
    %114 = vst.msk [vmem:[%s113] sm:$0x2] %vm110, %v109
    %s115 = scalar_lea.vmem [#allocation0], 8
    %v116 = vld [vmem:[%s115] sm:$0x3]
    %117 = vrot.lane.b32.xlu0 %v116, 86
    %v118 = vpop.permute.xlu0 %117
    %vm119 = vcmask 138240
    %s120 = scalar_lea.vmem %s1, 10
    %121 = vst.msk [vmem:[%s120] sm:$0x1] %vm119, %v118
    %s122 = scalar_lea.vmem %s1, 41
    %123 = vst.msk [vmem:[%s122] sm:$0x2] %vm119, %v118
    %s124 = scalar_lea.vmem [#allocation0], 16
    %v125 = vld [vmem:[%s124] sm:$0x3]
    %126 = vrot.lane.b32.xlu0 %v125, 78
    %v127 = vpop.permute.xlu0 %126
    %vm128 = vcmask 138240
    %s129 = scalar_lea.vmem %s1, 18
    %130 = vst.msk [vmem:[%s129] sm:$0x1] %vm128, %v127
    %s131 = scalar_lea.vmem %s1, 49
    %132 = vst.msk [vmem:[%s131] sm:$0x2] %vm128, %v127
    %v133 = vld [vmem:[#allocation0] sm:$0x3]
    %134 = vrot.lane.b32.xlu0 %v133, 77
    %v135 = vpop.permute.xlu0 %134
    %vm136 = vcmask 138240
    %s137 = scalar_lea.vmem %s1, 3
    %138 = vst.msk [vmem:[%s137] sm:$0x1] %vm136, %v135
    %s139 = scalar_lea.vmem %s1, 34
    %140 = vst.msk [vmem:[%s139] sm:$0x2] %vm136, %v135
    %s141 = scalar_lea.vmem [#allocation0], 24
    %v142 = vld [vmem:[%s141] sm:$0x3]
    %143 = vrot.lane.b32.xlu0 %v142, 70
    %v144 = vpop.permute.xlu0 %143
    %vm145 = vcmask 138240
    %s146 = scalar_lea.vmem %s1, 26
    %147 = vst.msk [vmem:[%s146] sm:$0x1] %vm145, %v144
    %s148 = scalar_lea.vmem %s1, 57
    %149 = vst.msk [vmem:[%s148] sm:$0x2] %vm145, %v144
    %s150 = scalar_lea.vmem [#allocation0], 8
    %v151 = vld [vmem:[%s150] sm:$0x3]
    %152 = vrot.lane.b32.xlu0 %v151, 69
    %v153 = vpop.permute.xlu0 %152
    %vm154 = vcmask 138240
    %s155 = scalar_lea.vmem %s1, 11
    %156 = vst.msk [vmem:[%s155] sm:$0x1] %vm154, %v153
    %s157 = scalar_lea.vmem %s1, 42
    %158 = vst.msk [vmem:[%s157] sm:$0x2] %vm154, %v153
    %s159 = scalar_lea.vmem [#allocation0], 16
    %v160 = vld [vmem:[%s159] sm:$0x3]
    %161 = vrot.lane.b32.xlu0 %v160, 61
    %v162 = vpop.permute.xlu0 %161
    %vm163 = vcmask 138240
    %s164 = scalar_lea.vmem %s1, 19
    %165 = vst.msk [vmem:[%s164] sm:$0x1] %vm163, %v162
    %s166 = scalar_lea.vmem %s1, 50
    %167 = vst.msk [vmem:[%s166] sm:$0x2] %vm163, %v162
    %v168 = vld [vmem:[#allocation0] sm:$0x3]
    %169 = vrot.lane.b32.xlu0 %v168, 60
    %v170 = vpop.permute.xlu0 %169
    %vm171 = vcmask 138240
    %s172 = scalar_lea.vmem %s1, 4
    %173 = vst.msk [vmem:[%s172] sm:$0x1] %vm171, %v170
    %s174 = scalar_lea.vmem %s1, 35
    %175 = vst.msk [vmem:[%s174] sm:$0x2] %vm171, %v170
    %s176 = scalar_lea.vmem [#allocation0], 24
    %v177 = vld [vmem:[%s176] sm:$0x3]
    %178 = vrot.lane.b32.xlu0 %v177, 53
    %v179 = vpop.permute.xlu0 %178
    %vm180 = vcmask 138240
    %s181 = scalar_lea.vmem %s1, 27
    %182 = vst.msk [vmem:[%s181] sm:$0x1] %vm180, %v179
    %s183 = scalar_lea.vmem %s1, 58
    %184 = vst.msk [vmem:[%s183] sm:$0x2] %vm180, %v179
    %s185 = scalar_lea.vmem [#allocation0], 8
    %v186 = vld [vmem:[%s185] sm:$0x3]
    %187 = vrot.lane.b32.xlu0 %v186, 52
    %v188 = vpop.permute.xlu0 %187
    %vm189 = vcmask 138240
    %s190 = scalar_lea.vmem %s1, 12
    %191 = vst.msk [vmem:[%s190] sm:$0x1] %vm189, %v188
    %s192 = scalar_lea.vmem %s1, 43
    %193 = vst.msk [vmem:[%s192] sm:$0x2] %vm189, %v188
    %s194 = scalar_lea.vmem [#allocation0], 16
    %v195 = vld [vmem:[%s194] sm:$0x3]
    %196 = vrot.lane.b32.xlu0 %v195, 44
    %v197 = vpop.permute.xlu0 %196
    %vm198 = vcmask 138240
    %s199 = scalar_lea.vmem %s1, 20
    %200 = vst.msk [vmem:[%s199] sm:$0x1] %vm198, %v197
    %s201 = scalar_lea.vmem %s1, 51
    %202 = vst.msk [vmem:[%s201] sm:$0x2] %vm198, %v197
    %v203 = vld [vmem:[#allocation0] sm:$0x3]
    %204 = vrot.lane.b32.xlu0 %v203, 43
    %v205 = vpop.permute.xlu0 %204
    %vm206 = vcmask 138240
    %s207 = scalar_lea.vmem %s1, 5
    %208 = vst.msk [vmem:[%s207] sm:$0x1] %vm206, %v205
    %s209 = scalar_lea.vmem %s1, 36
    %210 = vst.msk [vmem:[%s209] sm:$0x2] %vm206, %v205
    %s211 = scalar_lea.vmem [#allocation0], 24
    %v212 = vld [vmem:[%s211] sm:$0x3]
    %213 = vrot.lane.b32.xlu0 %v212, 36
    %v214 = vpop.permute.xlu0 %213
    %vm215 = vcmask 138240
    %s216 = scalar_lea.vmem %s1, 28
    %217 = vst.msk [vmem:[%s216] sm:$0x1] %vm215, %v214
    %s218 = scalar_lea.vmem %s1, 59
    %219 = vst.msk [vmem:[%s218] sm:$0x2] %vm215, %v214
    %s220 = scalar_lea.vmem [#allocation0], 8
    %v221 = vld [vmem:[%s220] sm:$0x3]
    %222 = vrot.lane.b32.xlu0 %v221, 35
    %v223 = vpop.permute.xlu0 %222
    %vm224 = vcmask 138240
    %s225 = scalar_lea.vmem %s1, 13
    %226 = vst.msk [vmem:[%s225] sm:$0x1] %vm224, %v223
    %s227 = scalar_lea.vmem %s1, 44
    %228 = vst.msk [vmem:[%s227] sm:$0x2] %vm224, %v223
    %s229 = scalar_lea.vmem [#allocation0], 16
    %v230 = vld [vmem:[%s229] sm:$0x3]
    %231 = vrot.lane.b32.xlu0 %v230, 27
    %v232 = vpop.permute.xlu0 %231
    %vm233 = vcmask 138240
    %s234 = scalar_lea.vmem %s1, 21
    %235 = vst.msk [vmem:[%s234] sm:$0x1] %vm233, %v232
    %s236 = scalar_lea.vmem %s1, 52
    %237 = vst.msk [vmem:[%s236] sm:$0x2] %vm233, %v232
    %v238 = vld [vmem:[#allocation0] sm:$0x3]
    %239 = vrot.lane.b32.xlu0 %v238, 26
    %v240 = vpop.permute.xlu0 %239
    %vm241 = vcmask 138240
    %s242 = scalar_lea.vmem %s1, 6
    %243 = vst.msk [vmem:[%s242] sm:$0x1] %vm241, %v240
    %s244 = scalar_lea.vmem %s1, 37
    %245 = vst.msk [vmem:[%s244] sm:$0x2] %vm241, %v240
    %s246 = scalar_lea.vmem [#allocation0], 24
    %v247 = vld [vmem:[%s246] sm:$0x3]
    %248 = vrot.lane.b32.xlu0 %v247, 19
    %v249 = vpop.permute.xlu0 %248
    %vm250 = vcmask 138240
    %s251 = scalar_lea.vmem %s1, 29
    %252 = vst.msk [vmem:[%s251] sm:$0x1] %vm250, %v249
    %s253 = scalar_lea.vmem %s1, 60
    %254 = vst.msk [vmem:[%s253] sm:$0x2] %vm250, %v249
    %s255 = scalar_lea.vmem [#allocation0], 8
    %v256 = vld [vmem:[%s255] sm:$0x3]
    %257 = vrot.lane.b32.xlu0 %v256, 18
    %v258 = vpop.permute.xlu0 %257
    %vm259 = vcmask 138240
    %s260 = scalar_lea.vmem %s1, 14
    %261 = vst.msk [vmem:[%s260] sm:$0x1] %vm259, %v258
    %s262 = scalar_lea.vmem %s1, 45
    %263 = vst.msk [vmem:[%s262] sm:$0x2] %vm259, %v258
    %s264 = scalar_lea.vmem [#allocation0], 16
    %v265 = vld [vmem:[%s264] sm:$0x3]
    %s266 = scalar_lea.vmem [#allocation0], 24
    %v267 = vld [vmem:[%s266] sm:$0x3]
    %vm268 = vcmask 965632
    %v269 = vsel %vm268, %v267, %v265
    %270 = vrot.lane.b32.xlu0 %v269, 10
    %v271 = vpop.permute.xlu0 %270
    %vm272 = vcmask 80896
    %s273 = scalar_lea.vmem %s1, 22
    %274 = vst.msk [vmem:[%s273] sm:$0x1] %vm272, %v271
    %s275 = scalar_lea.vmem %s1, 53
    %276 = vst.msk [vmem:[%s275] sm:$0x2] %vm272, %v271
    %vm277 = vcmask 138320
    %s278 = scalar_lea.vmem %s1, 22
    %279 = vst.msk [vmem:[%s278] sm:$0x1] %vm277, %v271
    %s280 = scalar_lea.vmem %s1, 53
    %281 = vst.msk [vmem:[%s280] sm:$0x2] %vm277, %v271
    %v282 = vld [vmem:[#allocation0] sm:$0x3]
    %s283 = scalar_lea.vmem [#allocation0], 8
    %v284 = vld [vmem:[%s283] sm:$0x3]
    %vm285 = vcmask 973824
    %v286 = vsel %vm285, %v284, %v282
    %287 = vrot.lane.b32.xlu0 %v286, 9
    %v288 = vpop.permute.xlu0 %287
    %vm289 = vcmask 72704
    %s290 = scalar_lea.vmem %s1, 7
    %291 = vst.msk [vmem:[%s290] sm:$0x1] %vm289, %v288
    %s292 = scalar_lea.vmem %s1, 38
    %293 = vst.msk [vmem:[%s292] sm:$0x2] %vm289, %v288
    %vm294 = vcmask 138312
    %s295 = scalar_lea.vmem %s1, 7
    %296 = vst.msk [vmem:[%s295] sm:$0x1] %vm294, %v288
    %s297 = scalar_lea.vmem %s1, 38
    %298 = vst.msk [vmem:[%s297] sm:$0x2] %vm294, %v288
    %s299 = scalar_lea.vmem [#allocation0], 24
    %v300 = vld [vmem:[%s299] sm:$0x3]
    %s301 = scalar_lea.vmem [#allocation0], 32
    %v302 = vld [vmem:[%s301] sm:$0x3]
    %vm303 = vcmask 1031168
    %v304 = vsel %vm303, %v302, %v300
    %305 = vrot.lane.b32.xlu0 %v304, 2
    %v306 = vpop.permute.xlu0 %305
    %vm307 = vcmask 15360
    %s308 = scalar_lea.vmem %s1, 30
    %309 = vst.msk [vmem:[%s308] sm:$0x1] %vm307, %v306
    %s310 = scalar_lea.vmem %s1, 61
    %311 = vst.msk [vmem:[%s310] sm:$0x2] %vm307, %v306
    %vm312 = vcmask 138256
    %s313 = scalar_lea.vmem %s1, 30
    %314 = vst.msk [vmem:[%s313] sm:$0x1] %vm312, %v306
    %s315 = scalar_lea.vmem %s1, 61
    %316 = vst.msk [vmem:[%s315] sm:$0x2] %vm312, %v306
    %s317 = scalar_lea.vmem [#allocation0], 8
    %v318 = vld [vmem:[%s317] sm:$0x3]
    %s319 = scalar_lea.vmem [#allocation0], 16
    %v320 = vld [vmem:[%s319] sm:$0x3]
    %vm321 = vcmask 1039360
    %v322 = vsel %vm321, %v320, %v318
    %323 = vrot.lane.b32.xlu0 %v322, 1
    %v324 = vpop.permute.xlu0 %323
    %vm325 = vcmask 7168
    %s326 = scalar_lea.vmem %s1, 15
    %327 = vst.msk [vmem:[%s326] sm:$0x1] %vm325, %v324
    %s328 = scalar_lea.vmem %s1, 46
    %329 = vst.msk [vmem:[%s328] sm:$0x2] %vm325, %v324
    %vm330 = vcmask 138248
    %s331 = scalar_lea.vmem %s1, 15
    %332 = vst.msk [vmem:[%s331] sm:$0x1] %vm330, %v324
    %s333 = scalar_lea.vmem %s1, 46
    %334 = vst.msk [vmem:[%s333] sm:$0x2] %vm330, %v324

// kernel: tcrnet_lite_forward.1
$region0: #{tcrnet_lite_forward.1}
  #allocation0 [shape = 'u32[]', space=smem, size = 0x4, offset = 0x4, fixed_abs, tag = 'smem constant byte address 0x4 - core index']
  #allocation1 [shape = 'u32[72,128]{1,0:T(1,128)}', space=vmem, size = 0x9000, scoped, tag = 'internal scratch']
  #allocation2 [shape = 'bf16[144,640]{1,0:T(8,128)(2,1)}', space=vmem, size = 0x2d000, scoped, tag = 'scratch operand']
  #allocation3 [shape = 'f32[1,1]{1,0:T(1,128)S(1)}', space=vmem, size = 0x200, scoped, tag = 'scoped memory for tcrnet_lite_forward.1']
  %s0 = inlined_call_operand.vmem [shape: bf16[2,40,640], index: 0, kind: input, shape index: {}]
  %s1 = inlined_call_operand.vmem [shape: bf16[320,40], index: 1, kind: input, shape index: {}]
  %s2 = inlined_call_operand.vmem [shape: f32[16,1], index: 2, kind: input, shape index: {}]
  %s3 = inlined_call_operand.vmem [shape: bf16[16,144], index: 3, kind: input, shape index: {}]
  %s4 = inlined_call_operand.vmem [shape: f32[16,1], index: 4, kind: input, shape index: {}]
  %s5 = inlined_call_operand.vmem [shape: bf16[8,144], index: 5, kind: input, shape index: {}]
  %s6 = inlined_call_operand.vmem [shape: f32[8,1], index: 6, kind: input, shape index: {}]
  %s7 = inlined_call_operand.vmem [shape: bf16[1,8], index: 7, kind: input, shape index: {}]
  %s8 = inlined_call_operand.<no memory space> [shape: f32[1,1], index: 8, kind: input, shape index: {}]
  %s9 = inlined_call_operand.vmem [shape: f32[2,1,640], index: 9, kind: output, shape index: {}]
  %s10 = sld [smem:[#allocation0]]
  $region69: #{tcrnet_lite_forward.1} parent=0
    _
  %s12 = ssub.s32 1, %s10
  %s13 = scalar_select 0, %s12, %s10
  %v14 = vstv %s8
  %15 = vst [vmem:[#allocation3] sm:$0x1] %v14
  loop: start=0, step=1, limit=4
  $region2: #{tcrnet_lite_forward.1} parent=0 // loop_pre_header
    _
  $region3: #{tcrnet_lite_forward.1} parent=0 // loop_header
    %s17 = sphi 0, %s21
    %p18 = scmp.ge.s32.totalorder %s17, 4
    %s27 = sphi 0, %s29
    %s30 = sphi 0, %s27
    %s31 = sphi 0, %s30
    %s47 = sphi 0, %s31
    %s51 = sphi 0, %s51
    %s53 = sphi 0, %s51
    %s54 = sphi 0, %s53
    %s68 = sphi 0, %s54
    %s72 = sphi 0, %s72
    %s74 = sphi 0, %s72
    %s75 = sphi 0, %s74
    %s89 = sphi 0, %s75
    %s93 = sphi 0, %s93
    %s95 = sphi 0, %s93
    %s96 = sphi 0, %s95
    %s110 = sphi 0, %s96
    %s114 = sphi 0, %s114
    %s116 = sphi 0, %s114
    %s117 = sphi 0, %s116
    %s131 = sphi 0, %s117
    %s135 = sphi 0, %s135
    %s137 = sphi 0, %s135
    %s138 = sphi 0, %s137
    %s152 = sphi 0, %s138
    %s156 = sphi 0, %s156
    %s158 = sphi 0, %s156
    %s159 = sphi 0, %s158
    %s173 = sphi 0, %s159
    %s177 = sphi 0, %s177
    %s179 = sphi 0, %s177
    %s180 = sphi 0, %s179
    %s194 = sphi 0, %s180
    %s198 = sphi 0, %s198
    %s200 = sphi 0, %s198
    %s201 = sphi 0, %s200
    %s215 = sphi 0, %s201
    %s221 = sphi 0, %s223
    %s224 = sphi 0, %s221
    %s225 = sphi 0, %s224
    %s241 = sphi 0, %s225
  $region4: #{tcrnet_lite_forward.1} parent=0 // loop_header_branch
    %20 = sbr.rel (%p18) target = $region8
  $region5: #{tcrnet_lite_forward.1} parent=0 // loop_body
    %s22 = ssub.s32 %s17, 1
    %s23 = ssub.s32 %s17, 2
    %s24 = sadd.s32 %s17, 1
    %s25 = ssub.s32 %s17, %s24
    %p26 = scmp.eq.s32.totalorder %s25, 0
    %s28 = sadd.s32 %s27, 1
    %s29 = scalar_select %p26, %s27, %s28
    %p32 = pneg %p26
    %p33 = scmp.eq.s32.totalorder %s17, 1
    %p34 = por %p32, %p33
    %p35 = scmp.ne.s32.totalorder %s27, %s30
    %p36 = scmp.eq.s32.totalorder %s17, 0
    %p37 = por %p35, %p36
    %p38 = scmp.ne.s32.totalorder %s27, %s30
    %p39 = scmp.eq.s32.totalorder %s22, 1
    %p40 = por %p38, %p39
    %p41 = scmp.ne.s32.totalorder %s30, %s31
    %p42 = scmp.eq.s32.totalorder %s22, 0
    %p43 = por %p41, %p42
    %p44 = scmp.ne.s32.totalorder %s30, %s31
    %p45 = scmp.eq.s32.totalorder %s23, 1
    %p46 = por %p44, %p45
    %p48 = scmp.ne.s32.totalorder %s31, %s47
    %p49 = scmp.eq.s32.totalorder %s23, 0
    %p50 = por %p48, %p49
    %s52 = sadd.s32 %s51, 1
    %p55 = scmp.eq.s32.totalorder %s17, 1
    %p56 = scmp.ne.s32.totalorder %s51, %s53
    %p57 = scmp.eq.s32.totalorder %s17, 0
    %p58 = por %p56, %p57
    %p59 = scmp.ne.s32.totalorder %s51, %s53
    %p60 = scmp.eq.s32.totalorder %s22, 1
    %p61 = por %p59, %p60
    %p62 = scmp.ne.s32.totalorder %s53, %s54
    %p63 = scmp.eq.s32.totalorder %s22, 0
    %p64 = por %p62, %p63
    %p65 = scmp.ne.s32.totalorder %s53, %s54
    %p66 = scmp.eq.s32.totalorder %s23, 1
    %p67 = por %p65, %p66
    %p69 = scmp.ne.s32.totalorder %s54, %s68
    %p70 = scmp.eq.s32.totalorder %s23, 0
    %p71 = por %p69, %p70
    %s73 = sadd.s32 %s72, 1
    %p76 = scmp.eq.s32.totalorder %s17, 1
    %p77 = scmp.ne.s32.totalorder %s72, %s74
    %p78 = scmp.eq.s32.totalorder %s17, 0
    %p79 = por %p77, %p78
    %p80 = scmp.ne.s32.totalorder %s72, %s74
    %p81 = scmp.eq.s32.totalorder %s22, 1
    %p82 = por %p80, %p81
    %p83 = scmp.ne.s32.totalorder %s74, %s75
    %p84 = scmp.eq.s32.totalorder %s22, 0
    %p85 = por %p83, %p84
    %p86 = scmp.ne.s32.totalorder %s74, %s75
    %p87 = scmp.eq.s32.totalorder %s23, 1
    %p88 = por %p86, %p87
    %p90 = scmp.ne.s32.totalorder %s75, %s89
    %p91 = scmp.eq.s32.totalorder %s23, 0
    %p92 = por %p90, %p91
    %s94 = sadd.s32 %s93, 1
    %p97 = scmp.eq.s32.totalorder %s17, 1
    %p98 = scmp.ne.s32.totalorder %s93, %s95
    %p99 = scmp.eq.s32.totalorder %s17, 0
    %p100 = por %p98, %p99
    %p101 = scmp.ne.s32.totalorder %s93, %s95
    %p102 = scmp.eq.s32.totalorder %s22, 1
    %p103 = por %p101, %p102
    %p104 = scmp.ne.s32.totalorder %s95, %s96
    %p105 = scmp.eq.s32.totalorder %s22, 0
    %p106 = por %p104, %p105
    %p107 = scmp.ne.s32.totalorder %s95, %s96
    %p108 = scmp.eq.s32.totalorder %s23, 1
    %p109 = por %p107, %p108
    %p111 = scmp.ne.s32.totalorder %s96, %s110
    %p112 = scmp.eq.s32.totalorder %s23, 0
    %p113 = por %p111, %p112
    %s115 = sadd.s32 %s114, 1
    %p118 = scmp.eq.s32.totalorder %s17, 1
    %p119 = scmp.ne.s32.totalorder %s114, %s116
    %p120 = scmp.eq.s32.totalorder %s17, 0
    %p121 = por %p119, %p120
    %p122 = scmp.ne.s32.totalorder %s114, %s116
    %p123 = scmp.eq.s32.totalorder %s22, 1
    %p124 = por %p122, %p123
    %p125 = scmp.ne.s32.totalorder %s116, %s117
    %p126 = scmp.eq.s32.totalorder %s22, 0
    %p127 = por %p125, %p126
    %p128 = scmp.ne.s32.totalorder %s116, %s117
    %p129 = scmp.eq.s32.totalorder %s23, 1
    %p130 = por %p128, %p129
    %p132 = scmp.ne.s32.totalorder %s117, %s131
    %p133 = scmp.eq.s32.totalorder %s23, 0
    %p134 = por %p132, %p133
    %s136 = sadd.s32 %s135, 1
    %p139 = scmp.eq.s32.totalorder %s17, 1
    %p140 = scmp.ne.s32.totalorder %s135, %s137
    %p141 = scmp.eq.s32.totalorder %s17, 0
    %p142 = por %p140, %p141
    %p143 = scmp.ne.s32.totalorder %s135, %s137
    %p144 = scmp.eq.s32.totalorder %s22, 1
    %p145 = por %p143, %p144
    %p146 = scmp.ne.s32.totalorder %s137, %s138
    %p147 = scmp.eq.s32.totalorder %s22, 0
    %p148 = por %p146, %p147
    %p149 = scmp.ne.s32.totalorder %s137, %s138
    %p150 = scmp.eq.s32.totalorder %s23, 1
    %p151 = por %p149, %p150
    %p153 = scmp.ne.s32.totalorder %s138, %s152
    %p154 = scmp.eq.s32.totalorder %s23, 0
    %p155 = por %p153, %p154
    %s157 = sadd.s32 %s156, 1
    %p160 = scmp.eq.s32.totalorder %s17, 1
    %p161 = scmp.ne.s32.totalorder %s156, %s158
    %p162 = scmp.eq.s32.totalorder %s17, 0
    %p163 = por %p161, %p162
    %p164 = scmp.ne.s32.totalorder %s156, %s158
    %p165 = scmp.eq.s32.totalorder %s22, 1
    %p166 = por %p164, %p165
    %p167 = scmp.ne.s32.totalorder %s158, %s159
    %p168 = scmp.eq.s32.totalorder %s22, 0
    %p169 = por %p167, %p168
    %p170 = scmp.ne.s32.totalorder %s158, %s159
    %p171 = scmp.eq.s32.totalorder %s23, 1
    %p172 = por %p170, %p171
    %p174 = scmp.ne.s32.totalorder %s159, %s173
    %p175 = scmp.eq.s32.totalorder %s23, 0
    %p176 = por %p174, %p175
    %s178 = sadd.s32 %s177, 1
    %p181 = scmp.eq.s32.totalorder %s17, 1
    %p182 = scmp.ne.s32.totalorder %s177, %s179
    %p183 = scmp.eq.s32.totalorder %s17, 0
    %p184 = por %p182, %p183
    %p185 = scmp.ne.s32.totalorder %s177, %s179
    %p186 = scmp.eq.s32.totalorder %s22, 1
    %p187 = por %p185, %p186
    %p188 = scmp.ne.s32.totalorder %s179, %s180
    %p189 = scmp.eq.s32.totalorder %s22, 0
    %p190 = por %p188, %p189
    %p191 = scmp.ne.s32.totalorder %s179, %s180
    %p192 = scmp.eq.s32.totalorder %s23, 1
    %p193 = por %p191, %p192
    %p195 = scmp.ne.s32.totalorder %s180, %s194
    %p196 = scmp.eq.s32.totalorder %s23, 0
    %p197 = por %p195, %p196
    %s199 = sadd.s32 %s198, 1
    %p202 = scmp.eq.s32.totalorder %s17, 1
    %p203 = scmp.ne.s32.totalorder %s198, %s200
    %p204 = scmp.eq.s32.totalorder %s17, 0
    %p205 = por %p203, %p204
    %p206 = scmp.ne.s32.totalorder %s198, %s200
    %p207 = scmp.eq.s32.totalorder %s22, 1
    %p208 = por %p206, %p207
    %p209 = scmp.ne.s32.totalorder %s200, %s201
    %p210 = scmp.eq.s32.totalorder %s22, 0
    %p211 = por %p209, %p210
    %p212 = scmp.ne.s32.totalorder %s200, %s201
    %p213 = scmp.eq.s32.totalorder %s23, 1
    %p214 = por %p212, %p213
    %p216 = scmp.ne.s32.totalorder %s201, %s215
    %p217 = scmp.eq.s32.totalorder %s23, 0
    %p218 = por %p216, %p217
    %s219 = ssub.s32 %s17, %s24
    %p220 = scmp.eq.s32.totalorder %s219, 0
    %s222 = sadd.s32 %s221, 1
    %s223 = scalar_select %p220, %s221, %s222
    %p226 = pneg %p220
    %p227 = scmp.eq.s32.totalorder %s17, 1
    %p228 = por %p226, %p227
    %p229 = scmp.ne.s32.totalorder %s221, %s224
    %p230 = scmp.eq.s32.totalorder %s17, 0
    %p231 = por %p229, %p230
    %p232 = scmp.ne.s32.totalorder %s221, %s224
    %p233 = scmp.eq.s32.totalorder %s22, 1
    %p234 = por %p232, %p233
    %p235 = scmp.ne.s32.totalorder %s224, %s225
    %p236 = scmp.eq.s32.totalorder %s22, 0
    %p237 = por %p235, %p236
    %p238 = scmp.ne.s32.totalorder %s224, %s225
    %p239 = scmp.eq.s32.totalorder %s23, 1
    %p240 = por %p238, %p239
    %p242 = scmp.ne.s32.totalorder %s225, %s241
    %p243 = scmp.eq.s32.totalorder %s23, 0
    %p244 = por %p242, %p243
    %p245 = scmp.le.s32.totalorder 1, %s17
    %p246 = scmp.lt.s32.totalorder %s17, 3
    %p247 = pnand %p245, %p246
    %p248 = pneg %p247
    // Predicated region
    $region9: #{tcrnet_lite_forward.1} parent=5 // pred_check
      _
    $region10: #{tcrnet_lite_forward.1} parent=5 // pred_check_branch
      %250 = sbr.rel (%p247) target = $region12
    $region11: #{tcrnet_lite_forward.1} parent=5 // pred_region
      %s251 = ssub.s32 %s17, 1
      // Predicated region
      $region13: #{tcrnet_lite_forward.1} parent=11 // pred_check
        %p252 = pneg %p64
      $region14: #{tcrnet_lite_forward.1} parent=11 // pred_check_branch
        %254 = sbr.rel (%p252) target = $region16
      $region15: #{tcrnet_lite_forward.1} parent=11 // pred_region
        _
      $region16: #{tcrnet_lite_forward.1} parent=11 // pred_fallthru
        _
      // Predicated region
      $region17: #{tcrnet_lite_forward.1} parent=11 // pred_check
        %p255 = pneg %p85
      $region18: #{tcrnet_lite_forward.1} parent=11 // pred_check_branch
        %257 = sbr.rel (%p255) target = $region20
      $region19: #{tcrnet_lite_forward.1} parent=11 // pred_region
        _
      $region20: #{tcrnet_lite_forward.1} parent=11 // pred_fallthru
        _
      // Predicated region
      $region21: #{tcrnet_lite_forward.1} parent=11 // pred_check
        %p258 = pneg %p106
      $region22: #{tcrnet_lite_forward.1} parent=11 // pred_check_branch
        %260 = sbr.rel (%p258) target = $region24
      $region23: #{tcrnet_lite_forward.1} parent=11 // pred_region
        _
      $region24: #{tcrnet_lite_forward.1} parent=11 // pred_fallthru
        _
      // Predicated region
      $region25: #{tcrnet_lite_forward.1} parent=11 // pred_check
        %p261 = pneg %p127
      $region26: #{tcrnet_lite_forward.1} parent=11 // pred_check_branch
        %263 = sbr.rel (%p261) target = $region28
      $region27: #{tcrnet_lite_forward.1} parent=11 // pred_region
        _
      $region28: #{tcrnet_lite_forward.1} parent=11 // pred_fallthru
        _
      // Predicated region
      $region29: #{tcrnet_lite_forward.1} parent=11 // pred_check
        %p264 = pneg %p148
      $region30: #{tcrnet_lite_forward.1} parent=11 // pred_check_branch
        %266 = sbr.rel (%p264) target = $region32
      $region31: #{tcrnet_lite_forward.1} parent=11 // pred_region
        _
      $region32: #{tcrnet_lite_forward.1} parent=11 // pred_fallthru
        _
      // Predicated region
      $region33: #{tcrnet_lite_forward.1} parent=11 // pred_check
        %p267 = pneg %p169
      $region34: #{tcrnet_lite_forward.1} parent=11 // pred_check_branch
        %269 = sbr.rel (%p267) target = $region36
      $region35: #{tcrnet_lite_forward.1} parent=11 // pred_region
        _
      $region36: #{tcrnet_lite_forward.1} parent=11 // pred_fallthru
        _
      // Predicated region
      $region37: #{tcrnet_lite_forward.1} parent=11 // pred_check
        %p270 = pneg %p190
      $region38: #{tcrnet_lite_forward.1} parent=11 // pred_check_branch
        %272 = sbr.rel (%p270) target = $region40
      $region39: #{tcrnet_lite_forward.1} parent=11 // pred_region
        _
      $region40: #{tcrnet_lite_forward.1} parent=11 // pred_fallthru
        _
      // Predicated region
      $region41: #{tcrnet_lite_forward.1} parent=11 // pred_check
        %p273 = pneg %p211
      $region42: #{tcrnet_lite_forward.1} parent=11 // pred_check_branch
        %275 = sbr.rel (%p273) target = $region44
      $region43: #{tcrnet_lite_forward.1} parent=11 // pred_region
        _
      $region44: #{tcrnet_lite_forward.1} parent=11 // pred_fallthru
        _
    $region12: #{tcrnet_lite_forward.1} parent=5 // pred_fallthru
      _
    %p276 = scmp.lt.s32.totalorder %s17, 2
    // Predicated region
    $region45: #{tcrnet_lite_forward.1} parent=5 // pred_check
      %p277 = pneg %p276
    $region46: #{tcrnet_lite_forward.1} parent=5 // pred_check_branch
      %279 = sbr.rel (%p277) target = $region48
    $region47: #{tcrnet_lite_forward.1} parent=5 // pred_region
      // Predicated region
      $region49: #{tcrnet_lite_forward.1} parent=47 // pred_check
        %p280 = pneg %p37
      $region50: #{tcrnet_lite_forward.1} parent=47 // pred_check_branch
        %282 = sbr.rel (%p280) target = $region52
      $region51: #{tcrnet_lite_forward.1} parent=47 // pred_region
        %p283 = scmp.lt.s32.totalorder %s17, 1
        %s284 = scalar_select %p283, %s17, 1
        %s285 = smul.addr %s284, 25
        %s286 = smul.addr %s285, 4
        %s287 = scalar_lea.vmem %s0, %s286
      $region52: #{tcrnet_lite_forward.1} parent=47 // pred_fallthru
        _
    $region48: #{tcrnet_lite_forward.1} parent=5 // pred_fallthru
      _
    %p288 = scmp.le.s32.totalorder 1, %s17
    %p289 = scmp.lt.s32.totalorder %s17, 3
    %p290 = pnand %p288, %p289
    %p291 = pneg %p290
    // Predicated region
    $region53: #{tcrnet_lite_forward.1} parent=5 // pred_check
      _
    $region54: #{tcrnet_lite_forward.1} parent=5 // pred_check_branch
      %293 = sbr.rel (%p290) target = $region56
    $region55: #{tcrnet_lite_forward.1} parent=5 // pred_region
      %s294 = ssub.s32 %s17, 1
      %p295 = scmp.lt.s32.totalorder %s22, 1
      %s296 = scalar_select %p295, %s22, 1
      %s297 = smul.addr %s296, 25
      %s298 = smul.addr %s297, 4
      %s299 = scalar_lea.vmem %s0, %s298
      %p300 = pneg %p43
      %p301 = pneg %p40
      %p302 = pneg %p64
      %p303 = pneg %p61
      %p304 = pneg %p85
      %p305 = pneg %p82
      %p306 = pneg %p106
      %p307 = pneg %p103
      %p308 = pneg %p127
      %p309 = pneg %p124
      %p310 = pneg %p148
      %p311 = pneg %p145
      %p312 = pneg %p169
      %p313 = pneg %p166
      %p314 = pneg %p190
      %p315 = pneg %p187
      %p316 = pneg %p211
      %p317 = pneg %p208
      %p318 = pneg %p237
      %p319 = pneg %p234
      %p320 = scmp.lt.s32.totalorder %s22, 1
      %s321 = scalar_select %p320, %s22, 1
      %s322 = smul.addr %s321, 5
      %s323 = scalar_lea.vmem %s9, %s322
      %p324 = scmp.lt.s32.totalorder %s22, 1
      %s325 = scalar_select %p324, %s22, 1
      %s326 = smul.addr %s325, 25
      %s327 = smul.addr %s326, 4
      %s328 = scalar_lea.vmem %s0, %s327
      %p329 = scmp.lt.s32.totalorder %s22, 1
      %s330 = scalar_select %p329, %s22, 1
      %s331 = smul.addr %s330, 5
      %s332 = scalar_lea.vmem %s9, %s331
      %v334 = vld [vmem:[%s1] sm:$0xf]
      %v335 = vld [vmem:[%s1 + $0x4] sm:$0xf]
      %v336 = vld [vmem:[%s1 + $0x8] sm:$0xf]
      %v337 = vld [vmem:[%s1 + $0xc] sm:$0xf]
      %v338 = vld [vmem:[%s1 + $0x10] sm:$0xf]
      %v339 = vld [vmem:[%s1 + $0x14] sm:$0xf]
      %v340 = vld [vmem:[%s1 + $0x18] sm:$0xf]
      %v341 = vld [vmem:[%s1 + $0x1c] sm:$0xf]
      %v342 = vld [vmem:[%s1 + $0x20] sm:$0xf]
      %v343 = vld [vmem:[%s1 + $0x24] sm:$0xf]
      %v344 = vld [vmem:[%s1 + $0x28] sm:$0xf]
      %v345 = vld [vmem:[%s1 + $0x2c] sm:$0xf]
      %v346 = vld [vmem:[%s1 + $0x30] sm:$0xf]
      %v347 = vld [vmem:[%s1 + $0x34] sm:$0xf]
      %v348 = vld [vmem:[%s1 + $0x38] sm:$0xf]
      %v349 = vld [vmem:[%s1 + $0x3c] sm:$0xf]
      %v350 = vld [vmem:[%s1 + $0x40] sm:$0xf]
      %v351 = vld [vmem:[%s1 + $0x44] sm:$0xf]
      %v352 = vld [vmem:[%s1 + $0x48] sm:$0xf]
      %v353 = vld [vmem:[%s1 + $0x4c] sm:$0xf]
      %v354 = vld [vmem:[%s1 + $0x50] sm:$0xf]
      %v355 = vld [vmem:[%s1 + $0x54] sm:$0xf]
      %v356 = vld [vmem:[%s1 + $0x58] sm:$0xf]
      %v357 = vld [vmem:[%s1 + $0x5c] sm:$0xf]
      %v358 = vld [vmem:[%s1 + $0x60] sm:$0xf]
      %v359 = vld [vmem:[%s1 + $0x64] sm:$0xf]
      %v360 = vld [vmem:[%s1 + $0x68] sm:$0xf]
      %v361 = vld [vmem:[%s1 + $0x6c] sm:$0xf]
      %v362 = vld [vmem:[%s1 + $0x70] sm:$0xf]
      %v363 = vld [vmem:[%s1 + $0x74] sm:$0xf]
      %v364 = vld [vmem:[%s1 + $0x78] sm:$0xf]
      %v365 = vld [vmem:[%s1 + $0x7c] sm:$0xf]
      %v366 = vld [vmem:[%s1 + $0x80] sm:$0xf]
      %v367 = vld [vmem:[%s1 + $0x84] sm:$0xf]
      %v368 = vld [vmem:[%s1 + $0x88] sm:$0xf]
      %v369 = vld [vmem:[%s1 + $0x8c] sm:$0xf]
      %v370 = vld [vmem:[%s1 + $0x90] sm:$0xf]
      %v371 = vld [vmem:[%s1 + $0x94] sm:$0xf]
      %v372 = vld [vmem:[%s1 + $0x98] sm:$0xf]
      %v373 = vld [vmem:[%s1 + $0x9c] sm:$0xf]
      %v374 = vld [vmem:[%s328] sm:$0xff]
      %v375 = vld [vmem:[%s328 + $0x8] sm:$0xff]
      %v376 = vld [vmem:[%s328 + $0x10] sm:$0xf]
      %v377 = vld [vmem:[%s328 + $0x14] sm:$0xff]
      %v378 = vld [vmem:[%s328 + $0x1c] sm:$0xff]
      %v379 = vld [vmem:[%s328 + $0x24] sm:$0xf]
      %v380 = vld [vmem:[%s328 + $0x28] sm:$0xff]
      %v381 = vld [vmem:[%s328 + $0x30] sm:$0xff]
      %v382 = vld [vmem:[%s328 + $0x38] sm:$0xf]
      %v383 = vld [vmem:[%s328 + $0x3c] sm:$0xff]
      %v384 = vld [vmem:[%s328 + $0x44] sm:$0xff]
      %v385 = vld [vmem:[%s328 + $0x4c] sm:$0xf]
      %v386 = vld [vmem:[%s328 + $0x50] sm:$0xff]
      %v387 = vld [vmem:[%s328 + $0x58] sm:$0xff]
      %v388 = vld [vmem:[%s328 + $0x60] sm:$0xf]
      %v429 = vunpack.c.l.b16 %v334
      %v430 = vunpack.c.l.b16 %v335
      %v431 = vunpack.c.l.b16 %v336
      %v432 = vunpack.c.l.b16 %v337
      %v433 = vunpack.c.l.b16 %v338
      %v434 = vunpack.c.l.b16 %v339
      %v435 = vunpack.c.l.b16 %v340
      %v436 = vunpack.c.l.b16 %v341
      %v437 = vunpack.c.l.b16 %v342
      %v438 = vunpack.c.l.b16 %v343
      %v439 = vunpack.c.l.b16 %v344
      %v440 = vunpack.c.l.b16 %v345
      %v441 = vunpack.c.l.b16 %v346
      %v442 = vunpack.c.l.b16 %v347
      %v443 = vunpack.c.l.b16 %v348
      %v444 = vunpack.c.l.b16 %v349
      %v445 = vunpack.c.l.b16 %v350
      %v446 = vunpack.c.l.b16 %v351
      %v447 = vunpack.c.l.b16 %v352
      %v448 = vunpack.c.l.b16 %v353
      %v449 = vunpack.c.l.b16 %v354
      %v450 = vunpack.c.l.b16 %v355
      %v451 = vunpack.c.l.b16 %v356
      %v452 = vunpack.c.l.b16 %v357
      %v453 = vunpack.c.l.b16 %v358
      %v454 = vunpack.c.l.b16 %v359
      %v455 = vunpack.c.l.b16 %v360
      %v456 = vunpack.c.l.b16 %v361
      %v457 = vunpack.c.l.b16 %v362
      %v458 = vunpack.c.l.b16 %v363
      %v459 = vunpack.c.l.b16 %v364
      %v460 = vunpack.c.l.b16 %v365
      %v461 = vunpack.c.l.b16 %v366
      %v462 = vunpack.c.l.b16 %v367
      %v463 = vunpack.c.l.b16 %v368
      %v464 = vunpack.c.l.b16 %v369
      %v465 = vunpack.c.l.b16 %v370
      %v466 = vunpack.c.l.b16 %v371
      %v467 = vunpack.c.l.b16 %v372
      %v468 = vunpack.c.l.b16 %v373
      %v469 = vpack.c.b16 %v430, %v429
      %v470 = vpack.c.b16 %v432, %v431
      %v471 = vpack.c.b16 %v434, %v433
      %v472 = vpack.c.b16 %v436, %v435
      %v473 = vpack.c.b16 %v438, %v437
      %v474 = vpack.c.b16 %v440, %v439
      %v475 = vpack.c.b16 %v442, %v441
      %v476 = vpack.c.b16 %v444, %v443
      %v477 = vpack.c.b16 %v446, %v445
      %v478 = vpack.c.b16 %v448, %v447
      %v479 = vpack.c.b16 %v450, %v449
      %v480 = vpack.c.b16 %v452, %v451
      %v481 = vpack.c.b16 %v454, %v453
      %v482 = vpack.c.b16 %v456, %v455
      %v483 = vpack.c.b16 %v458, %v457
      %v484 = vpack.c.b16 %v460, %v459
      %v485 = vpack.c.b16 %v462, %v461
      %v486 = vpack.c.b16 %v464, %v463
      %v487 = vpack.c.b16 %v466, %v465
      %v488 = vpack.c.b16 %v468, %v467
      %v504 = vunpack.c.l.b16 %v374
      %v505 = vunpack.c.h.b16 %v374
      %v506 = vunpack.c.l.b16 %v375
      %v507 = vunpack.c.h.b16 %v375
      %v508 = vunpack.c.l.b16 %v376
      %v509 = vunpack.c.l.b16 %v377
      %v510 = vunpack.c.h.b16 %v377
      %v511 = vunpack.c.l.b16 %v378
      %v512 = vunpack.c.h.b16 %v378
      %v513 = vunpack.c.l.b16 %v379
      %v514 = vunpack.c.l.b16 %v380
      %v515 = vunpack.c.h.b16 %v380
      %v516 = vunpack.c.l.b16 %v381
      %v517 = vunpack.c.h.b16 %v381
      %v518 = vunpack.c.l.b16 %v382
      %v519 = vunpack.c.l.b16 %v383
      %v520 = vunpack.c.h.b16 %v383
      %v521 = vunpack.c.l.b16 %v384
      %v522 = vunpack.c.h.b16 %v384
      %v523 = vunpack.c.l.b16 %v385
      %v524 = vunpack.c.l.b16 %v386
      %v525 = vunpack.c.h.b16 %v386
      %v526 = vunpack.c.l.b16 %v387
      %v527 = vunpack.c.h.b16 %v387
      %v528 = vunpack.c.l.b16 %v388
      %v529 = vpack.c.b16 %v509, %v504
      %v530 = vpack.c.b16 %v510, %v505
      %v531 = vpack.c.b16 %v511, %v506
      %v532 = vpack.c.b16 %v512, %v507
      %v533 = vpack.c.b16 %v513, %v508
      %v534 = vpack.c.b16 %v519, %v514
      %v535 = vpack.c.b16 %v520, %v515
      %v536 = vpack.c.b16 %v521, %v516
      %v537 = vpack.c.b16 %v522, %v517
      %v538 = vpack.c.b16 %v523, %v518
      %v539 = vpack.c.b16 %v524, %v524
      %v540 = vpack.c.b16 %v525, %v525
      %v541 = vpack.c.b16 %v526, %v526
      %v542 = vpack.c.b16 %v527, %v527
      %v543 = vpack.c.b16 %v528, %v528
      %vm554 = vcmask 326656
      %v556 = vsel %vm554, %v469, 0
      %v559 = vsel %vm554, %v470, 0
      %v562 = vsel %vm554, %v471, 0
      %v565 = vsel %vm554, %v472, 0
      %v568 = vsel %vm554, %v473, 0
      %v571 = vsel %vm554, %v474, 0
      %v574 = vsel %vm554, %v475, 0
      %v577 = vsel %vm554, %v476, 0
      %v580 = vsel %vm554, %v477, 0
      %v583 = vsel %vm554, %v478, 0
      %v586 = vsel %vm554, %v479, 0
      %v589 = vsel %vm554, %v480, 0
      %v592 = vsel %vm554, %v481, 0
      %v595 = vsel %vm554, %v482, 0
      %v598 = vsel %vm554, %v483, 0
      %v601 = vsel %vm554, %v484, 0
      %v604 = vsel %vm554, %v485, 0
      %v607 = vsel %vm554, %v486, 0
      %v610 = vsel %vm554, %v487, 0
      %v613 = vsel %vm554, %v488, 0
      %vm615 = vcmask 1043456
      %v617 = vsel %vm615, %v539, 0
      %v620 = vsel %vm615, %v540, 0
      %v623 = vsel %vm615, %v541, 0
      %v626 = vsel %vm615, %v542, 0
      %v629 = vsel %vm615, %v543, 0
      %631 = vmatpush.bf16.msra.mxu0 0
      %632 = vmatpush.bf16.msra.mxu0 0
      %633 = vmatpush.bf16.msra.mxu0 0
      %634 = vmatpush.bf16.msra.mxu0 0
      %635 = vmatpush.bf16.msra.mxu0 0
      %636 = vmatpush.bf16.msra.mxu0 %v617
      %637 = vmatpush.bf16.msra.mxu0 %v534
      %638 = vmatpush.bf16.msra.mxu0 %v529
      %639 = vmatmul.bf16.gmra.mxu0 %v556
      %v640 = vpop.f32.mrf.mxu0
      %v641 = vadd.f32 0.0, %v640
      %v642 = vpop.f32.mrf.mxu0
      %v643 = vadd.f32 0.0, %v642
      %644 = vmatmul.bf16.gmra.mxu0 %v559
      %v645 = vpop.f32.mrf.mxu0
      %v646 = vadd.f32 0.0, %v645
      %v647 = vpop.f32.mrf.mxu0
      %v648 = vadd.f32 0.0, %v647
      %649 = vmatmul.bf16.gmra.mxu0 %v562
      %v650 = vpop.f32.mrf.mxu0
      %v651 = vadd.f32 0.0, %v650
      %v652 = vpop.f32.mrf.mxu0
      %v653 = vadd.f32 0.0, %v652
      %654 = vmatmul.bf16.gmra.mxu0 %v565
      %v655 = vpop.f32.mrf.mxu0
      %v656 = vadd.f32 0.0, %v655
      %v657 = vpop.f32.mrf.mxu0
      %v658 = vadd.f32 0.0, %v657
      %659 = vmatmul.bf16.gmra.mxu0 %v568
      %v660 = vpop.f32.mrf.mxu0
      %v661 = vadd.f32 0.0, %v660
      %v662 = vpop.f32.mrf.mxu0
      %v663 = vadd.f32 0.0, %v662
      %664 = vmatmul.bf16.gmra.mxu0 %v571
      %v665 = vpop.f32.mrf.mxu0
      %v666 = vadd.f32 0.0, %v665
      %v667 = vpop.f32.mrf.mxu0
      %v668 = vadd.f32 0.0, %v667
      %669 = vmatmul.bf16.gmra.mxu0 %v574
      %v670 = vpop.f32.mrf.mxu0
      %v671 = vadd.f32 0.0, %v670
      %v672 = vpop.f32.mrf.mxu0
      %v673 = vadd.f32 0.0, %v672
      %674 = vmatmul.bf16.gmra.mxu0 %v577
      %v675 = vpop.f32.mrf.mxu0
      %v676 = vadd.f32 0.0, %v675
      %v677 = vpop.f32.mrf.mxu0
      %v678 = vadd.f32 0.0, %v677
      %679 = vmatmul.bf16.gmra.mxu0 %v580
      %v680 = vpop.f32.mrf.mxu0
      %v681 = vadd.f32 0.0, %v680
      %v682 = vpop.f32.mrf.mxu0
      %v683 = vadd.f32 0.0, %v682
      %684 = vmatmul.bf16.gmra.mxu0 %v583
      %v685 = vpop.f32.mrf.mxu0
      %v686 = vadd.f32 0.0, %v685
      %v687 = vpop.f32.mrf.mxu0
      %v688 = vadd.f32 0.0, %v687
      %689 = vmatmul.bf16.gmra.mxu0 %v586
      %v690 = vpop.f32.mrf.mxu0
      %v691 = vadd.f32 0.0, %v690
      %v692 = vpop.f32.mrf.mxu0
      %v693 = vadd.f32 0.0, %v692
      %694 = vmatmul.bf16.gmra.mxu0 %v589
      %v695 = vpop.f32.mrf.mxu0
      %v696 = vadd.f32 0.0, %v695
      %v697 = vpop.f32.mrf.mxu0
      %v698 = vadd.f32 0.0, %v697
      %699 = vmatmul.bf16.gmra.mxu0 %v592
      %v700 = vpop.f32.mrf.mxu0
      %v701 = vadd.f32 0.0, %v700
      %v702 = vpop.f32.mrf.mxu0
      %v703 = vadd.f32 0.0, %v702
      %704 = vmatmul.bf16.gmra.mxu0 %v595
      %v705 = vpop.f32.mrf.mxu0
      %v706 = vadd.f32 0.0, %v705
      %v707 = vpop.f32.mrf.mxu0
      %v708 = vadd.f32 0.0, %v707
      %709 = vmatmul.bf16.gmra.mxu0 %v598
      %v710 = vpop.f32.mrf.mxu0
      %v711 = vadd.f32 0.0, %v710
      %v712 = vpop.f32.mrf.mxu0
      %v713 = vadd.f32 0.0, %v712
      %714 = vmatmul.bf16.gmra.mxu0 %v601
      %v715 = vpop.f32.mrf.mxu0
      %v716 = vadd.f32 0.0, %v715
      %v717 = vpop.f32.mrf.mxu0
      %v718 = vadd.f32 0.0, %v717
      %719 = vmatmul.bf16.gmra.mxu0 %v604
      %v720 = vpop.f32.mrf.mxu0
      %v721 = vadd.f32 0.0, %v720
      %v722 = vpop.f32.mrf.mxu0
      %v723 = vadd.f32 0.0, %v722
      %724 = vmatmul.bf16.gmra.mxu0 %v607
      %v725 = vpop.f32.mrf.mxu0
      %v726 = vadd.f32 0.0, %v725
      %v727 = vpop.f32.mrf.mxu0
      %v728 = vadd.f32 0.0, %v727
      %729 = vmatmul.bf16.gmra.mxu0 %v610
      %v730 = vpop.f32.mrf.mxu0
      %v731 = vadd.f32 0.0, %v730
      %v732 = vpop.f32.mrf.mxu0
      %v733 = vadd.f32 0.0, %v732
      %734 = vmatmul.bf16.gmra.mxu0 %v613
      %v735 = vpop.f32.mrf.mxu0
      %v736 = vadd.f32 0.0, %v735
      %v737 = vpop.f32.mrf.mxu0
      %v738 = vadd.f32 0.0, %v737
      %739 = vdwg.mxu0
      %740 = vmatpush.bf16.msra.mxu0 0
      %741 = vmatpush.bf16.msra.mxu0 0
      %742 = vmatpush.bf16.msra.mxu0 0
      %743 = vmatpush.bf16.msra.mxu0 0
      %744 = vmatpush.bf16.msra.mxu0 0
      %745 = vmatpush.bf16.msra.mxu0 %v620
      %746 = vmatpush.bf16.msra.mxu0 %v535
      %747 = vmatpush.bf16.msra.mxu0 %v530
      %748 = vmatmul.bf16.gmra.mxu0 %v556
      %v749 = vpop.f32.mrf.mxu0
      %v750 = vadd.f32 0.0, %v749
      %v751 = vpop.f32.mrf.mxu0
      %v752 = vadd.f32 0.0, %v751
      %753 = vmatmul.bf16.gmra.mxu0 %v559
      %v754 = vpop.f32.mrf.mxu0
      %v755 = vadd.f32 0.0, %v754
      %v756 = vpop.f32.mrf.mxu0
      %v757 = vadd.f32 0.0, %v756
      %758 = vmatmul.bf16.gmra.mxu0 %v562
      %v759 = vpop.f32.mrf.mxu0
      %v760 = vadd.f32 0.0, %v759
      %v761 = vpop.f32.mrf.mxu0
      %v762 = vadd.f32 0.0, %v761
      %763 = vmatmul.bf16.gmra.mxu0 %v565
      %v764 = vpop.f32.mrf.mxu0
      %v765 = vadd.f32 0.0, %v764
      %v766 = vpop.f32.mrf.mxu0
      %v767 = vadd.f32 0.0, %v766
      %768 = vmatmul.bf16.gmra.mxu0 %v568
      %v769 = vpop.f32.mrf.mxu0
      %v770 = vadd.f32 0.0, %v769
      %v771 = vpop.f32.mrf.mxu0
      %v772 = vadd.f32 0.0, %v771
      %773 = vmatmul.bf16.gmra.mxu0 %v571
      %v774 = vpop.f32.mrf.mxu0
      %v775 = vadd.f32 0.0, %v774
      %v776 = vpop.f32.mrf.mxu0
      %v777 = vadd.f32 0.0, %v776
      %778 = vmatmul.bf16.gmra.mxu0 %v574
      %v779 = vpop.f32.mrf.mxu0
      %v780 = vadd.f32 0.0, %v779
      %v781 = vpop.f32.mrf.mxu0
      %v782 = vadd.f32 0.0, %v781
      %783 = vmatmul.bf16.gmra.mxu0 %v577
      %v784 = vpop.f32.mrf.mxu0
      %v785 = vadd.f32 0.0, %v784
      %v786 = vpop.f32.mrf.mxu0
      %v787 = vadd.f32 0.0, %v786
      %788 = vmatmul.bf16.gmra.mxu0 %v580
      %v789 = vpop.f32.mrf.mxu0
      %v790 = vadd.f32 0.0, %v789
      %v791 = vpop.f32.mrf.mxu0
      %v792 = vadd.f32 0.0, %v791
      %793 = vmatmul.bf16.gmra.mxu0 %v583
      %v794 = vpop.f32.mrf.mxu0
      %v795 = vadd.f32 0.0, %v794
      %v796 = vpop.f32.mrf.mxu0
      %v797 = vadd.f32 0.0, %v796
      %798 = vmatmul.bf16.gmra.mxu0 %v586
      %v799 = vpop.f32.mrf.mxu0
      %v800 = vadd.f32 0.0, %v799
      %v801 = vpop.f32.mrf.mxu0
      %v802 = vadd.f32 0.0, %v801
      %803 = vmatmul.bf16.gmra.mxu0 %v589
      %v804 = vpop.f32.mrf.mxu0
      %v805 = vadd.f32 0.0, %v804
      %v806 = vpop.f32.mrf.mxu0
      %v807 = vadd.f32 0.0, %v806
      %808 = vmatmul.bf16.gmra.mxu0 %v592
      %v809 = vpop.f32.mrf.mxu0
      %v810 = vadd.f32 0.0, %v809
      %v811 = vpop.f32.mrf.mxu0
      %v812 = vadd.f32 0.0, %v811
      %813 = vmatmul.bf16.gmra.mxu0 %v595
      %v814 = vpop.f32.mrf.mxu0
      %v815 = vadd.f32 0.0, %v814
      %v816 = vpop.f32.mrf.mxu0
      %v817 = vadd.f32 0.0, %v816
      %818 = vmatmul.bf16.gmra.mxu0 %v598
      %v819 = vpop.f32.mrf.mxu0
      %v820 = vadd.f32 0.0, %v819
      %v821 = vpop.f32.mrf.mxu0
      %v822 = vadd.f32 0.0, %v821
      %823 = vmatmul.bf16.gmra.mxu0 %v601
      %v824 = vpop.f32.mrf.mxu0
      %v825 = vadd.f32 0.0, %v824
      %v826 = vpop.f32.mrf.mxu0
      %v827 = vadd.f32 0.0, %v826
      %828 = vmatmul.bf16.gmra.mxu0 %v604
      %v829 = vpop.f32.mrf.mxu0
      %v830 = vadd.f32 0.0, %v829
      %v831 = vpop.f32.mrf.mxu0
      %v832 = vadd.f32 0.0, %v831
      %833 = vmatmul.bf16.gmra.mxu0 %v607
      %v834 = vpop.f32.mrf.mxu0
      %v835 = vadd.f32 0.0, %v834
      %v836 = vpop.f32.mrf.mxu0
      %v837 = vadd.f32 0.0, %v836
      %838 = vmatmul.bf16.gmra.mxu0 %v610
      %v839 = vpop.f32.mrf.mxu0
      %v840 = vadd.f32 0.0, %v839
      %v841 = vpop.f32.mrf.mxu0
      %v842 = vadd.f32 0.0, %v841
      %843 = vmatmul.bf16.gmra.mxu0 %v613
      %v844 = vpop.f32.mrf.mxu0
      %v845 = vadd.f32 0.0, %v844
      %v846 = vpop.f32.mrf.mxu0
      %v847 = vadd.f32 0.0, %v846
      %848 = vdwg.mxu0
      %849 = vmatpush.bf16.msra.mxu0 0
      %850 = vmatpush.bf16.msra.mxu0 0
      %851 = vmatpush.bf16.msra.mxu0 0
      %852 = vmatpush.bf16.msra.mxu0 0
      %853 = vmatpush.bf16.msra.mxu0 0
      %854 = vmatpush.bf16.msra.mxu0 %v623
      %855 = vmatpush.bf16.msra.mxu0 %v536
      %856 = vmatpush.bf16.msra.mxu0 %v531
      %857 = vmatmul.bf16.gmra.mxu0 %v556
      %v858 = vpop.f32.mrf.mxu0
      %v859 = vadd.f32 0.0, %v858
      %v860 = vpop.f32.mrf.mxu0
      %v861 = vadd.f32 0.0, %v860
      %862 = vmatmul.bf16.gmra.mxu0 %v559
      %v863 = vpop.f32.mrf.mxu0
      %v864 = vadd.f32 0.0, %v863
      %v865 = vpop.f32.mrf.mxu0
      %v866 = vadd.f32 0.0, %v865
      %867 = vmatmul.bf16.gmra.mxu0 %v562
      %v868 = vpop.f32.mrf.mxu0
      %v869 = vadd.f32 0.0, %v868
      %v870 = vpop.f32.mrf.mxu0
      %v871 = vadd.f32 0.0, %v870
      %872 = vmatmul.bf16.gmra.mxu0 %v565
      %v873 = vpop.f32.mrf.mxu0
      %v874 = vadd.f32 0.0, %v873
      %v875 = vpop.f32.mrf.mxu0
      %v876 = vadd.f32 0.0, %v875
      %877 = vmatmul.bf16.gmra.mxu0 %v568
      %v878 = vpop.f32.mrf.mxu0
      %v879 = vadd.f32 0.0, %v878
      %v880 = vpop.f32.mrf.mxu0
      %v881 = vadd.f32 0.0, %v880
      %882 = vmatmul.bf16.gmra.mxu0 %v571
      %v883 = vpop.f32.mrf.mxu0
      %v884 = vadd.f32 0.0, %v883
      %v885 = vpop.f32.mrf.mxu0
      %v886 = vadd.f32 0.0, %v885
      %887 = vmatmul.bf16.gmra.mxu0 %v574
      %v888 = vpop.f32.mrf.mxu0
      %v889 = vadd.f32 0.0, %v888
      %v890 = vpop.f32.mrf.mxu0
      %v891 = vadd.f32 0.0, %v890
      %892 = vmatmul.bf16.gmra.mxu0 %v577
      %v893 = vpop.f32.mrf.mxu0
      %v894 = vadd.f32 0.0, %v893
      %v895 = vpop.f32.mrf.mxu0
      %v896 = vadd.f32 0.0, %v895
      %897 = vmatmul.bf16.gmra.mxu0 %v580
      %v898 = vpop.f32.mrf.mxu0
      %v899 = vadd.f32 0.0, %v898
      %v900 = vpop.f32.mrf.mxu0
      %v901 = vadd.f32 0.0, %v900
      %902 = vmatmul.bf16.gmra.mxu0 %v583
      %v903 = vpop.f32.mrf.mxu0
      %v904 = vadd.f32 0.0, %v903
      %v905 = vpop.f32.mrf.mxu0
      %v906 = vadd.f32 0.0, %v905
      %907 = vmatmul.bf16.gmra.mxu0 %v586
      %v908 = vpop.f32.mrf.mxu0
      %v909 = vadd.f32 0.0, %v908
      %v910 = vpop.f32.mrf.mxu0
      %v911 = vadd.f32 0.0, %v910
      %912 = vmatmul.bf16.gmra.mxu0 %v589
      %v913 = vpop.f32.mrf.mxu0
      %v914 = vadd.f32 0.0, %v913
      %v915 = vpop.f32.mrf.mxu0
      %v916 = vadd.f32 0.0, %v915
      %917 = vmatmul.bf16.gmra.mxu0 %v592
      %v918 = vpop.f32.mrf.mxu0
      %v919 = vadd.f32 0.0, %v918
      %v920 = vpop.f32.mrf.mxu0
      %v921 = vadd.f32 0.0, %v920
      %922 = vmatmul.bf16.gmra.mxu0 %v595
      %v923 = vpop.f32.mrf.mxu0
      %v924 = vadd.f32 0.0, %v923
      %v925 = vpop.f32.mrf.mxu0
      %v926 = vadd.f32 0.0, %v925
      %927 = vmatmul.bf16.gmra.mxu0 %v598
      %v928 = vpop.f32.mrf.mxu0
      %v929 = vadd.f32 0.0, %v928
      %v930 = vpop.f32.mrf.mxu0
      %v931 = vadd.f32 0.0, %v930
      %932 = vmatmul.bf16.gmra.mxu0 %v601
      %v933 = vpop.f32.mrf.mxu0
      %v934 = vadd.f32 0.0, %v933
      %v935 = vpop.f32.mrf.mxu0
      %v936 = vadd.f32 0.0, %v935
      %937 = vmatmul.bf16.gmra.mxu0 %v604
      %v938 = vpop.f32.mrf.mxu0
      %v939 = vadd.f32 0.0, %v938
      %v940 = vpop.f32.mrf.mxu0
      %v941 = vadd.f32 0.0, %v940
      %942 = vmatmul.bf16.gmra.mxu0 %v607
      %v943 = vpop.f32.mrf.mxu0
      %v944 = vadd.f32 0.0, %v943
      %v945 = vpop.f32.mrf.mxu0
      %v946 = vadd.f32 0.0, %v945
      %947 = vmatmul.bf16.gmra.mxu0 %v610
      %v948 = vpop.f32.mrf.mxu0
      %v949 = vadd.f32 0.0, %v948
      %v950 = vpop.f32.mrf.mxu0
      %v951 = vadd.f32 0.0, %v950
      %952 = vmatmul.bf16.gmra.mxu0 %v613
      %v953 = vpop.f32.mrf.mxu0
      %v954 = vadd.f32 0.0, %v953
      %v955 = vpop.f32.mrf.mxu0
      %v956 = vadd.f32 0.0, %v955
      %957 = vdwg.mxu0
      %958 = vmatpush.bf16.msra.mxu0 0
      %959 = vmatpush.bf16.msra.mxu0 0
      %960 = vmatpush.bf16.msra.mxu0 0
      %961 = vmatpush.bf16.msra.mxu0 0
      %962 = vmatpush.bf16.msra.mxu0 0
      %963 = vmatpush.bf16.msra.mxu0 %v626
      %964 = vmatpush.bf16.msra.mxu0 %v537
      %965 = vmatpush.bf16.msra.mxu0 %v532
      %966 = vmatmul.bf16.gmra.mxu0 %v556
      %v967 = vpop.f32.mrf.mxu0
      %v968 = vadd.f32 0.0, %v967
      %v969 = vpop.f32.mrf.mxu0
      %v970 = vadd.f32 0.0, %v969
      %971 = vmatmul.bf16.gmra.mxu0 %v559
      %v972 = vpop.f32.mrf.mxu0
      %v973 = vadd.f32 0.0, %v972
      %v974 = vpop.f32.mrf.mxu0
      %v975 = vadd.f32 0.0, %v974
      %976 = vmatmul.bf16.gmra.mxu0 %v562
      %v977 = vpop.f32.mrf.mxu0
      %v978 = vadd.f32 0.0, %v977
      %v979 = vpop.f32.mrf.mxu0
      %v980 = vadd.f32 0.0, %v979
      %981 = vmatmul.bf16.gmra.mxu0 %v565
      %v982 = vpop.f32.mrf.mxu0
      %v983 = vadd.f32 0.0, %v982
      %v984 = vpop.f32.mrf.mxu0
      %v985 = vadd.f32 0.0, %v984
      %986 = vmatmul.bf16.gmra.mxu0 %v568
      %v987 = vpop.f32.mrf.mxu0
      %v988 = vadd.f32 0.0, %v987
      %v989 = vpop.f32.mrf.mxu0
      %v990 = vadd.f32 0.0, %v989
      %991 = vmatmul.bf16.gmra.mxu0 %v571
      %v992 = vpop.f32.mrf.mxu0
      %v993 = vadd.f32 0.0, %v992
      %v994 = vpop.f32.mrf.mxu0
      %v995 = vadd.f32 0.0, %v994
      %996 = vmatmul.bf16.gmra.mxu0 %v574
      %v997 = vpop.f32.mrf.mxu0
      %v998 = vadd.f32 0.0, %v997
      %v999 = vpop.f32.mrf.mxu0
      %v1000 = vadd.f32 0.0, %v999
      %1001 = vmatmul.bf16.gmra.mxu0 %v577
      %v1002 = vpop.f32.mrf.mxu0
      %v1003 = vadd.f32 0.0, %v1002
      %v1004 = vpop.f32.mrf.mxu0
      %v1005 = vadd.f32 0.0, %v1004
      %1006 = vmatmul.bf16.gmra.mxu0 %v580
      %v1007 = vpop.f32.mrf.mxu0
      %v1008 = vadd.f32 0.0, %v1007
      %v1009 = vpop.f32.mrf.mxu0
      %v1010 = vadd.f32 0.0, %v1009
      %1011 = vmatmul.bf16.gmra.mxu0 %v583
      %v1012 = vpop.f32.mrf.mxu0
      %v1013 = vadd.f32 0.0, %v1012
      %v1014 = vpop.f32.mrf.mxu0
      %v1015 = vadd.f32 0.0, %v1014
      %1016 = vmatmul.bf16.gmra.mxu0 %v586
      %v1017 = vpop.f32.mrf.mxu0
      %v1018 = vadd.f32 0.0, %v1017
      %v1019 = vpop.f32.mrf.mxu0
      %v1020 = vadd.f32 0.0, %v1019
      %1021 = vmatmul.bf16.gmra.mxu0 %v589
      %v1022 = vpop.f32.mrf.mxu0
      %v1023 = vadd.f32 0.0, %v1022
      %v1024 = vpop.f32.mrf.mxu0
      %v1025 = vadd.f32 0.0, %v1024
      %1026 = vmatmul.bf16.gmra.mxu0 %v592
      %v1027 = vpop.f32.mrf.mxu0
      %v1028 = vadd.f32 0.0, %v1027
      %v1029 = vpop.f32.mrf.mxu0
      %v1030 = vadd.f32 0.0, %v1029
      %1031 = vmatmul.bf16.gmra.mxu0 %v595
      %v1032 = vpop.f32.mrf.mxu0
      %v1033 = vadd.f32 0.0, %v1032
      %v1034 = vpop.f32.mrf.mxu0
      %v1035 = vadd.f32 0.0, %v1034
      %1036 = vmatmul.bf16.gmra.mxu0 %v598
      %v1037 = vpop.f32.mrf.mxu0
      %v1038 = vadd.f32 0.0, %v1037
      %v1039 = vpop.f32.mrf.mxu0
      %v1040 = vadd.f32 0.0, %v1039
      %1041 = vmatmul.bf16.gmra.mxu0 %v601
      %v1042 = vpop.f32.mrf.mxu0
      %v1043 = vadd.f32 0.0, %v1042
      %v1044 = vpop.f32.mrf.mxu0
      %v1045 = vadd.f32 0.0, %v1044
      %1046 = vmatmul.bf16.gmra.mxu0 %v604
      %v1047 = vpop.f32.mrf.mxu0
      %v1048 = vadd.f32 0.0, %v1047
      %v1049 = vpop.f32.mrf.mxu0
      %v1050 = vadd.f32 0.0, %v1049
      %1051 = vmatmul.bf16.gmra.mxu0 %v607
      %v1052 = vpop.f32.mrf.mxu0
      %v1053 = vadd.f32 0.0, %v1052
      %v1054 = vpop.f32.mrf.mxu0
      %v1055 = vadd.f32 0.0, %v1054
      %1056 = vmatmul.bf16.gmra.mxu0 %v610
      %v1057 = vpop.f32.mrf.mxu0
      %v1058 = vadd.f32 0.0, %v1057
      %v1059 = vpop.f32.mrf.mxu0
      %v1060 = vadd.f32 0.0, %v1059
      %1061 = vmatmul.bf16.gmra.mxu0 %v613
      %v1062 = vpop.f32.mrf.mxu0
      %v1063 = vadd.f32 0.0, %v1062
      %v1064 = vpop.f32.mrf.mxu0
      %v1065 = vadd.f32 0.0, %v1064
      %1066 = vdwg.mxu0
      %1067 = vmatpush.bf16.msra.mxu0 0
      %1068 = vmatpush.bf16.msra.mxu0 0
      %1069 = vmatpush.bf16.msra.mxu0 0
      %1070 = vmatpush.bf16.msra.mxu0 0
      %1071 = vmatpush.bf16.msra.mxu0 0
      %1072 = vmatpush.bf16.msra.mxu0 %v629
      %1073 = vmatpush.bf16.msra.mxu0 %v538
      %1074 = vmatpush.bf16.msra.mxu0 %v533
      %1075 = vmatmul.bf16.gmra.mxu0 %v556
      %v1076 = vpop.f32.mrf.mxu0
      %v1077 = vadd.f32 0.0, %v1076
      %v1078 = vpop.f32.mrf.mxu0
      %v1079 = vadd.f32 0.0, %v1078
      %1080 = vmatmul.bf16.gmra.mxu0 %v559
      %v1081 = vpop.f32.mrf.mxu0
      %v1082 = vadd.f32 0.0, %v1081
      %v1083 = vpop.f32.mrf.mxu0
      %v1084 = vadd.f32 0.0, %v1083
      %1085 = vmatmul.bf16.gmra.mxu0 %v562
      %v1086 = vpop.f32.mrf.mxu0
      %v1087 = vadd.f32 0.0, %v1086
      %v1088 = vpop.f32.mrf.mxu0
      %v1089 = vadd.f32 0.0, %v1088
      %1090 = vmatmul.bf16.gmra.mxu0 %v565
      %v1091 = vpop.f32.mrf.mxu0
      %v1092 = vadd.f32 0.0, %v1091
      %v1093 = vpop.f32.mrf.mxu0
      %v1094 = vadd.f32 0.0, %v1093
      %1095 = vmatmul.bf16.gmra.mxu0 %v568
      %v1096 = vpop.f32.mrf.mxu0
      %v1097 = vadd.f32 0.0, %v1096
      %v1098 = vpop.f32.mrf.mxu0
      %v1099 = vadd.f32 0.0, %v1098
      %1100 = vmatmul.bf16.gmra.mxu0 %v571
      %v1101 = vpop.f32.mrf.mxu0
      %v1102 = vadd.f32 0.0, %v1101
      %v1103 = vpop.f32.mrf.mxu0
      %v1104 = vadd.f32 0.0, %v1103
      %1105 = vmatmul.bf16.gmra.mxu0 %v574
      %v1106 = vpop.f32.mrf.mxu0
      %v1107 = vadd.f32 0.0, %v1106
      %v1108 = vpop.f32.mrf.mxu0
      %v1109 = vadd.f32 0.0, %v1108
      %1110 = vmatmul.bf16.gmra.mxu0 %v577
      %v1111 = vpop.f32.mrf.mxu0
      %v1112 = vadd.f32 0.0, %v1111
      %v1113 = vpop.f32.mrf.mxu0
      %v1114 = vadd.f32 0.0, %v1113
      %1115 = vmatmul.bf16.gmra.mxu0 %v580
      %v1116 = vpop.f32.mrf.mxu0
      %v1117 = vadd.f32 0.0, %v1116
      %v1118 = vpop.f32.mrf.mxu0
      %v1119 = vadd.f32 0.0, %v1118
      %1120 = vmatmul.bf16.gmra.mxu0 %v583
      %v1121 = vpop.f32.mrf.mxu0
      %v1122 = vadd.f32 0.0, %v1121
      %v1123 = vpop.f32.mrf.mxu0
      %v1124 = vadd.f32 0.0, %v1123
      %1125 = vmatmul.bf16.gmra.mxu0 %v586
      %v1126 = vpop.f32.mrf.mxu0
      %v1127 = vadd.f32 0.0, %v1126
      %v1128 = vpop.f32.mrf.mxu0
      %v1129 = vadd.f32 0.0, %v1128
      %1130 = vmatmul.bf16.gmra.mxu0 %v589
      %v1131 = vpop.f32.mrf.mxu0
      %v1132 = vadd.f32 0.0, %v1131
      %v1133 = vpop.f32.mrf.mxu0
      %v1134 = vadd.f32 0.0, %v1133
      %1135 = vmatmul.bf16.gmra.mxu0 %v592
      %v1136 = vpop.f32.mrf.mxu0
      %v1137 = vadd.f32 0.0, %v1136
      %v1138 = vpop.f32.mrf.mxu0
      %v1139 = vadd.f32 0.0, %v1138
      %1140 = vmatmul.bf16.gmra.mxu0 %v595
      %v1141 = vpop.f32.mrf.mxu0
      %v1142 = vadd.f32 0.0, %v1141
      %v1143 = vpop.f32.mrf.mxu0
      %v1144 = vadd.f32 0.0, %v1143
      %1145 = vmatmul.bf16.gmra.mxu0 %v598
      %v1146 = vpop.f32.mrf.mxu0
      %v1147 = vadd.f32 0.0, %v1146
      %v1148 = vpop.f32.mrf.mxu0
      %v1149 = vadd.f32 0.0, %v1148
      %1150 = vmatmul.bf16.gmra.mxu0 %v601
      %v1151 = vpop.f32.mrf.mxu0
      %v1152 = vadd.f32 0.0, %v1151
      %v1153 = vpop.f32.mrf.mxu0
      %v1154 = vadd.f32 0.0, %v1153
      %1155 = vmatmul.bf16.gmra.mxu0 %v604
      %v1156 = vpop.f32.mrf.mxu0
      %v1157 = vadd.f32 0.0, %v1156
      %v1158 = vpop.f32.mrf.mxu0
      %v1159 = vadd.f32 0.0, %v1158
      %1160 = vmatmul.bf16.gmra.mxu0 %v607
      %v1161 = vpop.f32.mrf.mxu0
      %v1162 = vadd.f32 0.0, %v1161
      %v1163 = vpop.f32.mrf.mxu0
      %v1164 = vadd.f32 0.0, %v1163
      %1165 = vmatmul.bf16.gmra.mxu0 %v610
      %v1166 = vpop.f32.mrf.mxu0
      %v1167 = vadd.f32 0.0, %v1166
      %v1168 = vpop.f32.mrf.mxu0
      %v1169 = vadd.f32 0.0, %v1168
      %1170 = vmatmul.bf16.gmra.mxu0 %v613
      %v1171 = vpop.f32.mrf.mxu0
      %v1172 = vadd.f32 0.0, %v1171
      %v1173 = vpop.f32.mrf.mxu0
      %v1174 = vadd.f32 0.0, %v1173
      %1175 = vdwg.mxu0
      %1176 = vrot.lane.b32.xlu0 %v646, 111
      %v1177 = vpop.permute.xlu0 %1176
      %1178 = vrot.lane.b32.xlu0 %v648, 111
      %v1179 = vpop.permute.xlu0 %1178
      %1180 = vrot.lane.b32.xlu0 %v755, 111
      %v1181 = vpop.permute.xlu0 %1180
      %1182 = vrot.lane.b32.xlu0 %v757, 111
      %v1183 = vpop.permute.xlu0 %1182
      %1184 = vrot.lane.b32.xlu0 %v864, 111
      %v1185 = vpop.permute.xlu0 %1184
      %1186 = vrot.lane.b32.xlu0 %v866, 111
      %v1187 = vpop.permute.xlu0 %1186
      %1188 = vrot.lane.b32.xlu0 %v973, 111
      %v1189 = vpop.permute.xlu0 %1188
      %1190 = vrot.lane.b32.xlu0 %v975, 111
      %v1191 = vpop.permute.xlu0 %1190
      %1192 = vrot.lane.b32.xlu0 %v1082, 111
      %v1193 = vpop.permute.xlu0 %1192
      %1194 = vrot.lane.b32.xlu0 %v1084, 111
      %v1195 = vpop.permute.xlu0 %1194
      %v1196 = vlaneseq
      %v1197 = vand.u32 %v1196, 127
      %vm1198 = vcmp.lt.s32.totalorder %v1197, 111
      %v1199 = vsel %vm1198, %v1189, %v1193
      %v1200 = vsel %vm1198, %v1191, %v1195
      %v1201 = vsel %vm1198, %v1185, %v1189
      %v1202 = vsel %vm1198, %v1187, %v1191
      %v1203 = vsel %vm1198, %v1181, %v1185
      %v1204 = vsel %vm1198, %v1183, %v1187
      %v1205 = vsel %vm1198, %v1177, %v1181
      %v1206 = vsel %vm1198, %v1179, %v1183
      %v1207 = vsel %vm1198, %v1193, %v1177
      %v1208 = vsel %vm1198, %v1195, %v1179
      %v1209 = vadd.f32 %v641, %v1205
      %v1210 = vadd.f32 %v750, %v1203
      %v1211 = vadd.f32 %v859, %v1201
      %v1212 = vadd.f32 %v968, %v1199
      %v1213 = vadd.f32 %v1077, %v1207
      %v1214 = vadd.f32 %v643, %v1206
      %v1215 = vadd.f32 %v752, %v1204
      %v1216 = vadd.f32 %v861, %v1202
      %v1217 = vadd.f32 %v970, %v1200
      %v1218 = vadd.f32 %v1079, %v1208
      %1219 = vrot.lane.b32.xlu0 %v651, 94
      %v1220 = vpop.permute.xlu0 %1219
      %1221 = vrot.lane.b32.xlu0 %v653, 94
      %v1222 = vpop.permute.xlu0 %1221
      %1223 = vrot.lane.b32.xlu0 %v760, 94
      %v1224 = vpop.permute.xlu0 %1223
      %1225 = vrot.lane.b32.xlu0 %v762, 94
      %v1226 = vpop.permute.xlu0 %1225
      %1227 = vrot.lane.b32.xlu0 %v869, 94
      %v1228 = vpop.permute.xlu0 %1227
      %1229 = vrot.lane.b32.xlu0 %v871, 94
      %v1230 = vpop.permute.xlu0 %1229
      %1231 = vrot.lane.b32.xlu0 %v978, 94
      %v1232 = vpop.permute.xlu0 %1231
      %1233 = vrot.lane.b32.xlu0 %v980, 94
      %v1234 = vpop.permute.xlu0 %1233
      %1235 = vrot.lane.b32.xlu0 %v1087, 94
      %v1236 = vpop.permute.xlu0 %1235
      %1237 = vrot.lane.b32.xlu0 %v1089, 94
      %v1238 = vpop.permute.xlu0 %1237
      %vm1239 = vcmp.lt.s32.totalorder %v1197, 94
      %v1240 = vsel %vm1239, %v1232, %v1236
      %v1241 = vsel %vm1239, %v1234, %v1238
      %v1242 = vsel %vm1239, %v1228, %v1232
      %v1243 = vsel %vm1239, %v1230, %v1234
      %v1244 = vsel %vm1239, %v1224, %v1228
      %v1245 = vsel %vm1239, %v1226, %v1230
      %v1246 = vsel %vm1239, %v1220, %v1224
      %v1247 = vsel %vm1239, %v1222, %v1226
      %v1248 = vsel %vm1239, %v1236, %v1220
      %v1249 = vsel %vm1239, %v1238, %v1222
      %v1250 = vadd.f32 %v1209, %v1246
      %v1251 = vadd.f32 %v1210, %v1244
      %v1252 = vadd.f32 %v1211, %v1242
      %v1253 = vadd.f32 %v1212, %v1240
      %v1254 = vadd.f32 %v1213, %v1248
      %v1255 = vadd.f32 %v1214, %v1247
      %v1256 = vadd.f32 %v1215, %v1245
      %v1257 = vadd.f32 %v1216, %v1243
      %v1258 = vadd.f32 %v1217, %v1241
      %v1259 = vadd.f32 %v1218, %v1249
      %1260 = vrot.lane.b32.xlu0 %v656, 77
      %v1261 = vpop.permute.xlu0 %1260
      %1262 = vrot.lane.b32.xlu0 %v658, 77
      %v1263 = vpop.permute.xlu0 %1262
      %1264 = vrot.lane.b32.xlu0 %v765, 77
      %v1265 = vpop.permute.xlu0 %1264
      %1266 = vrot.lane.b32.xlu0 %v767, 77
      %v1267 = vpop.permute.xlu0 %1266
      %1268 = vrot.lane.b32.xlu0 %v874, 77
      %v1269 = vpop.permute.xlu0 %1268
      %1270 = vrot.lane.b32.xlu0 %v876, 77
      %v1271 = vpop.permute.xlu0 %1270
      %1272 = vrot.lane.b32.xlu0 %v983, 77
      %v1273 = vpop.permute.xlu0 %1272
      %1274 = vrot.lane.b32.xlu0 %v985, 77
      %v1275 = vpop.permute.xlu0 %1274
      %1276 = vrot.lane.b32.xlu0 %v1092, 77
      %v1277 = vpop.permute.xlu0 %1276
      %1278 = vrot.lane.b32.xlu0 %v1094, 77
      %v1279 = vpop.permute.xlu0 %1278
      %vm1280 = vcmp.lt.s32.totalorder %v1197, 77
      %v1281 = vsel %vm1280, %v1273, %v1277
      %v1282 = vsel %vm1280, %v1275, %v1279
      %v1283 = vsel %vm1280, %v1269, %v1273
      %v1284 = vsel %vm1280, %v1271, %v1275
      %v1285 = vsel %vm1280, %v1265, %v1269
      %v1286 = vsel %vm1280, %v1267, %v1271
      %v1287 = vsel %vm1280, %v1261, %v1265
      %v1288 = vsel %vm1280, %v1263, %v1267
      %v1289 = vsel %vm1280, %v1277, %v1261
      %v1290 = vsel %vm1280, %v1279, %v1263
      %v1291 = vadd.f32 %v1250, %v1287
      %v1292 = vadd.f32 %v1251, %v1285
      %v1293 = vadd.f32 %v1252, %v1283
      %v1294 = vadd.f32 %v1253, %v1281
      %v1295 = vadd.f32 %v1254, %v1289
      %v1296 = vadd.f32 %v1255, %v1288
      %v1297 = vadd.f32 %v1256, %v1286
      %v1298 = vadd.f32 %v1257, %v1284
      %v1299 = vadd.f32 %v1258, %v1282
      %v1300 = vadd.f32 %v1259, %v1290
      %1301 = vrot.lane.b32.xlu0 %v661, 60
      %v1302 = vpop.permute.xlu0 %1301
      %1303 = vrot.lane.b32.xlu0 %v663, 60
      %v1304 = vpop.permute.xlu0 %1303
      %1305 = vrot.lane.b32.xlu0 %v770, 60
      %v1306 = vpop.permute.xlu0 %1305
      %1307 = vrot.lane.b32.xlu0 %v772, 60
      %v1308 = vpop.permute.xlu0 %1307
      %1309 = vrot.lane.b32.xlu0 %v879, 60
      %v1310 = vpop.permute.xlu0 %1309
      %1311 = vrot.lane.b32.xlu0 %v881, 60
      %v1312 = vpop.permute.xlu0 %1311
      %1313 = vrot.lane.b32.xlu0 %v988, 60
      %v1314 = vpop.permute.xlu0 %1313
      %1315 = vrot.lane.b32.xlu0 %v990, 60
      %v1316 = vpop.permute.xlu0 %1315
      %1317 = vrot.lane.b32.xlu0 %v1097, 60
      %v1318 = vpop.permute.xlu0 %1317
      %1319 = vrot.lane.b32.xlu0 %v1099, 60
      %v1320 = vpop.permute.xlu0 %1319
      %vm1321 = vcmp.lt.s32.totalorder %v1197, 60
      %v1322 = vsel %vm1321, %v1314, %v1318
      %v1323 = vsel %vm1321, %v1316, %v1320
      %v1324 = vsel %vm1321, %v1310, %v1314
      %v1325 = vsel %vm1321, %v1312, %v1316
      %v1326 = vsel %vm1321, %v1306, %v1310
      %v1327 = vsel %vm1321, %v1308, %v1312
      %v1328 = vsel %vm1321, %v1302, %v1306
      %v1329 = vsel %vm1321, %v1304, %v1308
      %v1330 = vsel %vm1321, %v1318, %v1302
      %v1331 = vsel %vm1321, %v1320, %v1304
      %v1332 = vadd.f32 %v1291, %v1328
      %v1333 = vadd.f32 %v1292, %v1326
      %v1334 = vadd.f32 %v1293, %v1324
      %v1335 = vadd.f32 %v1294, %v1322
      %v1336 = vadd.f32 %v1295, %v1330
      %v1337 = vadd.f32 %v1296, %v1329
      %v1338 = vadd.f32 %v1297, %v1327
      %v1339 = vadd.f32 %v1298, %v1325
      %v1340 = vadd.f32 %v1299, %v1323
      %v1341 = vadd.f32 %v1300, %v1331
      %1342 = vrot.lane.b32.xlu0 %v666, 43
      %v1343 = vpop.permute.xlu0 %1342
      %1344 = vrot.lane.b32.xlu0 %v668, 43
      %v1345 = vpop.permute.xlu0 %1344
      %1346 = vrot.lane.b32.xlu0 %v775, 43
      %v1347 = vpop.permute.xlu0 %1346
      %1348 = vrot.lane.b32.xlu0 %v777, 43
      %v1349 = vpop.permute.xlu0 %1348
      %1350 = vrot.lane.b32.xlu0 %v884, 43
      %v1351 = vpop.permute.xlu0 %1350
      %1352 = vrot.lane.b32.xlu0 %v886, 43
      %v1353 = vpop.permute.xlu0 %1352
      %1354 = vrot.lane.b32.xlu0 %v993, 43
      %v1355 = vpop.permute.xlu0 %1354
      %1356 = vrot.lane.b32.xlu0 %v995, 43
      %v1357 = vpop.permute.xlu0 %1356
      %1358 = vrot.lane.b32.xlu0 %v1102, 43
      %v1359 = vpop.permute.xlu0 %1358
      %1360 = vrot.lane.b32.xlu0 %v1104, 43
      %v1361 = vpop.permute.xlu0 %1360
      %vm1362 = vcmp.lt.s32.totalorder %v1197, 43
      %v1363 = vsel %vm1362, %v1355, %v1359
      %v1364 = vsel %vm1362, %v1357, %v1361
      %v1365 = vsel %vm1362, %v1351, %v1355
      %v1366 = vsel %vm1362, %v1353, %v1357
      %v1367 = vsel %vm1362, %v1347, %v1351
      %v1368 = vsel %vm1362, %v1349, %v1353
      %v1369 = vsel %vm1362, %v1343, %v1347
      %v1370 = vsel %vm1362, %v1345, %v1349
      %v1371 = vsel %vm1362, %v1359, %v1343
      %v1372 = vsel %vm1362, %v1361, %v1345
      %v1373 = vadd.f32 %v1332, %v1369
      %v1374 = vadd.f32 %v1333, %v1367
      %v1375 = vadd.f32 %v1334, %v1365
      %v1376 = vadd.f32 %v1335, %v1363
      %v1377 = vadd.f32 %v1336, %v1371
      %v1378 = vadd.f32 %v1337, %v1370
      %v1379 = vadd.f32 %v1338, %v1368
      %v1380 = vadd.f32 %v1339, %v1366
      %v1381 = vadd.f32 %v1340, %v1364
      %v1382 = vadd.f32 %v1341, %v1372
      %1383 = vrot.lane.b32.xlu0 %v671, 26
      %v1384 = vpop.permute.xlu0 %1383
      %1385 = vrot.lane.b32.xlu0 %v673, 26
      %v1386 = vpop.permute.xlu0 %1385
      %1387 = vrot.lane.b32.xlu0 %v780, 26
      %v1388 = vpop.permute.xlu0 %1387
      %1389 = vrot.lane.b32.xlu0 %v782, 26
      %v1390 = vpop.permute.xlu0 %1389
      %1391 = vrot.lane.b32.xlu0 %v889, 26
      %v1392 = vpop.permute.xlu0 %1391
      %1393 = vrot.lane.b32.xlu0 %v891, 26
      %v1394 = vpop.permute.xlu0 %1393
      %1395 = vrot.lane.b32.xlu0 %v998, 26
      %v1396 = vpop.permute.xlu0 %1395
      %1397 = vrot.lane.b32.xlu0 %v1000, 26
      %v1398 = vpop.permute.xlu0 %1397
      %1399 = vrot.lane.b32.xlu0 %v1107, 26
      %v1400 = vpop.permute.xlu0 %1399
      %1401 = vrot.lane.b32.xlu0 %v1109, 26
      %v1402 = vpop.permute.xlu0 %1401
      %vm1403 = vcmp.lt.s32.totalorder %v1197, 26
      %v1404 = vsel %vm1403, %v1396, %v1400
      %v1405 = vsel %vm1403, %v1398, %v1402
      %v1406 = vsel %vm1403, %v1392, %v1396
      %v1407 = vsel %vm1403, %v1394, %v1398
      %v1408 = vsel %vm1403, %v1388, %v1392
      %v1409 = vsel %vm1403, %v1390, %v1394
      %v1410 = vsel %vm1403, %v1384, %v1388
      %v1411 = vsel %vm1403, %v1386, %v1390
      %v1412 = vsel %vm1403, %v1400, %v1384
      %v1413 = vsel %vm1403, %v1402, %v1386
      %v1414 = vadd.f32 %v1373, %v1410
      %v1415 = vadd.f32 %v1374, %v1408
      %v1416 = vadd.f32 %v1375, %v1406
      %v1417 = vadd.f32 %v1376, %v1404
      %v1418 = vadd.f32 %v1377, %v1412
      %v1419 = vadd.f32 %v1378, %v1411
      %v1420 = vadd.f32 %v1379, %v1409
      %v1421 = vadd.f32 %v1380, %v1407
      %v1422 = vadd.f32 %v1381, %v1405
      %v1423 = vadd.f32 %v1382, %v1413
      %1424 = vrot.lane.b32.xlu0 %v676, 9
      %v1425 = vpop.permute.xlu0 %1424
      %1426 = vrot.lane.b32.xlu0 %v678, 9
      %v1427 = vpop.permute.xlu0 %1426
      %1428 = vrot.lane.b32.xlu0 %v785, 9
      %v1429 = vpop.permute.xlu0 %1428
      %1430 = vrot.lane.b32.xlu0 %v787, 9
      %v1431 = vpop.permute.xlu0 %1430
      %1432 = vrot.lane.b32.xlu0 %v894, 9
      %v1433 = vpop.permute.xlu0 %1432
      %1434 = vrot.lane.b32.xlu0 %v896, 9
      %v1435 = vpop.permute.xlu0 %1434
      %1436 = vrot.lane.b32.xlu0 %v1003, 9
      %v1437 = vpop.permute.xlu0 %1436
      %1438 = vrot.lane.b32.xlu0 %v1005, 9
      %v1439 = vpop.permute.xlu0 %1438
      %1440 = vrot.lane.b32.xlu0 %v1112, 9
      %v1441 = vpop.permute.xlu0 %1440
      %1442 = vrot.lane.b32.xlu0 %v1114, 9
      %v1443 = vpop.permute.xlu0 %1442
      %vm1444 = vcmp.lt.s32.totalorder %v1197, 9
      %v1445 = vsel %vm1444, %v1437, %v1441
      %v1446 = vsel %vm1444, %v1439, %v1443
      %v1447 = vsel %vm1444, %v1433, %v1437
      %v1448 = vsel %vm1444, %v1435, %v1439
      %v1449 = vsel %vm1444, %v1429, %v1433
      %v1450 = vsel %vm1444, %v1431, %v1435
      %v1451 = vsel %vm1444, %v1425, %v1429
      %v1452 = vsel %vm1444, %v1427, %v1431
      %v1453 = vsel %vm1444, %v1441, %v1425
      %v1454 = vsel %vm1444, %v1443, %v1427
      %v1455 = vadd.f32 %v1414, %v1451
      %v1456 = vadd.f32 %v1415, %v1449
      %v1457 = vadd.f32 %v1416, %v1447
      %v1458 = vadd.f32 %v1417, %v1445
      %v1459 = vadd.f32 %v1418, %v1453
      %v1460 = vadd.f32 %v1419, %v1452
      %v1461 = vadd.f32 %v1420, %v1450
      %v1462 = vadd.f32 %v1421, %v1448
      %v1463 = vadd.f32 %v1422, %v1446
      %v1464 = vadd.f32 %v1423, %v1454
      %1465 = vrot.lane.b32.xlu0 %v681, 120
      %v1466 = vpop.permute.xlu0 %1465
      %1467 = vrot.lane.b32.xlu0 %v683, 120
      %v1468 = vpop.permute.xlu0 %1467
      %1469 = vrot.lane.b32.xlu0 %v790, 120
      %v1470 = vpop.permute.xlu0 %1469
      %1471 = vrot.lane.b32.xlu0 %v792, 120
      %v1472 = vpop.permute.xlu0 %1471
      %1473 = vrot.lane.b32.xlu0 %v899, 120
      %v1474 = vpop.permute.xlu0 %1473
      %1475 = vrot.lane.b32.xlu0 %v901, 120
      %v1476 = vpop.permute.xlu0 %1475
      %1477 = vrot.lane.b32.xlu0 %v1008, 120
      %v1478 = vpop.permute.xlu0 %1477
      %1479 = vrot.lane.b32.xlu0 %v1010, 120
      %v1480 = vpop.permute.xlu0 %1479
      %1481 = vrot.lane.b32.xlu0 %v1117, 120
      %v1482 = vpop.permute.xlu0 %1481
      %1483 = vrot.lane.b32.xlu0 %v1119, 120
      %v1484 = vpop.permute.xlu0 %1483
      %vm1485 = vcmp.lt.s32.totalorder %v1197, 120
      %v1486 = vsel %vm1485, %v1478, %v1482
      %v1487 = vsel %vm1485, %v1480, %v1484
      %v1488 = vsel %vm1485, %v1474, %v1478
      %v1489 = vsel %vm1485, %v1476, %v1480
      %v1490 = vsel %vm1485, %v1470, %v1474
      %v1491 = vsel %vm1485, %v1472, %v1476
      %v1492 = vsel %vm1485, %v1466, %v1470
      %v1493 = vsel %vm1485, %v1468, %v1472
      %v1494 = vsel %vm1485, %v1482, %v1466
      %v1495 = vsel %vm1485, %v1484, %v1468
      %v1496 = vadd.f32 %v1455, %v1490
      %v1497 = vadd.f32 %v1456, %v1488
      %v1498 = vadd.f32 %v1457, %v1486
      %v1499 = vadd.f32 %v1458, %v1494
      %v1500 = vadd.f32 %v1459, %v1492
      %v1501 = vadd.f32 %v1460, %v1491
      %v1502 = vadd.f32 %v1461, %v1489
      %v1503 = vadd.f32 %v1462, %v1487
      %v1504 = vadd.f32 %v1463, %v1495
      %v1505 = vadd.f32 %v1464, %v1493
      %1506 = vrot.lane.b32.xlu0 %v686, 103
      %v1507 = vpop.permute.xlu0 %1506
      %1508 = vrot.lane.b32.xlu0 %v688, 103
      %v1509 = vpop.permute.xlu0 %1508
      %1510 = vrot.lane.b32.xlu0 %v795, 103
      %v1511 = vpop.permute.xlu0 %1510
      %1512 = vrot.lane.b32.xlu0 %v797, 103
      %v1513 = vpop.permute.xlu0 %1512
      %1514 = vrot.lane.b32.xlu0 %v904, 103
      %v1515 = vpop.permute.xlu0 %1514
      %1516 = vrot.lane.b32.xlu0 %v906, 103
      %v1517 = vpop.permute.xlu0 %1516
      %1518 = vrot.lane.b32.xlu0 %v1013, 103
      %v1519 = vpop.permute.xlu0 %1518
      %1520 = vrot.lane.b32.xlu0 %v1015, 103
      %v1521 = vpop.permute.xlu0 %1520
      %1522 = vrot.lane.b32.xlu0 %v1122, 103
      %v1523 = vpop.permute.xlu0 %1522
      %1524 = vrot.lane.b32.xlu0 %v1124, 103
      %v1525 = vpop.permute.xlu0 %1524
      %vm1526 = vcmp.lt.s32.totalorder %v1197, 103
      %v1527 = vsel %vm1526, %v1519, %v1523
      %v1528 = vsel %vm1526, %v1521, %v1525
      %v1529 = vsel %vm1526, %v1515, %v1519
      %v1530 = vsel %vm1526, %v1517, %v1521
      %v1531 = vsel %vm1526, %v1511, %v1515
      %v1532 = vsel %vm1526, %v1513, %v1517
      %v1533 = vsel %vm1526, %v1507, %v1511
      %v1534 = vsel %vm1526, %v1509, %v1513
      %v1535 = vsel %vm1526, %v1523, %v1507
      %v1536 = vsel %vm1526, %v1525, %v1509
      %v1537 = vadd.f32 %v1496, %v1531
      %v1538 = vadd.f32 %v1497, %v1529
      %v1539 = vadd.f32 %v1498, %v1527
      %v1540 = vadd.f32 %v1499, %v1535
      %v1541 = vadd.f32 %v1500, %v1533
      %v1542 = vadd.f32 %v1501, %v1532
      %v1543 = vadd.f32 %v1502, %v1530
      %v1544 = vadd.f32 %v1503, %v1528
      %v1545 = vadd.f32 %v1504, %v1536
      %v1546 = vadd.f32 %v1505, %v1534
      %1547 = vrot.lane.b32.xlu0 %v691, 86
      %v1548 = vpop.permute.xlu0 %1547
      %1549 = vrot.lane.b32.xlu0 %v693, 86
      %v1550 = vpop.permute.xlu0 %1549
      %1551 = vrot.lane.b32.xlu0 %v800, 86
      %v1552 = vpop.permute.xlu0 %1551
      %1553 = vrot.lane.b32.xlu0 %v802, 86
      %v1554 = vpop.permute.xlu0 %1553
      %1555 = vrot.lane.b32.xlu0 %v909, 86
      %v1556 = vpop.permute.xlu0 %1555
      %1557 = vrot.lane.b32.xlu0 %v911, 86
      %v1558 = vpop.permute.xlu0 %1557
      %1559 = vrot.lane.b32.xlu0 %v1018, 86
      %v1560 = vpop.permute.xlu0 %1559
      %1561 = vrot.lane.b32.xlu0 %v1020, 86
      %v1562 = vpop.permute.xlu0 %1561
      %1563 = vrot.lane.b32.xlu0 %v1127, 86
      %v1564 = vpop.permute.xlu0 %1563
      %1565 = vrot.lane.b32.xlu0 %v1129, 86
      %v1566 = vpop.permute.xlu0 %1565
      %vm1567 = vcmp.lt.s32.totalorder %v1197, 86
      %v1568 = vsel %vm1567, %v1560, %v1564
      %v1569 = vsel %vm1567, %v1562, %v1566
      %v1570 = vsel %vm1567, %v1556, %v1560
      %v1571 = vsel %vm1567, %v1558, %v1562
      %v1572 = vsel %vm1567, %v1552, %v1556
      %v1573 = vsel %vm1567, %v1554, %v1558
      %v1574 = vsel %vm1567, %v1548, %v1552
      %v1575 = vsel %vm1567, %v1550, %v1554
      %v1576 = vsel %vm1567, %v1564, %v1548
      %v1577 = vsel %vm1567, %v1566, %v1550
      %v1578 = vadd.f32 %v1537, %v1572
      %v1579 = vadd.f32 %v1538, %v1570
      %v1580 = vadd.f32 %v1539, %v1568
      %v1581 = vadd.f32 %v1540, %v1576
      %v1582 = vadd.f32 %v1541, %v1574
      %v1583 = vadd.f32 %v1542, %v1573
      %v1584 = vadd.f32 %v1543, %v1571
      %v1585 = vadd.f32 %v1544, %v1569
      %v1586 = vadd.f32 %v1545, %v1577
      %v1587 = vadd.f32 %v1546, %v1575
      %1588 = vrot.lane.b32.xlu0 %v696, 69
      %v1589 = vpop.permute.xlu0 %1588
      %1590 = vrot.lane.b32.xlu0 %v698, 69
      %v1591 = vpop.permute.xlu0 %1590
      %1592 = vrot.lane.b32.xlu0 %v805, 69
      %v1593 = vpop.permute.xlu0 %1592
      %1594 = vrot.lane.b32.xlu0 %v807, 69
      %v1595 = vpop.permute.xlu0 %1594
      %1596 = vrot.lane.b32.xlu0 %v914, 69
      %v1597 = vpop.permute.xlu0 %1596
      %1598 = vrot.lane.b32.xlu0 %v916, 69
      %v1599 = vpop.permute.xlu0 %1598
      %1600 = vrot.lane.b32.xlu0 %v1023, 69
      %v1601 = vpop.permute.xlu0 %1600
      %1602 = vrot.lane.b32.xlu0 %v1025, 69
      %v1603 = vpop.permute.xlu0 %1602
      %1604 = vrot.lane.b32.xlu0 %v1132, 69
      %v1605 = vpop.permute.xlu0 %1604
      %1606 = vrot.lane.b32.xlu0 %v1134, 69
      %v1607 = vpop.permute.xlu0 %1606
      %vm1608 = vcmp.lt.s32.totalorder %v1197, 69
      %v1609 = vsel %vm1608, %v1601, %v1605
      %v1610 = vsel %vm1608, %v1603, %v1607
      %v1611 = vsel %vm1608, %v1597, %v1601
      %v1612 = vsel %vm1608, %v1599, %v1603
      %v1613 = vsel %vm1608, %v1593, %v1597
      %v1614 = vsel %vm1608, %v1595, %v1599
      %v1615 = vsel %vm1608, %v1589, %v1593
      %v1616 = vsel %vm1608, %v1591, %v1595
      %v1617 = vsel %vm1608, %v1605, %v1589
      %v1618 = vsel %vm1608, %v1607, %v1591
      %v1619 = vadd.f32 %v1578, %v1613
      %v1620 = vadd.f32 %v1579, %v1611
      %v1621 = vadd.f32 %v1580, %v1609
      %v1622 = vadd.f32 %v1581, %v1617
      %v1623 = vadd.f32 %v1582, %v1615
      %v1624 = vadd.f32 %v1583, %v1614
      %v1625 = vadd.f32 %v1584, %v1612
      %v1626 = vadd.f32 %v1585, %v1610
      %v1627 = vadd.f32 %v1586, %v1618
      %v1628 = vadd.f32 %v1587, %v1616
      %1629 = vrot.lane.b32.xlu0 %v701, 52
      %v1630 = vpop.permute.xlu0 %1629
      %1631 = vrot.lane.b32.xlu0 %v703, 52
      %v1632 = vpop.permute.xlu0 %1631
      %1633 = vrot.lane.b32.xlu0 %v810, 52
      %v1634 = vpop.permute.xlu0 %1633
      %1635 = vrot.lane.b32.xlu0 %v812, 52
      %v1636 = vpop.permute.xlu0 %1635
      %1637 = vrot.lane.b32.xlu0 %v919, 52
      %v1638 = vpop.permute.xlu0 %1637
      %1639 = vrot.lane.b32.xlu0 %v921, 52
      %v1640 = vpop.permute.xlu0 %1639
      %1641 = vrot.lane.b32.xlu0 %v1028, 52
      %v1642 = vpop.permute.xlu0 %1641
      %1643 = vrot.lane.b32.xlu0 %v1030, 52
      %v1644 = vpop.permute.xlu0 %1643
      %1645 = vrot.lane.b32.xlu0 %v1137, 52
      %v1646 = vpop.permute.xlu0 %1645
      %1647 = vrot.lane.b32.xlu0 %v1139, 52
      %v1648 = vpop.permute.xlu0 %1647
      %vm1649 = vcmp.lt.s32.totalorder %v1197, 52
      %v1650 = vsel %vm1649, %v1642, %v1646
      %v1651 = vsel %vm1649, %v1644, %v1648
      %v1652 = vsel %vm1649, %v1638, %v1642
      %v1653 = vsel %vm1649, %v1640, %v1644
      %v1654 = vsel %vm1649, %v1634, %v1638
      %v1655 = vsel %vm1649, %v1636, %v1640
      %v1656 = vsel %vm1649, %v1630, %v1634
      %v1657 = vsel %vm1649, %v1632, %v1636
      %v1658 = vsel %vm1649, %v1646, %v1630
      %v1659 = vsel %vm1649, %v1648, %v1632
      %v1660 = vadd.f32 %v1619, %v1654
      %v1661 = vadd.f32 %v1620, %v1652
      %v1662 = vadd.f32 %v1621, %v1650
      %v1663 = vadd.f32 %v1622, %v1658
      %v1664 = vadd.f32 %v1623, %v1656
      %v1665 = vadd.f32 %v1624, %v1655
      %v1666 = vadd.f32 %v1625, %v1653
      %v1667 = vadd.f32 %v1626, %v1651
      %v1668 = vadd.f32 %v1627, %v1659
      %v1669 = vadd.f32 %v1628, %v1657
      %1670 = vrot.lane.b32.xlu0 %v706, 35
      %v1671 = vpop.permute.xlu0 %1670
      %1672 = vrot.lane.b32.xlu0 %v708, 35
      %v1673 = vpop.permute.xlu0 %1672
      %1674 = vrot.lane.b32.xlu0 %v815, 35
      %v1675 = vpop.permute.xlu0 %1674
      %1676 = vrot.lane.b32.xlu0 %v817, 35
      %v1677 = vpop.permute.xlu0 %1676
      %1678 = vrot.lane.b32.xlu0 %v924, 35
      %v1679 = vpop.permute.xlu0 %1678
      %1680 = vrot.lane.b32.xlu0 %v926, 35
      %v1681 = vpop.permute.xlu0 %1680
      %1682 = vrot.lane.b32.xlu0 %v1033, 35
      %v1683 = vpop.permute.xlu0 %1682
      %1684 = vrot.lane.b32.xlu0 %v1035, 35
      %v1685 = vpop.permute.xlu0 %1684
      %1686 = vrot.lane.b32.xlu0 %v1142, 35
      %v1687 = vpop.permute.xlu0 %1686
      %1688 = vrot.lane.b32.xlu0 %v1144, 35
      %v1689 = vpop.permute.xlu0 %1688
      %vm1690 = vcmp.lt.s32.totalorder %v1197, 35
      %v1691 = vsel %vm1690, %v1683, %v1687
      %v1692 = vsel %vm1690, %v1685, %v1689
      %v1693 = vsel %vm1690, %v1679, %v1683
      %v1694 = vsel %vm1690, %v1681, %v1685
      %v1695 = vsel %vm1690, %v1675, %v1679
      %v1696 = vsel %vm1690, %v1677, %v1681
      %v1697 = vsel %vm1690, %v1671, %v1675
      %v1698 = vsel %vm1690, %v1673, %v1677
      %v1699 = vsel %vm1690, %v1687, %v1671
      %v1700 = vsel %vm1690, %v1689, %v1673
      %v1701 = vadd.f32 %v1660, %v1695
      %v1702 = vadd.f32 %v1661, %v1693
      %v1703 = vadd.f32 %v1662, %v1691
      %v1704 = vadd.f32 %v1663, %v1699
      %v1705 = vadd.f32 %v1664, %v1697
      %v1706 = vadd.f32 %v1665, %v1696
      %v1707 = vadd.f32 %v1666, %v1694
      %v1708 = vadd.f32 %v1667, %v1692
      %v1709 = vadd.f32 %v1668, %v1700
      %v1710 = vadd.f32 %v1669, %v1698
      %1711 = vrot.lane.b32.xlu0 %v711, 18
      %v1712 = vpop.permute.xlu0 %1711
      %1713 = vrot.lane.b32.xlu0 %v713, 18
      %v1714 = vpop.permute.xlu0 %1713
      %1715 = vrot.lane.b32.xlu0 %v820, 18
      %v1716 = vpop.permute.xlu0 %1715
      %1717 = vrot.lane.b32.xlu0 %v822, 18
      %v1718 = vpop.permute.xlu0 %1717
      %1719 = vrot.lane.b32.xlu0 %v929, 18
      %v1720 = vpop.permute.xlu0 %1719
      %1721 = vrot.lane.b32.xlu0 %v931, 18
      %v1722 = vpop.permute.xlu0 %1721
      %1723 = vrot.lane.b32.xlu0 %v1038, 18
      %v1724 = vpop.permute.xlu0 %1723
      %1725 = vrot.lane.b32.xlu0 %v1040, 18
      %v1726 = vpop.permute.xlu0 %1725
      %1727 = vrot.lane.b32.xlu0 %v1147, 18
      %v1728 = vpop.permute.xlu0 %1727
      %1729 = vrot.lane.b32.xlu0 %v1149, 18
      %v1730 = vpop.permute.xlu0 %1729
      %vm1731 = vcmp.lt.s32.totalorder %v1197, 18
      %v1732 = vsel %vm1731, %v1724, %v1728
      %v1733 = vsel %vm1731, %v1726, %v1730
      %v1734 = vsel %vm1731, %v1720, %v1724
      %v1735 = vsel %vm1731, %v1722, %v1726
      %v1736 = vsel %vm1731, %v1716, %v1720
      %v1737 = vsel %vm1731, %v1718, %v1722
      %v1738 = vsel %vm1731, %v1712, %v1716
      %v1739 = vsel %vm1731, %v1714, %v1718
      %v1740 = vsel %vm1731, %v1728, %v1712
      %v1741 = vsel %vm1731, %v1730, %v1714
      %v1742 = vadd.f32 %v1701, %v1736
      %v1743 = vadd.f32 %v1702, %v1734
      %v1744 = vadd.f32 %v1703, %v1732
      %v1745 = vadd.f32 %v1704, %v1740
      %v1746 = vadd.f32 %v1705, %v1738
      %v1747 = vadd.f32 %v1706, %v1737
      %v1748 = vadd.f32 %v1707, %v1735
      %v1749 = vadd.f32 %v1708, %v1733
      %v1750 = vadd.f32 %v1709, %v1741
      %v1751 = vadd.f32 %v1710, %v1739
      %1752 = vrot.lane.b32.xlu0 %v716, 1
      %v1753 = vpop.permute.xlu0 %1752
      %1754 = vrot.lane.b32.xlu0 %v718, 1
      %v1755 = vpop.permute.xlu0 %1754
      %1756 = vrot.lane.b32.xlu0 %v825, 1
      %v1757 = vpop.permute.xlu0 %1756
      %1758 = vrot.lane.b32.xlu0 %v827, 1
      %v1759 = vpop.permute.xlu0 %1758
      %1760 = vrot.lane.b32.xlu0 %v934, 1
      %v1761 = vpop.permute.xlu0 %1760
      %1762 = vrot.lane.b32.xlu0 %v936, 1
      %v1763 = vpop.permute.xlu0 %1762
      %1764 = vrot.lane.b32.xlu0 %v1043, 1
      %v1765 = vpop.permute.xlu0 %1764
      %1766 = vrot.lane.b32.xlu0 %v1045, 1
      %v1767 = vpop.permute.xlu0 %1766
      %1768 = vrot.lane.b32.xlu0 %v1152, 1
      %v1769 = vpop.permute.xlu0 %1768
      %1770 = vrot.lane.b32.xlu0 %v1154, 1
      %v1771 = vpop.permute.xlu0 %1770
      %vm1772 = vcmp.lt.s32.totalorder %v1197, 1
      %v1773 = vsel %vm1772, %v1765, %v1769
      %v1774 = vsel %vm1772, %v1767, %v1771
      %v1775 = vsel %vm1772, %v1761, %v1765
      %v1776 = vsel %vm1772, %v1763, %v1767
      %v1777 = vsel %vm1772, %v1757, %v1761
      %v1778 = vsel %vm1772, %v1759, %v1763
      %v1779 = vsel %vm1772, %v1753, %v1757
      %v1780 = vsel %vm1772, %v1755, %v1759
      %v1781 = vsel %vm1772, %v1769, %v1753
      %v1782 = vsel %vm1772, %v1771, %v1755
      %v1783 = vadd.f32 %v1742, %v1777
      %v1784 = vadd.f32 %v1743, %v1775
      %v1785 = vadd.f32 %v1744, %v1773
      %v1786 = vadd.f32 %v1745, %v1781
      %v1787 = vadd.f32 %v1746, %v1779
      %v1788 = vadd.f32 %v1747, %v1778
      %v1789 = vadd.f32 %v1748, %v1776
      %v1790 = vadd.f32 %v1749, %v1774
      %v1791 = vadd.f32 %v1750, %v1782
      %v1792 = vadd.f32 %v1751, %v1780
      %1793 = vrot.lane.b32.xlu0 %v721, 112
      %v1794 = vpop.permute.xlu0 %1793
      %1795 = vrot.lane.b32.xlu0 %v723, 112
      %v1796 = vpop.permute.xlu0 %1795
      %1797 = vrot.lane.b32.xlu0 %v830, 112
      %v1798 = vpop.permute.xlu0 %1797
      %1799 = vrot.lane.b32.xlu0 %v832, 112
      %v1800 = vpop.permute.xlu0 %1799
      %1801 = vrot.lane.b32.xlu0 %v939, 112
      %v1802 = vpop.permute.xlu0 %1801
      %1803 = vrot.lane.b32.xlu0 %v941, 112
      %v1804 = vpop.permute.xlu0 %1803
      %1805 = vrot.lane.b32.xlu0 %v1048, 112
      %v1806 = vpop.permute.xlu0 %1805
      %1807 = vrot.lane.b32.xlu0 %v1050, 112
      %v1808 = vpop.permute.xlu0 %1807
      %1809 = vrot.lane.b32.xlu0 %v1157, 112
      %v1810 = vpop.permute.xlu0 %1809
      %1811 = vrot.lane.b32.xlu0 %v1159, 112
      %v1812 = vpop.permute.xlu0 %1811
      %vm1813 = vcmp.lt.s32.totalorder %v1197, 112
      %v1814 = vsel %vm1813, %v1806, %v1810
      %v1815 = vsel %vm1813, %v1808, %v1812
      %v1816 = vsel %vm1813, %v1802, %v1806
      %v1817 = vsel %vm1813, %v1804, %v1808
      %v1818 = vsel %vm1813, %v1798, %v1802
      %v1819 = vsel %vm1813, %v1800, %v1804
      %v1820 = vsel %vm1813, %v1794, %v1798
      %v1821 = vsel %vm1813, %v1796, %v1800
      %v1822 = vsel %vm1813, %v1810, %v1794
      %v1823 = vsel %vm1813, %v1812, %v1796
      %v1824 = vadd.f32 %v1783, %v1816
      %v1825 = vadd.f32 %v1784, %v1814
      %v1826 = vadd.f32 %v1785, %v1822
      %v1827 = vadd.f32 %v1786, %v1820
      %v1828 = vadd.f32 %v1787, %v1818
      %v1829 = vadd.f32 %v1788, %v1817
      %v1830 = vadd.f32 %v1789, %v1815
      %v1831 = vadd.f32 %v1790, %v1823
      %v1832 = vadd.f32 %v1791, %v1821
      %v1833 = vadd.f32 %v1792, %v1819
      %1834 = vrot.lane.b32.xlu0 %v726, 95
      %v1835 = vpop.permute.xlu0 %1834
      %1836 = vrot.lane.b32.xlu0 %v728, 95
      %v1837 = vpop.permute.xlu0 %1836
      %1838 = vrot.lane.b32.xlu0 %v835, 95
      %v1839 = vpop.permute.xlu0 %1838
      %1840 = vrot.lane.b32.xlu0 %v837, 95
      %v1841 = vpop.permute.xlu0 %1840
      %1842 = vrot.lane.b32.xlu0 %v944, 95
      %v1843 = vpop.permute.xlu0 %1842
      %1844 = vrot.lane.b32.xlu0 %v946, 95
      %v1845 = vpop.permute.xlu0 %1844
      %1846 = vrot.lane.b32.xlu0 %v1053, 95
      %v1847 = vpop.permute.xlu0 %1846
      %1848 = vrot.lane.b32.xlu0 %v1055, 95
      %v1849 = vpop.permute.xlu0 %1848
      %1850 = vrot.lane.b32.xlu0 %v1162, 95
      %v1851 = vpop.permute.xlu0 %1850
      %1852 = vrot.lane.b32.xlu0 %v1164, 95
      %v1853 = vpop.permute.xlu0 %1852
      %vm1854 = vcmp.lt.s32.totalorder %v1197, 95
      %v1855 = vsel %vm1854, %v1847, %v1851
      %v1856 = vsel %vm1854, %v1849, %v1853
      %v1857 = vsel %vm1854, %v1843, %v1847
      %v1858 = vsel %vm1854, %v1845, %v1849
      %v1859 = vsel %vm1854, %v1839, %v1843
      %v1860 = vsel %vm1854, %v1841, %v1845
      %v1861 = vsel %vm1854, %v1835, %v1839
      %v1862 = vsel %vm1854, %v1837, %v1841
      %v1863 = vsel %vm1854, %v1851, %v1835
      %v1864 = vsel %vm1854, %v1853, %v1837
      %v1865 = vadd.f32 %v1824, %v1857
      %v1866 = vadd.f32 %v1825, %v1855
      %v1867 = vadd.f32 %v1826, %v1863
      %v1868 = vadd.f32 %v1827, %v1861
      %v1869 = vadd.f32 %v1828, %v1859
      %v1870 = vadd.f32 %v1829, %v1858
      %v1871 = vadd.f32 %v1830, %v1856
      %v1872 = vadd.f32 %v1831, %v1864
      %v1873 = vadd.f32 %v1832, %v1862
      %v1874 = vadd.f32 %v1833, %v1860
      %1875 = vrot.lane.b32.xlu0 %v731, 78
      %v1876 = vpop.permute.xlu0 %1875
      %1877 = vrot.lane.b32.xlu0 %v733, 78
      %v1878 = vpop.permute.xlu0 %1877
      %1879 = vrot.lane.b32.xlu0 %v840, 78
      %v1880 = vpop.permute.xlu0 %1879
      %1881 = vrot.lane.b32.xlu0 %v842, 78
      %v1882 = vpop.permute.xlu0 %1881
      %1883 = vrot.lane.b32.xlu0 %v949, 78
      %v1884 = vpop.permute.xlu0 %1883
      %1885 = vrot.lane.b32.xlu0 %v951, 78
      %v1886 = vpop.permute.xlu0 %1885
      %1887 = vrot.lane.b32.xlu0 %v1058, 78
      %v1888 = vpop.permute.xlu0 %1887
      %1889 = vrot.lane.b32.xlu0 %v1060, 78
      %v1890 = vpop.permute.xlu0 %1889
      %1891 = vrot.lane.b32.xlu0 %v1167, 78
      %v1892 = vpop.permute.xlu0 %1891
      %1893 = vrot.lane.b32.xlu0 %v1169, 78
      %v1894 = vpop.permute.xlu0 %1893
      %vm1895 = vcmp.lt.s32.totalorder %v1197, 78
      %v1896 = vsel %vm1895, %v1888, %v1892
      %v1897 = vsel %vm1895, %v1890, %v1894
      %v1898 = vsel %vm1895, %v1884, %v1888
      %v1899 = vsel %vm1895, %v1886, %v1890
      %v1900 = vsel %vm1895, %v1880, %v1884
      %v1901 = vsel %vm1895, %v1882, %v1886
      %v1902 = vsel %vm1895, %v1876, %v1880
      %v1903 = vsel %vm1895, %v1878, %v1882
      %v1904 = vsel %vm1895, %v1892, %v1876
      %v1905 = vsel %vm1895, %v1894, %v1878
      %v1906 = vadd.f32 %v1865, %v1898
      %v1907 = vadd.f32 %v1866, %v1896
      %v1908 = vadd.f32 %v1867, %v1904
      %v1909 = vadd.f32 %v1868, %v1902
      %v1910 = vadd.f32 %v1869, %v1900
      %v1911 = vadd.f32 %v1870, %v1899
      %v1912 = vadd.f32 %v1871, %v1897
      %v1913 = vadd.f32 %v1872, %v1905
      %v1914 = vadd.f32 %v1873, %v1903
      %v1915 = vadd.f32 %v1874, %v1901
      %1916 = vrot.lane.b32.xlu0 %v736, 61
      %v1917 = vpop.permute.xlu0 %1916
      %1918 = vrot.lane.b32.xlu0 %v738, 61
      %v1919 = vpop.permute.xlu0 %1918
      %1920 = vrot.lane.b32.xlu0 %v845, 61
      %v1921 = vpop.permute.xlu0 %1920
      %1922 = vrot.lane.b32.xlu0 %v847, 61
      %v1923 = vpop.permute.xlu0 %1922
      %1924 = vrot.lane.b32.xlu0 %v954, 61
      %v1925 = vpop.permute.xlu0 %1924
      %1926 = vrot.lane.b32.xlu0 %v956, 61
      %v1927 = vpop.permute.xlu0 %1926
      %1928 = vrot.lane.b32.xlu0 %v1063, 61
      %v1929 = vpop.permute.xlu0 %1928
      %1930 = vrot.lane.b32.xlu0 %v1065, 61
      %v1931 = vpop.permute.xlu0 %1930
      %1932 = vrot.lane.b32.xlu0 %v1172, 61
      %v1933 = vpop.permute.xlu0 %1932
      %1934 = vrot.lane.b32.xlu0 %v1174, 61
      %v1935 = vpop.permute.xlu0 %1934
      %vm1936 = vcmp.lt.s32.totalorder %v1197, 61
      %v1937 = vsel %vm1936, %v1929, %v1933
      %v1938 = vsel %vm1936, %v1931, %v1935
      %v1939 = vsel %vm1936, %v1925, %v1929
      %v1940 = vsel %vm1936, %v1927, %v1931
      %v1941 = vsel %vm1936, %v1921, %v1925
      %v1942 = vsel %vm1936, %v1923, %v1927
      %v1943 = vsel %vm1936, %v1917, %v1921
      %v1944 = vsel %vm1936, %v1919, %v1923
      %v1945 = vsel %vm1936, %v1933, %v1917
      %v1946 = vsel %vm1936, %v1935, %v1919
      %v1947 = vadd.f32 %v1906, %v1939
      %v1948 = vadd.f32 %v1907, %v1937
      %v1949 = vadd.f32 %v1908, %v1945
      %v1950 = vadd.f32 %v1909, %v1943
      %v1951 = vadd.f32 %v1910, %v1941
      %v1952 = vadd.f32 %v1911, %v1940
      %v1953 = vadd.f32 %v1912, %v1938
      %v1954 = vadd.f32 %v1913, %v1946
      %v1955 = vadd.f32 %v1914, %v1944
      %v1956 = vadd.f32 %v1915, %v1942
      %v1957 = vld [vmem:[%s2] sm:$0xff]
      %v1958 = vld [vmem:[%s2 + $0x8] sm:$0xff]
      %1960 = vset.pattern.permute.xlu0 0
      %1961 = vperm.xlu0 %1960, %v1957
      %v1962 = vpop.permute.xlu0 %1961
      %1965 = vset.pattern.permute.xlu0 0
      %1966 = vperm.xlu0 %1965, %v1958
      %v1967 = vpop.permute.xlu0 %1966
      %v1969 = vadd.f32 %v1947, %v1962
      %v1970 = vadd.f32 %v1948, %v1962
      %v1971 = vadd.f32 %v1949, %v1962
      %v1972 = vadd.f32 %v1950, %v1962
      %v1973 = vadd.f32 %v1951, %v1962
      %v1974 = vadd.f32 %v1952, %v1967
      %v1975 = vadd.f32 %v1953, %v1967
      %v1976 = vadd.f32 %v1954, %v1967
      %v1977 = vadd.f32 %v1955, %v1967
      %v1978 = vadd.f32 %v1956, %v1967
      %vm1979 = vcmp.ge.f32.partialorder %v1969, 0.0
      %vm1980 = vcmp.ge.f32.partialorder %v1970, 0.0
      %vm1981 = vcmp.ge.f32.partialorder %v1971, 0.0
      %vm1982 = vcmp.ge.f32.partialorder %v1972, 0.0
      %vm1983 = vcmp.ge.f32.partialorder %v1973, 0.0
      %vm1984 = vcmp.ge.f32.partialorder %v1974, 0.0
      %vm1985 = vcmp.ge.f32.partialorder %v1975, 0.0
      %vm1986 = vcmp.ge.f32.partialorder %v1976, 0.0
      %vm1987 = vcmp.ge.f32.partialorder %v1977, 0.0
      %vm1988 = vcmp.ge.f32.partialorder %v1978, 0.0
      %v1989 = vmul.f32 %v1969, 0.1
      %v1990 = vmul.f32 %v1970, 0.1
      %v1991 = vmul.f32 %v1971, 0.1
      %v1992 = vmul.f32 %v1972, 0.1
      %v1993 = vmul.f32 %v1973, 0.1
      %v1994 = vmul.f32 %v1974, 0.1
      %v1995 = vmul.f32 %v1975, 0.1
      %v1996 = vmul.f32 %v1976, 0.1
      %v1997 = vmul.f32 %v1977, 0.1
      %v1998 = vmul.f32 %v1978, 0.1
      %v1999 = vsel %vm1979, %v1969, %v1989
      %v2000 = vsel %vm1980, %v1970, %v1990
      %v2001 = vsel %vm1981, %v1971, %v1991
      %v2002 = vsel %vm1982, %v1972, %v1992
      %v2003 = vsel %vm1983, %v1973, %v1993
      %v2004 = vsel %vm1984, %v1974, %v1994
      %v2005 = vsel %vm1985, %v1975, %v1995
      %v2006 = vsel %vm1986, %v1976, %v1996
      %v2007 = vsel %vm1987, %v1977, %v1997
      %v2008 = vsel %vm1988, %v1978, %v1998
      %v2009 = vpack.c.bf16 %v2000, %v1999
      %v2010 = vpack.c.bf16 %v2002, %v2001
      %v2011 = vpack.c.bf16 %v2003, %v2003
      %v2012 = vpack.c.bf16 %v2005, %v2004
      %v2013 = vpack.c.bf16 %v2007, %v2006
      %v2014 = vpack.c.bf16 %v2008, %v2008
      %2015 = vst [vmem:[#allocation2] sm:$0xff] %v2009
      %2016 = vst [vmem:[#allocation2 + $0x8] sm:$0xff] %v2010
      %2017 = vst [vmem:[#allocation2 + $0x10] sm:$0xf] %v2011
      %2018 = vst [vmem:[#allocation2 + $0x14] sm:$0xff] %v2012
      %2019 = vst [vmem:[#allocation2 + $0x1c] sm:$0xff] %v2013
      %2020 = vst [vmem:[#allocation2 + $0x24] sm:$0xf] %v2014
      %2021 = vrot.lane.b32.xlu0 %v1999, 127
      %v2022 = vpop.permute.xlu0 %2021
      %2023 = vrot.lane.b32.xlu0 %v2004, 127
      %v2024 = vpop.permute.xlu0 %2023
      %2025 = vrot.lane.b32.xlu0 %v2000, 127
      %v2026 = vpop.permute.xlu0 %2025
      %2027 = vrot.lane.b32.xlu0 %v2005, 127
      %v2028 = vpop.permute.xlu0 %2027
      %2029 = vrot.lane.b32.xlu0 %v2001, 127
      %v2030 = vpop.permute.xlu0 %2029
      %2031 = vrot.lane.b32.xlu0 %v2006, 127
      %v2032 = vpop.permute.xlu0 %2031
      %2033 = vrot.lane.b32.xlu0 %v2002, 127
      %v2034 = vpop.permute.xlu0 %2033
      %2035 = vrot.lane.b32.xlu0 %v2007, 127
      %v2036 = vpop.permute.xlu0 %2035
      %2037 = vrot.lane.b32.xlu0 %v2003, 127
      %v2038 = vpop.permute.xlu0 %2037
      %2039 = vrot.lane.b32.xlu0 %v2008, 127
      %v2040 = vpop.permute.xlu0 %2039
      %vm2041 = vcmp.lt.s32.totalorder %v1197, 127
      %v2042 = vsel %vm2041, %v2034, %v2038
      %v2043 = vsel %vm2041, %v2036, %v2040
      %v2044 = vsel %vm2041, %v2030, %v2034
      %v2045 = vsel %vm2041, %v2032, %v2036
      %v2046 = vsel %vm2041, %v2026, %v2030
      %v2047 = vsel %vm2041, %v2028, %v2032
      %v2048 = vsel %vm2041, %v2022, %v2026
      %v2049 = vsel %vm2041, %v2024, %v2028
      %v2050 = vsel %vm2041, %v2038, %v2022
      %v2051 = vsel %vm2041, %v2040, %v2024
      %v2052 = vpack.c.bf16 %v2046, %v2048
      %v2053 = vpack.c.bf16 %v2042, %v2044
      %v2054 = vpack.c.bf16 %v2050, %v2050
      %v2055 = vpack.c.bf16 %v2047, %v2049
      %v2056 = vpack.c.bf16 %v2043, %v2045
      %v2057 = vpack.c.bf16 %v2051, %v2051
      %2058 = vst [vmem:[#allocation2 + $0x28] sm:$0xff] %v2052
      %2059 = vst [vmem:[#allocation2 + $0x30] sm:$0xff] %v2053
      %2060 = vst [vmem:[#allocation2 + $0x38] sm:$0xf] %v2054
      %2061 = vst [vmem:[#allocation2 + $0x3c] sm:$0xff] %v2055
      %2062 = vst [vmem:[#allocation2 + $0x44] sm:$0xff] %v2056
      %2063 = vst [vmem:[#allocation2 + $0x4c] sm:$0xf] %v2057
      %2064 = vrot.lane.b32.xlu0 %v1999, 126
      %v2065 = vpop.permute.xlu0 %2064
      %2066 = vrot.lane.b32.xlu0 %v2004, 126
      %v2067 = vpop.permute.xlu0 %2066
      %2068 = vrot.lane.b32.xlu0 %v2000, 126
      %v2069 = vpop.permute.xlu0 %2068
      %2070 = vrot.lane.b32.xlu0 %v2005, 126
      %v2071 = vpop.permute.xlu0 %2070
      %2072 = vrot.lane.b32.xlu0 %v2001, 126
      %v2073 = vpop.permute.xlu0 %2072
      %2074 = vrot.lane.b32.xlu0 %v2006, 126
      %v2075 = vpop.permute.xlu0 %2074
      %2076 = vrot.lane.b32.xlu0 %v2002, 126
      %v2077 = vpop.permute.xlu0 %2076
      %2078 = vrot.lane.b32.xlu0 %v2007, 126
      %v2079 = vpop.permute.xlu0 %2078
      %2080 = vrot.lane.b32.xlu0 %v2003, 126
      %v2081 = vpop.permute.xlu0 %2080
      %2082 = vrot.lane.b32.xlu0 %v2008, 126
      %v2083 = vpop.permute.xlu0 %2082
      %vm2084 = vcmp.lt.s32.totalorder %v1197, 126
      %v2085 = vsel %vm2084, %v2077, %v2081
      %v2086 = vsel %vm2084, %v2079, %v2083
      %v2087 = vsel %vm2084, %v2073, %v2077
      %v2088 = vsel %vm2084, %v2075, %v2079
      %v2089 = vsel %vm2084, %v2069, %v2073
      %v2090 = vsel %vm2084, %v2071, %v2075
      %v2091 = vsel %vm2084, %v2065, %v2069
      %v2092 = vsel %vm2084, %v2067, %v2071
      %v2093 = vsel %vm2084, %v2081, %v2065
      %v2094 = vsel %vm2084, %v2083, %v2067
      %v2095 = vpack.c.bf16 %v2089, %v2091
      %v2096 = vpack.c.bf16 %v2085, %v2087
      %v2097 = vpack.c.bf16 %v2093, %v2093
      %v2098 = vpack.c.bf16 %v2090, %v2092
      %v2099 = vpack.c.bf16 %v2086, %v2088
      %v2100 = vpack.c.bf16 %v2094, %v2094
      %2101 = vst [vmem:[#allocation2 + $0x50] sm:$0xff] %v2095
      %2102 = vst [vmem:[#allocation2 + $0x58] sm:$0xff] %v2096
      %2103 = vst [vmem:[#allocation2 + $0x60] sm:$0xf] %v2097
      %2104 = vst [vmem:[#allocation2 + $0x64] sm:$0xff] %v2098
      %2105 = vst [vmem:[#allocation2 + $0x6c] sm:$0xff] %v2099
      %2106 = vst [vmem:[#allocation2 + $0x74] sm:$0xf] %v2100
      %2107 = vrot.lane.b32.xlu0 %v1999, 111
      %v2108 = vpop.permute.xlu0 %2107
      %2109 = vrot.lane.b32.xlu0 %v2004, 111
      %v2110 = vpop.permute.xlu0 %2109
      %2111 = vrot.lane.b32.xlu0 %v2000, 111
      %v2112 = vpop.permute.xlu0 %2111
      %2113 = vrot.lane.b32.xlu0 %v2005, 111
      %v2114 = vpop.permute.xlu0 %2113
      %2115 = vrot.lane.b32.xlu0 %v2001, 111
      %v2116 = vpop.permute.xlu0 %2115
      %2117 = vrot.lane.b32.xlu0 %v2006, 111
      %v2118 = vpop.permute.xlu0 %2117
      %2119 = vrot.lane.b32.xlu0 %v2002, 111
      %v2120 = vpop.permute.xlu0 %2119
      %2121 = vrot.lane.b32.xlu0 %v2007, 111
      %v2122 = vpop.permute.xlu0 %2121
      %2123 = vrot.lane.b32.xlu0 %v2003, 111
      %v2124 = vpop.permute.xlu0 %2123
      %2125 = vrot.lane.b32.xlu0 %v2008, 111
      %v2126 = vpop.permute.xlu0 %2125
      %v2127 = vsel %vm1198, %v2120, %v2124
      %v2128 = vsel %vm1198, %v2122, %v2126
      %v2129 = vsel %vm1198, %v2116, %v2120
      %v2130 = vsel %vm1198, %v2118, %v2122
      %v2131 = vsel %vm1198, %v2112, %v2116
      %v2132 = vsel %vm1198, %v2114, %v2118
      %v2133 = vsel %vm1198, %v2108, %v2112
      %v2134 = vsel %vm1198, %v2110, %v2114
      %v2135 = vsel %vm1198, %v2124, %v2108
      %v2136 = vsel %vm1198, %v2126, %v2110
      %v2137 = vpack.c.bf16 %v2131, %v2133
      %v2138 = vpack.c.bf16 %v2127, %v2129
      %v2139 = vpack.c.bf16 %v2135, %v2135
      %v2140 = vpack.c.bf16 %v2132, %v2134
      %v2141 = vpack.c.bf16 %v2128, %v2130
      %v2142 = vpack.c.bf16 %v2136, %v2136
      %2143 = vst [vmem:[#allocation2 + $0x78] sm:$0xff] %v2137
      %2144 = vst [vmem:[#allocation2 + $0x80] sm:$0xff] %v2138
      %2145 = vst [vmem:[#allocation2 + $0x88] sm:$0xf] %v2139
      %2146 = vst [vmem:[#allocation2 + $0x8c] sm:$0xff] %v2140
      %2147 = vst [vmem:[#allocation2 + $0x94] sm:$0xff] %v2141
      %2148 = vst [vmem:[#allocation2 + $0x9c] sm:$0xf] %v2142
      %2149 = vrot.lane.b32.xlu0 %v1999, 110
      %v2150 = vpop.permute.xlu0 %2149
      %2151 = vrot.lane.b32.xlu0 %v2004, 110
      %v2152 = vpop.permute.xlu0 %2151
      %2153 = vrot.lane.b32.xlu0 %v2000, 110
      %v2154 = vpop.permute.xlu0 %2153
      %2155 = vrot.lane.b32.xlu0 %v2005, 110
      %v2156 = vpop.permute.xlu0 %2155
      %2157 = vrot.lane.b32.xlu0 %v2001, 110
      %v2158 = vpop.permute.xlu0 %2157
      %2159 = vrot.lane.b32.xlu0 %v2006, 110
      %v2160 = vpop.permute.xlu0 %2159
      %2161 = vrot.lane.b32.xlu0 %v2002, 110
      %v2162 = vpop.permute.xlu0 %2161
      %2163 = vrot.lane.b32.xlu0 %v2007, 110
      %v2164 = vpop.permute.xlu0 %2163
      %2165 = vrot.lane.b32.xlu0 %v2003, 110
      %v2166 = vpop.permute.xlu0 %2165
      %2167 = vrot.lane.b32.xlu0 %v2008, 110
      %v2168 = vpop.permute.xlu0 %2167
      %vm2169 = vcmp.lt.s32.totalorder %v1197, 110
      %v2170 = vsel %vm2169, %v2162, %v2166
      %v2171 = vsel %vm2169, %v2164, %v2168
      %v2172 = vsel %vm2169, %v2158, %v2162
      %v2173 = vsel %vm2169, %v2160, %v2164
      %v2174 = vsel %vm2169, %v2154, %v2158
      %v2175 = vsel %vm2169, %v2156, %v2160
      %v2176 = vsel %vm2169, %v2150, %v2154
      %v2177 = vsel %vm2169, %v2152, %v2156
      %v2178 = vsel %vm2169, %v2166, %v2150
      %v2179 = vsel %vm2169, %v2168, %v2152
      %v2180 = vpack.c.bf16 %v2174, %v2176
      %v2181 = vpack.c.bf16 %v2170, %v2172
      %v2182 = vpack.c.bf16 %v2178, %v2178
      %v2183 = vpack.c.bf16 %v2175, %v2177
      %v2184 = vpack.c.bf16 %v2171, %v2173
      %v2185 = vpack.c.bf16 %v2179, %v2179
      %2186 = vst [vmem:[#allocation2 + $0xa0] sm:$0xff] %v2180
      %2187 = vst [vmem:[#allocation2 + $0xa8] sm:$0xff] %v2181
      %2188 = vst [vmem:[#allocation2 + $0xb0] sm:$0xf] %v2182
      %2189 = vst [vmem:[#allocation2 + $0xb4] sm:$0xff] %v2183
      %2190 = vst [vmem:[#allocation2 + $0xbc] sm:$0xff] %v2184
      %2191 = vst [vmem:[#allocation2 + $0xc4] sm:$0xf] %v2185
      %2192 = vrot.lane.b32.xlu0 %v1999, 109
      %v2193 = vpop.permute.xlu0 %2192
      %2194 = vrot.lane.b32.xlu0 %v2004, 109
      %v2195 = vpop.permute.xlu0 %2194
      %2196 = vrot.lane.b32.xlu0 %v2000, 109
      %v2197 = vpop.permute.xlu0 %2196
      %2198 = vrot.lane.b32.xlu0 %v2005, 109
      %v2199 = vpop.permute.xlu0 %2198
      %2200 = vrot.lane.b32.xlu0 %v2001, 109
      %v2201 = vpop.permute.xlu0 %2200
      %2202 = vrot.lane.b32.xlu0 %v2006, 109
      %v2203 = vpop.permute.xlu0 %2202
      %2204 = vrot.lane.b32.xlu0 %v2002, 109
      %v2205 = vpop.permute.xlu0 %2204
      %2206 = vrot.lane.b32.xlu0 %v2007, 109
      %v2207 = vpop.permute.xlu0 %2206
      %2208 = vrot.lane.b32.xlu0 %v2003, 109
      %v2209 = vpop.permute.xlu0 %2208
      %2210 = vrot.lane.b32.xlu0 %v2008, 109
      %v2211 = vpop.permute.xlu0 %2210
      %vm2212 = vcmp.lt.s32.totalorder %v1197, 109
      %v2213 = vsel %vm2212, %v2205, %v2209
      %v2214 = vsel %vm2212, %v2207, %v2211
      %v2215 = vsel %vm2212, %v2201, %v2205
      %v2216 = vsel %vm2212, %v2203, %v2207
      %v2217 = vsel %vm2212, %v2197, %v2201
      %v2218 = vsel %vm2212, %v2199, %v2203
      %v2219 = vsel %vm2212, %v2193, %v2197
      %v2220 = vsel %vm2212, %v2195, %v2199
      %v2221 = vsel %vm2212, %v2209, %v2193
      %v2222 = vsel %vm2212, %v2211, %v2195
      %v2223 = vpack.c.bf16 %v2217, %v2219
      %v2224 = vpack.c.bf16 %v2213, %v2215
      %v2225 = vpack.c.bf16 %v2221, %v2221
      %v2226 = vpack.c.bf16 %v2218, %v2220
      %v2227 = vpack.c.bf16 %v2214, %v2216
      %v2228 = vpack.c.bf16 %v2222, %v2222
      %2229 = vst [vmem:[#allocation2 + $0xc8] sm:$0xff] %v2223
      %2230 = vst [vmem:[#allocation2 + $0xd0] sm:$0xff] %v2224
      %2231 = vst [vmem:[#allocation2 + $0xd8] sm:$0xf] %v2225
      %2232 = vst [vmem:[#allocation2 + $0xdc] sm:$0xff] %v2226
      %2233 = vst [vmem:[#allocation2 + $0xe4] sm:$0xff] %v2227
      %2234 = vst [vmem:[#allocation2 + $0xec] sm:$0xf] %v2228
      %2235 = vrot.lane.b32.xlu0 %v1999, 94
      %v2236 = vpop.permute.xlu0 %2235
      %2237 = vrot.lane.b32.xlu0 %v2004, 94
      %v2238 = vpop.permute.xlu0 %2237
      %2239 = vrot.lane.b32.xlu0 %v2000, 94
      %v2240 = vpop.permute.xlu0 %2239
      %2241 = vrot.lane.b32.xlu0 %v2005, 94
      %v2242 = vpop.permute.xlu0 %2241
      %2243 = vrot.lane.b32.xlu0 %v2001, 94
      %v2244 = vpop.permute.xlu0 %2243
      %2245 = vrot.lane.b32.xlu0 %v2006, 94
      %v2246 = vpop.permute.xlu0 %2245
      %2247 = vrot.lane.b32.xlu0 %v2002, 94
      %v2248 = vpop.permute.xlu0 %2247
      %2249 = vrot.lane.b32.xlu0 %v2007, 94
      %v2250 = vpop.permute.xlu0 %2249
      %2251 = vrot.lane.b32.xlu0 %v2003, 94
      %v2252 = vpop.permute.xlu0 %2251
      %2253 = vrot.lane.b32.xlu0 %v2008, 94
      %v2254 = vpop.permute.xlu0 %2253
      %v2255 = vsel %vm1239, %v2248, %v2252
      %v2256 = vsel %vm1239, %v2250, %v2254
      %v2257 = vsel %vm1239, %v2244, %v2248
      %v2258 = vsel %vm1239, %v2246, %v2250
      %v2259 = vsel %vm1239, %v2240, %v2244
      %v2260 = vsel %vm1239, %v2242, %v2246
      %v2261 = vsel %vm1239, %v2236, %v2240
      %v2262 = vsel %vm1239, %v2238, %v2242
      %v2263 = vsel %vm1239, %v2252, %v2236
      %v2264 = vsel %vm1239, %v2254, %v2238
      %v2265 = vpack.c.bf16 %v2259, %v2261
      %v2266 = vpack.c.bf16 %v2255, %v2257
      %v2267 = vpack.c.bf16 %v2263, %v2263
      %v2268 = vpack.c.bf16 %v2260, %v2262
      %v2269 = vpack.c.bf16 %v2256, %v2258
      %v2270 = vpack.c.bf16 %v2264, %v2264
      %2271 = vst [vmem:[#allocation2 + $0xf0] sm:$0xff] %v2265
      %2272 = vst [vmem:[#allocation2 + $0xf8] sm:$0xff] %v2266
      %2273 = vst [vmem:[#allocation2 + $0x100] sm:$0xf] %v2267
      %2274 = vst [vmem:[#allocation2 + $0x104] sm:$0xff] %v2268
      %2275 = vst [vmem:[#allocation2 + $0x10c] sm:$0xff] %v2269
      %2276 = vst [vmem:[#allocation2 + $0x114] sm:$0xf] %v2270
      %2277 = vrot.lane.b32.xlu0 %v1999, 93
      %v2278 = vpop.permute.xlu0 %2277
      %2279 = vrot.lane.b32.xlu0 %v2004, 93
      %v2280 = vpop.permute.xlu0 %2279
      %2281 = vrot.lane.b32.xlu0 %v2000, 93
      %v2282 = vpop.permute.xlu0 %2281
      %2283 = vrot.lane.b32.xlu0 %v2005, 93
      %v2284 = vpop.permute.xlu0 %2283
      %2285 = vrot.lane.b32.xlu0 %v2001, 93
      %v2286 = vpop.permute.xlu0 %2285
      %2287 = vrot.lane.b32.xlu0 %v2006, 93
      %v2288 = vpop.permute.xlu0 %2287
      %2289 = vrot.lane.b32.xlu0 %v2002, 93
      %v2290 = vpop.permute.xlu0 %2289
      %2291 = vrot.lane.b32.xlu0 %v2007, 93
      %v2292 = vpop.permute.xlu0 %2291
      %2293 = vrot.lane.b32.xlu0 %v2003, 93
      %v2294 = vpop.permute.xlu0 %2293
      %2295 = vrot.lane.b32.xlu0 %v2008, 93
      %v2296 = vpop.permute.xlu0 %2295
      %vm2297 = vcmp.lt.s32.totalorder %v1197, 93
      %v2298 = vsel %vm2297, %v2290, %v2294
      %v2299 = vsel %vm2297, %v2292, %v2296
      %v2300 = vsel %vm2297, %v2286, %v2290
      %v2301 = vsel %vm2297, %v2288, %v2292
      %v2302 = vsel %vm2297, %v2282, %v2286
      %v2303 = vsel %vm2297, %v2284, %v2288
      %v2304 = vsel %vm2297, %v2278, %v2282
      %v2305 = vsel %vm2297, %v2280, %v2284
      %v2306 = vsel %vm2297, %v2294, %v2278
      %v2307 = vsel %vm2297, %v2296, %v2280
      %v2308 = vpack.c.bf16 %v2302, %v2304
      %v2309 = vpack.c.bf16 %v2298, %v2300
      %v2310 = vpack.c.bf16 %v2306, %v2306
      %v2311 = vpack.c.bf16 %v2303, %v2305
      %v2312 = vpack.c.bf16 %v2299, %v2301
      %v2313 = vpack.c.bf16 %v2307, %v2307
      %2314 = vst [vmem:[#allocation2 + $0x118] sm:$0xff] %v2308
      %2315 = vst [vmem:[#allocation2 + $0x120] sm:$0xff] %v2309
      %2316 = vst [vmem:[#allocation2 + $0x128] sm:$0xf] %v2310
      %2317 = vst [vmem:[#allocation2 + $0x12c] sm:$0xff] %v2311
      %2318 = vst [vmem:[#allocation2 + $0x134] sm:$0xff] %v2312
      %2319 = vst [vmem:[#allocation2 + $0x13c] sm:$0xf] %v2313
      %2320 = vrot.lane.b32.xlu0 %v1999, 92
      %v2321 = vpop.permute.xlu0 %2320
      %2322 = vrot.lane.b32.xlu0 %v2004, 92
      %v2323 = vpop.permute.xlu0 %2322
      %2324 = vrot.lane.b32.xlu0 %v2000, 92
      %v2325 = vpop.permute.xlu0 %2324
      %2326 = vrot.lane.b32.xlu0 %v2005, 92
      %v2327 = vpop.permute.xlu0 %2326
      %2328 = vrot.lane.b32.xlu0 %v2001, 92
      %v2329 = vpop.permute.xlu0 %2328
      %2330 = vrot.lane.b32.xlu0 %v2006, 92
      %v2331 = vpop.permute.xlu0 %2330
      %2332 = vrot.lane.b32.xlu0 %v2002, 92
      %v2333 = vpop.permute.xlu0 %2332
      %2334 = vrot.lane.b32.xlu0 %v2007, 92
      %v2335 = vpop.permute.xlu0 %2334
      %2336 = vrot.lane.b32.xlu0 %v2003, 92
      %v2337 = vpop.permute.xlu0 %2336
      %2338 = vrot.lane.b32.xlu0 %v2008, 92
      %v2339 = vpop.permute.xlu0 %2338
      %vm2340 = vcmp.lt.s32.totalorder %v1197, 92
      %v2341 = vsel %vm2340, %v2333, %v2337
      %v2342 = vsel %vm2340, %v2335, %v2339
      %v2343 = vsel %vm2340, %v2329, %v2333
      %v2344 = vsel %vm2340, %v2331, %v2335
      %v2345 = vsel %vm2340, %v2325, %v2329
      %v2346 = vsel %vm2340, %v2327, %v2331
      %v2347 = vsel %vm2340, %v2321, %v2325
      %v2348 = vsel %vm2340, %v2323, %v2327
      %v2349 = vsel %vm2340, %v2337, %v2321
      %v2350 = vsel %vm2340, %v2339, %v2323
      %v2351 = vpack.c.bf16 %v2345, %v2347
      %v2352 = vpack.c.bf16 %v2341, %v2343
      %v2353 = vpack.c.bf16 %v2349, %v2349
      %v2354 = vpack.c.bf16 %v2346, %v2348
      %v2355 = vpack.c.bf16 %v2342, %v2344
      %v2356 = vpack.c.bf16 %v2350, %v2350
      %2357 = vst [vmem:[#allocation2 + $0x140] sm:$0xff] %v2351
      %2358 = vst [vmem:[#allocation2 + $0x148] sm:$0xff] %v2352
      %2359 = vst [vmem:[#allocation2 + $0x150] sm:$0xf] %v2353
      %2360 = vst [vmem:[#allocation2 + $0x154] sm:$0xff] %v2354
      %2361 = vst [vmem:[#allocation2 + $0x15c] sm:$0xff] %v2355
      %2362 = vst [vmem:[#allocation2 + $0x164] sm:$0xf] %v2356
      %v2363 = vld [vmem:[%s3] sm:$0xff]
      %v2364 = vld [vmem:[%s3 + $0x8] sm:$0xff]
      %v2365 = vld [vmem:[#allocation2] sm:$0xff]
      %v2366 = vld [vmem:[#allocation2 + $0x8] sm:$0xff]
      %v2367 = vld [vmem:[#allocation2 + $0x10] sm:$0xf]
      %v2368 = vld [vmem:[#allocation2 + $0x14] sm:$0xff]
      %v2369 = vld [vmem:[#allocation2 + $0x1c] sm:$0xff]
      %v2370 = vld [vmem:[#allocation2 + $0x24] sm:$0xf]
      %v2371 = vld [vmem:[#allocation2 + $0x28] sm:$0xff]
      %v2372 = vld [vmem:[#allocation2 + $0x30] sm:$0xff]
      %v2373 = vld [vmem:[#allocation2 + $0x38] sm:$0xf]
      %v2374 = vld [vmem:[#allocation2 + $0x3c] sm:$0xff]
      %v2375 = vld [vmem:[#allocation2 + $0x44] sm:$0xff]
      %v2376 = vld [vmem:[#allocation2 + $0x4c] sm:$0xf]
      %v2377 = vld [vmem:[#allocation2 + $0x50] sm:$0xff]
      %v2378 = vld [vmem:[#allocation2 + $0x58] sm:$0xff]
      %v2379 = vld [vmem:[#allocation2 + $0x60] sm:$0xf]
      %v2380 = vld [vmem:[#allocation2 + $0x64] sm:$0xff]
      %v2381 = vld [vmem:[#allocation2 + $0x6c] sm:$0xff]
      %v2382 = vld [vmem:[#allocation2 + $0x74] sm:$0xf]
      %v2383 = vld [vmem:[#allocation2 + $0x78] sm:$0xff]
      %v2384 = vld [vmem:[#allocation2 + $0x80] sm:$0xff]
      %v2385 = vld [vmem:[#allocation2 + $0x88] sm:$0xf]
      %v2386 = vld [vmem:[#allocation2 + $0x8c] sm:$0xff]
      %v2387 = vld [vmem:[#allocation2 + $0x94] sm:$0xff]
      %v2388 = vld [vmem:[#allocation2 + $0x9c] sm:$0xf]
      %v2389 = vld [vmem:[#allocation2 + $0xa0] sm:$0xff]
      %v2390 = vld [vmem:[#allocation2 + $0xa8] sm:$0xff]
      %v2391 = vld [vmem:[#allocation2 + $0xb0] sm:$0xf]
      %v2392 = vld [vmem:[#allocation2 + $0xb4] sm:$0xff]
      %v2393 = vld [vmem:[#allocation2 + $0xbc] sm:$0xff]
      %v2394 = vld [vmem:[#allocation2 + $0xc4] sm:$0xf]
      %v2395 = vld [vmem:[#allocation2 + $0xc8] sm:$0xff]
      %v2396 = vld [vmem:[#allocation2 + $0xd0] sm:$0xff]
      %v2397 = vld [vmem:[#allocation2 + $0xd8] sm:$0xf]
      %v2398 = vld [vmem:[#allocation2 + $0xdc] sm:$0xff]
      %v2399 = vld [vmem:[#allocation2 + $0xe4] sm:$0xff]
      %v2400 = vld [vmem:[#allocation2 + $0xec] sm:$0xf]
      %v2401 = vld [vmem:[#allocation2 + $0xf0] sm:$0xff]
      %v2402 = vld [vmem:[#allocation2 + $0xf8] sm:$0xff]
      %v2403 = vld [vmem:[#allocation2 + $0x100] sm:$0xf]
      %v2404 = vld [vmem:[#allocation2 + $0x104] sm:$0xff]
      %v2405 = vld [vmem:[#allocation2 + $0x10c] sm:$0xff]
      %v2406 = vld [vmem:[#allocation2 + $0x114] sm:$0xf]
      %v2407 = vld [vmem:[#allocation2 + $0x118] sm:$0xff]
      %v2408 = vld [vmem:[#allocation2 + $0x120] sm:$0xff]
      %v2409 = vld [vmem:[#allocation2 + $0x128] sm:$0xf]
      %v2410 = vld [vmem:[#allocation2 + $0x12c] sm:$0xff]
      %v2411 = vld [vmem:[#allocation2 + $0x134] sm:$0xff]
      %v2412 = vld [vmem:[#allocation2 + $0x13c] sm:$0xf]
      %v2413 = vld [vmem:[#allocation2 + $0x140] sm:$0xff]
      %v2414 = vld [vmem:[#allocation2 + $0x148] sm:$0xff]
      %v2415 = vld [vmem:[#allocation2 + $0x150] sm:$0xf]
      %v2416 = vld [vmem:[#allocation2 + $0x154] sm:$0xff]
      %v2417 = vld [vmem:[#allocation2 + $0x15c] sm:$0xff]
      %v2418 = vld [vmem:[#allocation2 + $0x164] sm:$0xf]
      %v2419 = vld [vmem:[%s4] sm:$0xff]
      %v2420 = vld [vmem:[%s4 + $0x8] sm:$0xff]
      %2422 = vset.pattern.permute.xlu0 0
      %2423 = vperm.xlu0 %2422, %v2419
      %v2424 = vpop.permute.xlu0 %2423
      %2427 = vset.pattern.permute.xlu0 0
      %2428 = vperm.xlu0 %2427, %v2420
      %v2429 = vpop.permute.xlu0 %2428
      %v2433 = vunpack.c.l.b16 %v2363
      %v2434 = vunpack.c.h.b16 %v2363
      %v2435 = vunpack.c.l.b16 %v2364
      %v2436 = vunpack.c.h.b16 %v2364
      %v2437 = vpack.c.b16 %v2435, %v2433
      %v2438 = vpack.c.b16 %v2436, %v2434
      %v2494 = vunpack.c.l.b16 %v2365
      %v2495 = vunpack.c.h.b16 %v2365
      %v2496 = vunpack.c.l.b16 %v2366
      %v2497 = vunpack.c.h.b16 %v2366
      %v2498 = vunpack.c.l.b16 %v2367
      %v2499 = vunpack.c.l.b16 %v2368
      %v2500 = vunpack.c.h.b16 %v2368
      %v2501 = vunpack.c.l.b16 %v2369
      %v2502 = vunpack.c.h.b16 %v2369
      %v2503 = vunpack.c.l.b16 %v2370
      %v2504 = vunpack.c.l.b16 %v2371
      %v2505 = vunpack.c.h.b16 %v2371
      %v2506 = vunpack.c.l.b16 %v2372
      %v2507 = vunpack.c.h.b16 %v2372
      %v2508 = vunpack.c.l.b16 %v2373
      %v2509 = vunpack.c.l.b16 %v2374
      %v2510 = vunpack.c.h.b16 %v2374
      %v2511 = vunpack.c.l.b16 %v2375
      %v2512 = vunpack.c.h.b16 %v2375
      %v2513 = vunpack.c.l.b16 %v2376
      %v2514 = vunpack.c.l.b16 %v2377
      %v2515 = vunpack.c.h.b16 %v2377
      %v2516 = vunpack.c.l.b16 %v2378
      %v2517 = vunpack.c.h.b16 %v2378
      %v2518 = vunpack.c.l.b16 %v2379
      %v2519 = vunpack.c.l.b16 %v2380
      %v2520 = vunpack.c.h.b16 %v2380
      %v2521 = vunpack.c.l.b16 %v2381
      %v2522 = vunpack.c.h.b16 %v2381
      %v2523 = vunpack.c.l.b16 %v2382
      %v2524 = vunpack.c.l.b16 %v2383
      %v2525 = vunpack.c.h.b16 %v2383
      %v2526 = vunpack.c.l.b16 %v2384
      %v2527 = vunpack.c.h.b16 %v2384
      %v2528 = vunpack.c.l.b16 %v2385
      %v2529 = vunpack.c.l.b16 %v2386
      %v2530 = vunpack.c.h.b16 %v2386
      %v2531 = vunpack.c.l.b16 %v2387
      %v2532 = vunpack.c.h.b16 %v2387
      %v2533 = vunpack.c.l.b16 %v2388
      %v2534 = vunpack.c.l.b16 %v2389
      %v2535 = vunpack.c.h.b16 %v2389
      %v2536 = vunpack.c.l.b16 %v2390
      %v2537 = vunpack.c.h.b16 %v2390
      %v2538 = vunpack.c.l.b16 %v2391
      %v2539 = vunpack.c.l.b16 %v2392
      %v2540 = vunpack.c.h.b16 %v2392
      %v2541 = vunpack.c.l.b16 %v2393
      %v2542 = vunpack.c.h.b16 %v2393
      %v2543 = vunpack.c.l.b16 %v2394
      %v2544 = vunpack.c.l.b16 %v2395
      %v2545 = vunpack.c.h.b16 %v2395
      %v2546 = vunpack.c.l.b16 %v2396
      %v2547 = vunpack.c.h.b16 %v2396
      %v2548 = vunpack.c.l.b16 %v2397
      %v2549 = vunpack.c.l.b16 %v2398
      %v2550 = vunpack.c.h.b16 %v2398
      %v2551 = vunpack.c.l.b16 %v2399
      %v2552 = vunpack.c.h.b16 %v2399
      %v2553 = vunpack.c.l.b16 %v2400
      %v2554 = vunpack.c.l.b16 %v2401
      %v2555 = vunpack.c.h.b16 %v2401
      %v2556 = vunpack.c.l.b16 %v2402
      %v2557 = vunpack.c.h.b16 %v2402
      %v2558 = vunpack.c.l.b16 %v2403
      %v2559 = vunpack.c.l.b16 %v2404
      %v2560 = vunpack.c.h.b16 %v2404
      %v2561 = vunpack.c.l.b16 %v2405
      %v2562 = vunpack.c.h.b16 %v2405
      %v2563 = vunpack.c.l.b16 %v2406
      %v2564 = vunpack.c.l.b16 %v2407
      %v2565 = vunpack.c.h.b16 %v2407
      %v2566 = vunpack.c.l.b16 %v2408
      %v2567 = vunpack.c.h.b16 %v2408
      %v2568 = vunpack.c.l.b16 %v2409
      %v2569 = vunpack.c.l.b16 %v2410
      %v2570 = vunpack.c.h.b16 %v2410
      %v2571 = vunpack.c.l.b16 %v2411
      %v2572 = vunpack.c.h.b16 %v2411
      %v2573 = vunpack.c.l.b16 %v2412
      %v2574 = vunpack.c.l.b16 %v2413
      %v2575 = vunpack.c.h.b16 %v2413
      %v2576 = vunpack.c.l.b16 %v2414
      %v2577 = vunpack.c.h.b16 %v2414
      %v2578 = vunpack.c.l.b16 %v2415
      %v2579 = vunpack.c.l.b16 %v2416
      %v2580 = vunpack.c.h.b16 %v2416
      %v2581 = vunpack.c.l.b16 %v2417
      %v2582 = vunpack.c.h.b16 %v2417
      %v2583 = vunpack.c.l.b16 %v2418
      %v2584 = vpack.c.b16 %v2499, %v2494
      %v2585 = vpack.c.b16 %v2500, %v2495
      %v2586 = vpack.c.b16 %v2501, %v2496
      %v2587 = vpack.c.b16 %v2502, %v2497
      %v2588 = vpack.c.b16 %v2503, %v2498
      %v2589 = vpack.c.b16 %v2509, %v2504
      %v2590 = vpack.c.b16 %v2510, %v2505
      %v2591 = vpack.c.b16 %v2511, %v2506
      %v2592 = vpack.c.b16 %v2512, %v2507
      %v2593 = vpack.c.b16 %v2513, %v2508
      %v2594 = vpack.c.b16 %v2519, %v2514
      %v2595 = vpack.c.b16 %v2520, %v2515
      %v2596 = vpack.c.b16 %v2521, %v2516
      %v2597 = vpack.c.b16 %v2522, %v2517
      %v2598 = vpack.c.b16 %v2523, %v2518
      %v2599 = vpack.c.b16 %v2529, %v2524
      %v2600 = vpack.c.b16 %v2530, %v2525
      %v2601 = vpack.c.b16 %v2531, %v2526
      %v2602 = vpack.c.b16 %v2532, %v2527
      %v2603 = vpack.c.b16 %v2533, %v2528
      %v2604 = vpack.c.b16 %v2539, %v2534
      %v2605 = vpack.c.b16 %v2540, %v2535
      %v2606 = vpack.c.b16 %v2541, %v2536
      %v2607 = vpack.c.b16 %v2542, %v2537
      %v2608 = vpack.c.b16 %v2543, %v2538
      %v2609 = vpack.c.b16 %v2549, %v2544
      %v2610 = vpack.c.b16 %v2550, %v2545
      %v2611 = vpack.c.b16 %v2551, %v2546
      %v2612 = vpack.c.b16 %v2552, %v2547
      %v2613 = vpack.c.b16 %v2553, %v2548
      %v2614 = vpack.c.b16 %v2559, %v2554
      %v2615 = vpack.c.b16 %v2560, %v2555
      %v2616 = vpack.c.b16 %v2561, %v2556
      %v2617 = vpack.c.b16 %v2562, %v2557
      %v2618 = vpack.c.b16 %v2563, %v2558
      %v2619 = vpack.c.b16 %v2569, %v2564
      %v2620 = vpack.c.b16 %v2570, %v2565
      %v2621 = vpack.c.b16 %v2571, %v2566
      %v2622 = vpack.c.b16 %v2572, %v2567
      %v2623 = vpack.c.b16 %v2573, %v2568
      %v2624 = vpack.c.b16 %v2579, %v2574
      %v2625 = vpack.c.b16 %v2580, %v2575
      %v2626 = vpack.c.b16 %v2581, %v2576
      %v2627 = vpack.c.b16 %v2582, %v2577
      %v2628 = vpack.c.b16 %v2583, %v2578
      %vm2674 = vcmask 130048
      %v2676 = vsel %vm2674, %v2438, 0
      %2678 = vmatpush.bf16.msra.mxu0 %v2619
      %2679 = vmatpush.bf16.msra.mxu0 %v2614
      %2680 = vmatpush.bf16.msra.mxu0 %v2609
      %2681 = vmatpush.bf16.msra.mxu0 %v2604
      %2682 = vmatpush.bf16.msra.mxu0 %v2599
      %2683 = vmatpush.bf16.msra.mxu0 %v2594
      %2684 = vmatpush.bf16.msra.mxu0 %v2589
      %2685 = vmatpush.bf16.msra.mxu0 %v2584
      %2686 = vmatmul.bf16.gmra.mxu0 %v2437
      %v2687 = vpop.f32.mrf.mxu0
      %v2688 = vadd.f32 %v2424, %v2687
      %v2689 = vpop.f32.mrf.mxu0
      %v2690 = vadd.f32 %v2429, %v2689
      %2691 = vdwg.mxu0
      %2692 = vmatpush.bf16.msra.mxu0 0
      %2693 = vmatpush.bf16.msra.mxu0 0
      %2694 = vmatpush.bf16.msra.mxu0 0
      %2695 = vmatpush.bf16.msra.mxu0 0
      %2696 = vmatpush.bf16.msra.mxu0 0
      %2697 = vmatpush.bf16.msra.mxu0 0
      %2698 = vmatpush.bf16.msra.mxu0 0
      %2699 = vmatpush.bf16.msra.mxu0 %v2624
      %2700 = vmatmul.bf16.gmra.mxu0 %v2676
      %v2701 = vpop.f32.mrf.mxu0
      %v2702 = vadd.f32 %v2688, %v2701
      %v2703 = vpop.f32.mrf.mxu0
      %v2704 = vadd.f32 %v2690, %v2703
      %2705 = vdwg.mxu0
      %2706 = vmatpush.bf16.msra.mxu0 %v2620
      %2707 = vmatpush.bf16.msra.mxu0 %v2615
      %2708 = vmatpush.bf16.msra.mxu0 %v2610
      %2709 = vmatpush.bf16.msra.mxu0 %v2605
      %2710 = vmatpush.bf16.msra.mxu0 %v2600
      %2711 = vmatpush.bf16.msra.mxu0 %v2595
      %2712 = vmatpush.bf16.msra.mxu0 %v2590
      %2713 = vmatpush.bf16.msra.mxu0 %v2585
      %2714 = vmatmul.bf16.gmra.mxu0 %v2437
      %v2715 = vpop.f32.mrf.mxu0
      %v2716 = vadd.f32 %v2424, %v2715
      %v2717 = vpop.f32.mrf.mxu0
      %v2718 = vadd.f32 %v2429, %v2717
      %2719 = vdwg.mxu0
      %2720 = vmatpush.bf16.msra.mxu0 0
      %2721 = vmatpush.bf16.msra.mxu0 0
      %2722 = vmatpush.bf16.msra.mxu0 0
      %2723 = vmatpush.bf16.msra.mxu0 0
      %2724 = vmatpush.bf16.msra.mxu0 0
      %2725 = vmatpush.bf16.msra.mxu0 0
      %2726 = vmatpush.bf16.msra.mxu0 0
      %2727 = vmatpush.bf16.msra.mxu0 %v2625
      %2728 = vmatmul.bf16.gmra.mxu0 %v2676
      %v2729 = vpop.f32.mrf.mxu0
      %v2730 = vadd.f32 %v2716, %v2729
      %v2731 = vpop.f32.mrf.mxu0
      %v2732 = vadd.f32 %v2718, %v2731
      %2733 = vdwg.mxu0
      %2734 = vmatpush.bf16.msra.mxu0 %v2621
      %2735 = vmatpush.bf16.msra.mxu0 %v2616
      %2736 = vmatpush.bf16.msra.mxu0 %v2611
      %2737 = vmatpush.bf16.msra.mxu0 %v2606
      %2738 = vmatpush.bf16.msra.mxu0 %v2601
      %2739 = vmatpush.bf16.msra.mxu0 %v2596
      %2740 = vmatpush.bf16.msra.mxu0 %v2591
      %2741 = vmatpush.bf16.msra.mxu0 %v2586
      %2742 = vmatmul.bf16.gmra.mxu0 %v2437
      %v2743 = vpop.f32.mrf.mxu0
      %v2744 = vadd.f32 %v2424, %v2743
      %v2745 = vpop.f32.mrf.mxu0
      %v2746 = vadd.f32 %v2429, %v2745
      %2747 = vdwg.mxu0
      %2748 = vmatpush.bf16.msra.mxu0 0
      %2749 = vmatpush.bf16.msra.mxu0 0
      %2750 = vmatpush.bf16.msra.mxu0 0
      %2751 = vmatpush.bf16.msra.mxu0 0
      %2752 = vmatpush.bf16.msra.mxu0 0
      %2753 = vmatpush.bf16.msra.mxu0 0
      %2754 = vmatpush.bf16.msra.mxu0 0
      %2755 = vmatpush.bf16.msra.mxu0 %v2626
      %2756 = vmatmul.bf16.gmra.mxu0 %v2676
      %v2757 = vpop.f32.mrf.mxu0
      %v2758 = vadd.f32 %v2744, %v2757
      %v2759 = vpop.f32.mrf.mxu0
      %v2760 = vadd.f32 %v2746, %v2759
      %2761 = vdwg.mxu0
      %2762 = vmatpush.bf16.msra.mxu0 %v2622
      %2763 = vmatpush.bf16.msra.mxu0 %v2617
      %2764 = vmatpush.bf16.msra.mxu0 %v2612
      %2765 = vmatpush.bf16.msra.mxu0 %v2607
      %2766 = vmatpush.bf16.msra.mxu0 %v2602
      %2767 = vmatpush.bf16.msra.mxu0 %v2597
      %2768 = vmatpush.bf16.msra.mxu0 %v2592
      %2769 = vmatpush.bf16.msra.mxu0 %v2587
      %2770 = vmatmul.bf16.gmra.mxu0 %v2437
      %v2771 = vpop.f32.mrf.mxu0
      %v2772 = vadd.f32 %v2424, %v2771
      %v2773 = vpop.f32.mrf.mxu0
      %v2774 = vadd.f32 %v2429, %v2773
      %2775 = vdwg.mxu0
      %2776 = vmatpush.bf16.msra.mxu0 0
      %2777 = vmatpush.bf16.msra.mxu0 0
      %2778 = vmatpush.bf16.msra.mxu0 0
      %2779 = vmatpush.bf16.msra.mxu0 0
      %2780 = vmatpush.bf16.msra.mxu0 0
      %2781 = vmatpush.bf16.msra.mxu0 0
      %2782 = vmatpush.bf16.msra.mxu0 0
      %2783 = vmatpush.bf16.msra.mxu0 %v2627
      %2784 = vmatmul.bf16.gmra.mxu0 %v2676
      %v2785 = vpop.f32.mrf.mxu0
      %v2786 = vadd.f32 %v2772, %v2785
      %v2787 = vpop.f32.mrf.mxu0
      %v2788 = vadd.f32 %v2774, %v2787
      %2789 = vdwg.mxu0
      %2790 = vmatpush.bf16.msra.mxu0 %v2623
      %2791 = vmatpush.bf16.msra.mxu0 %v2618
      %2792 = vmatpush.bf16.msra.mxu0 %v2613
      %2793 = vmatpush.bf16.msra.mxu0 %v2608
      %2794 = vmatpush.bf16.msra.mxu0 %v2603
      %2795 = vmatpush.bf16.msra.mxu0 %v2598
      %2796 = vmatpush.bf16.msra.mxu0 %v2593
      %2797 = vmatpush.bf16.msra.mxu0 %v2588
      %2798 = vmatmul.bf16.gmra.mxu0 %v2437
      %v2799 = vpop.f32.mrf.mxu0
      %v2800 = vadd.f32 %v2424, %v2799
      %v2801 = vpop.f32.mrf.mxu0
      %v2802 = vadd.f32 %v2429, %v2801
      %2803 = vdwg.mxu0
      %2804 = vmatpush.bf16.msra.mxu0 0
      %2805 = vmatpush.bf16.msra.mxu0 0
      %2806 = vmatpush.bf16.msra.mxu0 0
      %2807 = vmatpush.bf16.msra.mxu0 0
      %2808 = vmatpush.bf16.msra.mxu0 0
      %2809 = vmatpush.bf16.msra.mxu0 0
      %2810 = vmatpush.bf16.msra.mxu0 0
      %2811 = vmatpush.bf16.msra.mxu0 %v2628
      %2812 = vmatmul.bf16.gmra.mxu0 %v2676
      %v2813 = vpop.f32.mrf.mxu0
      %v2814 = vadd.f32 %v2800, %v2813
      %v2815 = vpop.f32.mrf.mxu0
      %v2816 = vadd.f32 %v2802, %v2815
      %2817 = vdwg.mxu0
      %vm2818 = vcmp.ge.f32.partialorder %v2702, 0.0
      %vm2819 = vcmp.ge.f32.partialorder %v2730, 0.0
      %vm2820 = vcmp.ge.f32.partialorder %v2758, 0.0
      %vm2821 = vcmp.ge.f32.partialorder %v2786, 0.0
      %vm2822 = vcmp.ge.f32.partialorder %v2814, 0.0
      %vm2823 = vcmp.ge.f32.partialorder %v2704, 0.0
      %vm2824 = vcmp.ge.f32.partialorder %v2732, 0.0
      %vm2825 = vcmp.ge.f32.partialorder %v2760, 0.0
      %vm2826 = vcmp.ge.f32.partialorder %v2788, 0.0
      %vm2827 = vcmp.ge.f32.partialorder %v2816, 0.0
      %v2828 = vmul.f32 %v2702, 0.1
      %v2829 = vmul.f32 %v2730, 0.1
      %v2830 = vmul.f32 %v2758, 0.1
      %v2831 = vmul.f32 %v2786, 0.1
      %v2832 = vmul.f32 %v2814, 0.1
      %v2833 = vmul.f32 %v2704, 0.1
      %v2834 = vmul.f32 %v2732, 0.1
      %v2835 = vmul.f32 %v2760, 0.1
      %v2836 = vmul.f32 %v2788, 0.1
      %v2837 = vmul.f32 %v2816, 0.1
      %v2838 = vsel %vm2818, %v2702, %v2828
      %v2839 = vsel %vm2819, %v2730, %v2829
      %v2840 = vsel %vm2820, %v2758, %v2830
      %v2841 = vsel %vm2821, %v2786, %v2831
      %v2842 = vsel %vm2822, %v2814, %v2832
      %v2843 = vsel %vm2823, %v2704, %v2833
      %v2844 = vsel %vm2824, %v2732, %v2834
      %v2845 = vsel %vm2825, %v2760, %v2835
      %v2846 = vsel %vm2826, %v2788, %v2836
      %v2847 = vsel %vm2827, %v2816, %v2837
      %v2848 = vpack.c.bf16 %v2839, %v2838
      %v2849 = vpack.c.bf16 %v2841, %v2840
      %v2850 = vpack.c.bf16 %v2842, %v2842
      %v2851 = vpack.c.bf16 %v2844, %v2843
      %v2852 = vpack.c.bf16 %v2846, %v2845
      %v2853 = vpack.c.bf16 %v2847, %v2847
      %2854 = vst [vmem:[#allocation2] sm:$0xff] %v2848
      %2855 = vst [vmem:[#allocation2 + $0x8] sm:$0xff] %v2849
      %2856 = vst [vmem:[#allocation2 + $0x10] sm:$0xf] %v2850
      %2857 = vst [vmem:[#allocation2 + $0x14] sm:$0xff] %v2851
      %2858 = vst [vmem:[#allocation2 + $0x1c] sm:$0xff] %v2852
      %2859 = vst [vmem:[#allocation2 + $0x24] sm:$0xf] %v2853
      %2860 = vrot.lane.b32.xlu0 %v2838, 127
      %v2861 = vpop.permute.xlu0 %2860
      %2862 = vrot.lane.b32.xlu0 %v2843, 127
      %v2863 = vpop.permute.xlu0 %2862
      %2864 = vrot.lane.b32.xlu0 %v2839, 127
      %v2865 = vpop.permute.xlu0 %2864
      %2866 = vrot.lane.b32.xlu0 %v2844, 127
      %v2867 = vpop.permute.xlu0 %2866
      %2868 = vrot.lane.b32.xlu0 %v2840, 127
      %v2869 = vpop.permute.xlu0 %2868
      %2870 = vrot.lane.b32.xlu0 %v2845, 127
      %v2871 = vpop.permute.xlu0 %2870
      %2872 = vrot.lane.b32.xlu0 %v2841, 127
      %v2873 = vpop.permute.xlu0 %2872
      %2874 = vrot.lane.b32.xlu0 %v2846, 127
      %v2875 = vpop.permute.xlu0 %2874
      %2876 = vrot.lane.b32.xlu0 %v2842, 127
      %v2877 = vpop.permute.xlu0 %2876
      %2878 = vrot.lane.b32.xlu0 %v2847, 127
      %v2879 = vpop.permute.xlu0 %2878
      %v2880 = vsel %vm2041, %v2873, %v2877
      %v2881 = vsel %vm2041, %v2875, %v2879
      %v2882 = vsel %vm2041, %v2869, %v2873
      %v2883 = vsel %vm2041, %v2871, %v2875
      %v2884 = vsel %vm2041, %v2865, %v2869
      %v2885 = vsel %vm2041, %v2867, %v2871
      %v2886 = vsel %vm2041, %v2861, %v2865
      %v2887 = vsel %vm2041, %v2863, %v2867
      %v2888 = vsel %vm2041, %v2877, %v2861
      %v2889 = vsel %vm2041, %v2879, %v2863
      %v2890 = vpack.c.bf16 %v2884, %v2886
      %v2891 = vpack.c.bf16 %v2880, %v2882
      %v2892 = vpack.c.bf16 %v2888, %v2888
      %v2893 = vpack.c.bf16 %v2885, %v2887
      %v2894 = vpack.c.bf16 %v2881, %v2883
      %v2895 = vpack.c.bf16 %v2889, %v2889
      %2896 = vst [vmem:[#allocation2 + $0x28] sm:$0xff] %v2890
      %2897 = vst [vmem:[#allocation2 + $0x30] sm:$0xff] %v2891
      %2898 = vst [vmem:[#allocation2 + $0x38] sm:$0xf] %v2892
      %2899 = vst [vmem:[#allocation2 + $0x3c] sm:$0xff] %v2893
      %2900 = vst [vmem:[#allocation2 + $0x44] sm:$0xff] %v2894
      %2901 = vst [vmem:[#allocation2 + $0x4c] sm:$0xf] %v2895
      %2902 = vrot.lane.b32.xlu0 %v2838, 126
      %v2903 = vpop.permute.xlu0 %2902
      %2904 = vrot.lane.b32.xlu0 %v2843, 126
      %v2905 = vpop.permute.xlu0 %2904
      %2906 = vrot.lane.b32.xlu0 %v2839, 126
      %v2907 = vpop.permute.xlu0 %2906
      %2908 = vrot.lane.b32.xlu0 %v2844, 126
      %v2909 = vpop.permute.xlu0 %2908
      %2910 = vrot.lane.b32.xlu0 %v2840, 126
      %v2911 = vpop.permute.xlu0 %2910
      %2912 = vrot.lane.b32.xlu0 %v2845, 126
      %v2913 = vpop.permute.xlu0 %2912
      %2914 = vrot.lane.b32.xlu0 %v2841, 126
      %v2915 = vpop.permute.xlu0 %2914
      %2916 = vrot.lane.b32.xlu0 %v2846, 126
      %v2917 = vpop.permute.xlu0 %2916
      %2918 = vrot.lane.b32.xlu0 %v2842, 126
      %v2919 = vpop.permute.xlu0 %2918
      %2920 = vrot.lane.b32.xlu0 %v2847, 126
      %v2921 = vpop.permute.xlu0 %2920
      %v2922 = vsel %vm2084, %v2915, %v2919
      %v2923 = vsel %vm2084, %v2917, %v2921
      %v2924 = vsel %vm2084, %v2911, %v2915
      %v2925 = vsel %vm2084, %v2913, %v2917
      %v2926 = vsel %vm2084, %v2907, %v2911
      %v2927 = vsel %vm2084, %v2909, %v2913
      %v2928 = vsel %vm2084, %v2903, %v2907
      %v2929 = vsel %vm2084, %v2905, %v2909
      %v2930 = vsel %vm2084, %v2919, %v2903
      %v2931 = vsel %vm2084, %v2921, %v2905
      %v2932 = vpack.c.bf16 %v2926, %v2928
      %v2933 = vpack.c.bf16 %v2922, %v2924
      %v2934 = vpack.c.bf16 %v2930, %v2930
      %v2935 = vpack.c.bf16 %v2927, %v2929
      %v2936 = vpack.c.bf16 %v2923, %v2925
      %v2937 = vpack.c.bf16 %v2931, %v2931
      %2938 = vst [vmem:[#allocation2 + $0x50] sm:$0xff] %v2932
      %2939 = vst [vmem:[#allocation2 + $0x58] sm:$0xff] %v2933
      %2940 = vst [vmem:[#allocation2 + $0x60] sm:$0xf] %v2934
      %2941 = vst [vmem:[#allocation2 + $0x64] sm:$0xff] %v2935
      %2942 = vst [vmem:[#allocation2 + $0x6c] sm:$0xff] %v2936
      %2943 = vst [vmem:[#allocation2 + $0x74] sm:$0xf] %v2937
      %2944 = vrot.lane.b32.xlu0 %v2838, 111
      %v2945 = vpop.permute.xlu0 %2944
      %2946 = vrot.lane.b32.xlu0 %v2843, 111
      %v2947 = vpop.permute.xlu0 %2946
      %2948 = vrot.lane.b32.xlu0 %v2839, 111
      %v2949 = vpop.permute.xlu0 %2948
      %2950 = vrot.lane.b32.xlu0 %v2844, 111
      %v2951 = vpop.permute.xlu0 %2950
      %2952 = vrot.lane.b32.xlu0 %v2840, 111
      %v2953 = vpop.permute.xlu0 %2952
      %2954 = vrot.lane.b32.xlu0 %v2845, 111
      %v2955 = vpop.permute.xlu0 %2954
      %2956 = vrot.lane.b32.xlu0 %v2841, 111
      %v2957 = vpop.permute.xlu0 %2956
      %2958 = vrot.lane.b32.xlu0 %v2846, 111
      %v2959 = vpop.permute.xlu0 %2958
      %2960 = vrot.lane.b32.xlu0 %v2842, 111
      %v2961 = vpop.permute.xlu0 %2960
      %2962 = vrot.lane.b32.xlu0 %v2847, 111
      %v2963 = vpop.permute.xlu0 %2962
      %v2964 = vsel %vm1198, %v2957, %v2961
      %v2965 = vsel %vm1198, %v2959, %v2963
      %v2966 = vsel %vm1198, %v2953, %v2957
      %v2967 = vsel %vm1198, %v2955, %v2959
      %v2968 = vsel %vm1198, %v2949, %v2953
      %v2969 = vsel %vm1198, %v2951, %v2955
      %v2970 = vsel %vm1198, %v2945, %v2949
      %v2971 = vsel %vm1198, %v2947, %v2951
      %v2972 = vsel %vm1198, %v2961, %v2945
      %v2973 = vsel %vm1198, %v2963, %v2947
      %v2974 = vpack.c.bf16 %v2968, %v2970
      %v2975 = vpack.c.bf16 %v2964, %v2966
      %v2976 = vpack.c.bf16 %v2972, %v2972
      %v2977 = vpack.c.bf16 %v2969, %v2971
      %v2978 = vpack.c.bf16 %v2965, %v2967
      %v2979 = vpack.c.bf16 %v2973, %v2973
      %2980 = vst [vmem:[#allocation2 + $0x78] sm:$0xff] %v2974
      %2981 = vst [vmem:[#allocation2 + $0x80] sm:$0xff] %v2975
      %2982 = vst [vmem:[#allocation2 + $0x88] sm:$0xf] %v2976
      %2983 = vst [vmem:[#allocation2 + $0x8c] sm:$0xff] %v2977
      %2984 = vst [vmem:[#allocation2 + $0x94] sm:$0xff] %v2978
      %2985 = vst [vmem:[#allocation2 + $0x9c] sm:$0xf] %v2979
      %2986 = vrot.lane.b32.xlu0 %v2838, 110
      %v2987 = vpop.permute.xlu0 %2986
      %2988 = vrot.lane.b32.xlu0 %v2843, 110
      %v2989 = vpop.permute.xlu0 %2988
      %2990 = vrot.lane.b32.xlu0 %v2839, 110
      %v2991 = vpop.permute.xlu0 %2990
      %2992 = vrot.lane.b32.xlu0 %v2844, 110
      %v2993 = vpop.permute.xlu0 %2992
      %2994 = vrot.lane.b32.xlu0 %v2840, 110
      %v2995 = vpop.permute.xlu0 %2994
      %2996 = vrot.lane.b32.xlu0 %v2845, 110
      %v2997 = vpop.permute.xlu0 %2996
      %2998 = vrot.lane.b32.xlu0 %v2841, 110
      %v2999 = vpop.permute.xlu0 %2998
      %3000 = vrot.lane.b32.xlu0 %v2846, 110
      %v3001 = vpop.permute.xlu0 %3000
      %3002 = vrot.lane.b32.xlu0 %v2842, 110
      %v3003 = vpop.permute.xlu0 %3002
      %3004 = vrot.lane.b32.xlu0 %v2847, 110
      %v3005 = vpop.permute.xlu0 %3004
      %v3006 = vsel %vm2169, %v2999, %v3003
      %v3007 = vsel %vm2169, %v3001, %v3005
      %v3008 = vsel %vm2169, %v2995, %v2999
      %v3009 = vsel %vm2169, %v2997, %v3001
      %v3010 = vsel %vm2169, %v2991, %v2995
      %v3011 = vsel %vm2169, %v2993, %v2997
      %v3012 = vsel %vm2169, %v2987, %v2991
      %v3013 = vsel %vm2169, %v2989, %v2993
      %v3014 = vsel %vm2169, %v3003, %v2987
      %v3015 = vsel %vm2169, %v3005, %v2989
      %v3016 = vpack.c.bf16 %v3010, %v3012
      %v3017 = vpack.c.bf16 %v3006, %v3008
      %v3018 = vpack.c.bf16 %v3014, %v3014
      %v3019 = vpack.c.bf16 %v3011, %v3013
      %v3020 = vpack.c.bf16 %v3007, %v3009
      %v3021 = vpack.c.bf16 %v3015, %v3015
      %3022 = vst [vmem:[#allocation2 + $0xa0] sm:$0xff] %v3016
      %3023 = vst [vmem:[#allocation2 + $0xa8] sm:$0xff] %v3017
      %3024 = vst [vmem:[#allocation2 + $0xb0] sm:$0xf] %v3018
      %3025 = vst [vmem:[#allocation2 + $0xb4] sm:$0xff] %v3019
      %3026 = vst [vmem:[#allocation2 + $0xbc] sm:$0xff] %v3020
      %3027 = vst [vmem:[#allocation2 + $0xc4] sm:$0xf] %v3021
      %3028 = vrot.lane.b32.xlu0 %v2838, 109
      %v3029 = vpop.permute.xlu0 %3028
      %3030 = vrot.lane.b32.xlu0 %v2843, 109
      %v3031 = vpop.permute.xlu0 %3030
      %3032 = vrot.lane.b32.xlu0 %v2839, 109
      %v3033 = vpop.permute.xlu0 %3032
      %3034 = vrot.lane.b32.xlu0 %v2844, 109
      %v3035 = vpop.permute.xlu0 %3034
      %3036 = vrot.lane.b32.xlu0 %v2840, 109
      %v3037 = vpop.permute.xlu0 %3036
      %3038 = vrot.lane.b32.xlu0 %v2845, 109
      %v3039 = vpop.permute.xlu0 %3038
      %3040 = vrot.lane.b32.xlu0 %v2841, 109
      %v3041 = vpop.permute.xlu0 %3040
      %3042 = vrot.lane.b32.xlu0 %v2846, 109
      %v3043 = vpop.permute.xlu0 %3042
      %3044 = vrot.lane.b32.xlu0 %v2842, 109
      %v3045 = vpop.permute.xlu0 %3044
      %3046 = vrot.lane.b32.xlu0 %v2847, 109
      %v3047 = vpop.permute.xlu0 %3046
      %v3048 = vsel %vm2212, %v3041, %v3045
      %v3049 = vsel %vm2212, %v3043, %v3047
      %v3050 = vsel %vm2212, %v3037, %v3041
      %v3051 = vsel %vm2212, %v3039, %v3043
      %v3052 = vsel %vm2212, %v3033, %v3037
      %v3053 = vsel %vm2212, %v3035, %v3039
      %v3054 = vsel %vm2212, %v3029, %v3033
      %v3055 = vsel %vm2212, %v3031, %v3035
      %v3056 = vsel %vm2212, %v3045, %v3029
      %v3057 = vsel %vm2212, %v3047, %v3031
      %v3058 = vpack.c.bf16 %v3052, %v3054
      %v3059 = vpack.c.bf16 %v3048, %v3050
      %v3060 = vpack.c.bf16 %v3056, %v3056
      %v3061 = vpack.c.bf16 %v3053, %v3055
      %v3062 = vpack.c.bf16 %v3049, %v3051
      %v3063 = vpack.c.bf16 %v3057, %v3057
      %3064 = vst [vmem:[#allocation2 + $0xc8] sm:$0xff] %v3058
      %3065 = vst [vmem:[#allocation2 + $0xd0] sm:$0xff] %v3059
      %3066 = vst [vmem:[#allocation2 + $0xd8] sm:$0xf] %v3060
      %3067 = vst [vmem:[#allocation2 + $0xdc] sm:$0xff] %v3061
      %3068 = vst [vmem:[#allocation2 + $0xe4] sm:$0xff] %v3062
      %3069 = vst [vmem:[#allocation2 + $0xec] sm:$0xf] %v3063
      %3070 = vrot.lane.b32.xlu0 %v2838, 94
      %v3071 = vpop.permute.xlu0 %3070
      %3072 = vrot.lane.b32.xlu0 %v2843, 94
      %v3073 = vpop.permute.xlu0 %3072
      %3074 = vrot.lane.b32.xlu0 %v2839, 94
      %v3075 = vpop.permute.xlu0 %3074
      %3076 = vrot.lane.b32.xlu0 %v2844, 94
      %v3077 = vpop.permute.xlu0 %3076
      %3078 = vrot.lane.b32.xlu0 %v2840, 94
      %v3079 = vpop.permute.xlu0 %3078
      %3080 = vrot.lane.b32.xlu0 %v2845, 94
      %v3081 = vpop.permute.xlu0 %3080
      %3082 = vrot.lane.b32.xlu0 %v2841, 94
      %v3083 = vpop.permute.xlu0 %3082
      %3084 = vrot.lane.b32.xlu0 %v2846, 94
      %v3085 = vpop.permute.xlu0 %3084
      %3086 = vrot.lane.b32.xlu0 %v2842, 94
      %v3087 = vpop.permute.xlu0 %3086
      %3088 = vrot.lane.b32.xlu0 %v2847, 94
      %v3089 = vpop.permute.xlu0 %3088
      %v3090 = vsel %vm1239, %v3083, %v3087
      %v3091 = vsel %vm1239, %v3085, %v3089
      %v3092 = vsel %vm1239, %v3079, %v3083
      %v3093 = vsel %vm1239, %v3081, %v3085
      %v3094 = vsel %vm1239, %v3075, %v3079
      %v3095 = vsel %vm1239, %v3077, %v3081
      %v3096 = vsel %vm1239, %v3071, %v3075
      %v3097 = vsel %vm1239, %v3073, %v3077
      %v3098 = vsel %vm1239, %v3087, %v3071
      %v3099 = vsel %vm1239, %v3089, %v3073
      %v3100 = vpack.c.bf16 %v3094, %v3096
      %v3101 = vpack.c.bf16 %v3090, %v3092
      %v3102 = vpack.c.bf16 %v3098, %v3098
      %v3103 = vpack.c.bf16 %v3095, %v3097
      %v3104 = vpack.c.bf16 %v3091, %v3093
      %v3105 = vpack.c.bf16 %v3099, %v3099
      %3106 = vst [vmem:[#allocation2 + $0xf0] sm:$0xff] %v3100
      %3107 = vst [vmem:[#allocation2 + $0xf8] sm:$0xff] %v3101
      %3108 = vst [vmem:[#allocation2 + $0x100] sm:$0xf] %v3102
      %3109 = vst [vmem:[#allocation2 + $0x104] sm:$0xff] %v3103
      %3110 = vst [vmem:[#allocation2 + $0x10c] sm:$0xff] %v3104
      %3111 = vst [vmem:[#allocation2 + $0x114] sm:$0xf] %v3105
      %3112 = vrot.lane.b32.xlu0 %v2838, 93
      %v3113 = vpop.permute.xlu0 %3112
      %3114 = vrot.lane.b32.xlu0 %v2843, 93
      %v3115 = vpop.permute.xlu0 %3114
      %3116 = vrot.lane.b32.xlu0 %v2839, 93
      %v3117 = vpop.permute.xlu0 %3116
      %3118 = vrot.lane.b32.xlu0 %v2844, 93
      %v3119 = vpop.permute.xlu0 %3118
      %3120 = vrot.lane.b32.xlu0 %v2840, 93
      %v3121 = vpop.permute.xlu0 %3120
      %3122 = vrot.lane.b32.xlu0 %v2845, 93
      %v3123 = vpop.permute.xlu0 %3122
      %3124 = vrot.lane.b32.xlu0 %v2841, 93
      %v3125 = vpop.permute.xlu0 %3124
      %3126 = vrot.lane.b32.xlu0 %v2846, 93
      %v3127 = vpop.permute.xlu0 %3126
      %3128 = vrot.lane.b32.xlu0 %v2842, 93
      %v3129 = vpop.permute.xlu0 %3128
      %3130 = vrot.lane.b32.xlu0 %v2847, 93
      %v3131 = vpop.permute.xlu0 %3130
      %v3132 = vsel %vm2297, %v3125, %v3129
      %v3133 = vsel %vm2297, %v3127, %v3131
      %v3134 = vsel %vm2297, %v3121, %v3125
      %v3135 = vsel %vm2297, %v3123, %v3127
      %v3136 = vsel %vm2297, %v3117, %v3121
      %v3137 = vsel %vm2297, %v3119, %v3123
      %v3138 = vsel %vm2297, %v3113, %v3117
      %v3139 = vsel %vm2297, %v3115, %v3119
      %v3140 = vsel %vm2297, %v3129, %v3113
      %v3141 = vsel %vm2297, %v3131, %v3115
      %v3142 = vpack.c.bf16 %v3136, %v3138
      %v3143 = vpack.c.bf16 %v3132, %v3134
      %v3144 = vpack.c.bf16 %v3140, %v3140
      %v3145 = vpack.c.bf16 %v3137, %v3139
      %v3146 = vpack.c.bf16 %v3133, %v3135
      %v3147 = vpack.c.bf16 %v3141, %v3141
      %3148 = vst [vmem:[#allocation2 + $0x118] sm:$0xff] %v3142
      %3149 = vst [vmem:[#allocation2 + $0x120] sm:$0xff] %v3143
      %3150 = vst [vmem:[#allocation2 + $0x128] sm:$0xf] %v3144
      %3151 = vst [vmem:[#allocation2 + $0x12c] sm:$0xff] %v3145
      %3152 = vst [vmem:[#allocation2 + $0x134] sm:$0xff] %v3146
      %3153 = vst [vmem:[#allocation2 + $0x13c] sm:$0xf] %v3147
      %3154 = vrot.lane.b32.xlu0 %v2838, 92
      %v3155 = vpop.permute.xlu0 %3154
      %3156 = vrot.lane.b32.xlu0 %v2843, 92
      %v3157 = vpop.permute.xlu0 %3156
      %3158 = vrot.lane.b32.xlu0 %v2839, 92
      %v3159 = vpop.permute.xlu0 %3158
      %3160 = vrot.lane.b32.xlu0 %v2844, 92
      %v3161 = vpop.permute.xlu0 %3160
      %3162 = vrot.lane.b32.xlu0 %v2840, 92
      %v3163 = vpop.permute.xlu0 %3162
      %3164 = vrot.lane.b32.xlu0 %v2845, 92
      %v3165 = vpop.permute.xlu0 %3164
      %3166 = vrot.lane.b32.xlu0 %v2841, 92
      %v3167 = vpop.permute.xlu0 %3166
      %3168 = vrot.lane.b32.xlu0 %v2846, 92
      %v3169 = vpop.permute.xlu0 %3168
      %3170 = vrot.lane.b32.xlu0 %v2842, 92
      %v3171 = vpop.permute.xlu0 %3170
      %3172 = vrot.lane.b32.xlu0 %v2847, 92
      %v3173 = vpop.permute.xlu0 %3172
      %v3174 = vsel %vm2340, %v3167, %v3171
      %v3175 = vsel %vm2340, %v3169, %v3173
      %v3176 = vsel %vm2340, %v3163, %v3167
      %v3177 = vsel %vm2340, %v3165, %v3169
      %v3178 = vsel %vm2340, %v3159, %v3163
      %v3179 = vsel %vm2340, %v3161, %v3165
      %v3180 = vsel %vm2340, %v3155, %v3159
      %v3181 = vsel %vm2340, %v3157, %v3161
      %v3182 = vsel %vm2340, %v3171, %v3155
      %v3183 = vsel %vm2340, %v3173, %v3157
      %v3184 = vpack.c.bf16 %v3178, %v3180
      %v3185 = vpack.c.bf16 %v3174, %v3176
      %v3186 = vpack.c.bf16 %v3182, %v3182
      %v3187 = vpack.c.bf16 %v3179, %v3181
      %v3188 = vpack.c.bf16 %v3175, %v3177
      %v3189 = vpack.c.bf16 %v3183, %v3183
      %3190 = vst [vmem:[#allocation2 + $0x140] sm:$0xff] %v3184
      %3191 = vst [vmem:[#allocation2 + $0x148] sm:$0xff] %v3185
      %3192 = vst [vmem:[#allocation2 + $0x150] sm:$0xf] %v3186
      %3193 = vst [vmem:[#allocation2 + $0x154] sm:$0xff] %v3187
      %3194 = vst [vmem:[#allocation2 + $0x15c] sm:$0xff] %v3188
      %3195 = vst [vmem:[#allocation2 + $0x164] sm:$0xf] %v3189
      %v3196 = vld [vmem:[%s5] sm:$0xff]
      %v3197 = vld [vmem:[#allocation2] sm:$0xff]
      %v3198 = vld [vmem:[#allocation2 + $0x8] sm:$0xff]
      %v3199 = vld [vmem:[#allocation2 + $0x10] sm:$0xf]
      %v3200 = vld [vmem:[#allocation2 + $0x14] sm:$0xff]
      %v3201 = vld [vmem:[#allocation2 + $0x1c] sm:$0xff]
      %v3202 = vld [vmem:[#allocation2 + $0x24] sm:$0xf]
      %v3203 = vld [vmem:[#allocation2 + $0x28] sm:$0xff]
      %v3204 = vld [vmem:[#allocation2 + $0x30] sm:$0xff]
      %v3205 = vld [vmem:[#allocation2 + $0x38] sm:$0xf]
      %v3206 = vld [vmem:[#allocation2 + $0x3c] sm:$0xff]
      %v3207 = vld [vmem:[#allocation2 + $0x44] sm:$0xff]
      %v3208 = vld [vmem:[#allocation2 + $0x4c] sm:$0xf]
      %v3209 = vld [vmem:[#allocation2 + $0x50] sm:$0xff]
      %v3210 = vld [vmem:[#allocation2 + $0x58] sm:$0xff]
      %v3211 = vld [vmem:[#allocation2 + $0x60] sm:$0xf]
      %v3212 = vld [vmem:[#allocation2 + $0x64] sm:$0xff]
      %v3213 = vld [vmem:[#allocation2 + $0x6c] sm:$0xff]
      %v3214 = vld [vmem:[#allocation2 + $0x74] sm:$0xf]
      %v3215 = vld [vmem:[#allocation2 + $0x78] sm:$0xff]
      %v3216 = vld [vmem:[#allocation2 + $0x80] sm:$0xff]
      %v3217 = vld [vmem:[#allocation2 + $0x88] sm:$0xf]
      %v3218 = vld [vmem:[#allocation2 + $0x8c] sm:$0xff]
      %v3219 = vld [vmem:[#allocation2 + $0x94] sm:$0xff]
      %v3220 = vld [vmem:[#allocation2 + $0x9c] sm:$0xf]
      %v3221 = vld [vmem:[#allocation2 + $0xa0] sm:$0xff]
      %v3222 = vld [vmem:[#allocation2 + $0xa8] sm:$0xff]
      %v3223 = vld [vmem:[#allocation2 + $0xb0] sm:$0xf]
      %v3224 = vld [vmem:[#allocation2 + $0xb4] sm:$0xff]
      %v3225 = vld [vmem:[#allocation2 + $0xbc] sm:$0xff]
      %v3226 = vld [vmem:[#allocation2 + $0xc4] sm:$0xf]
      %v3227 = vld [vmem:[#allocation2 + $0xc8] sm:$0xff]
      %v3228 = vld [vmem:[#allocation2 + $0xd0] sm:$0xff]
      %v3229 = vld [vmem:[#allocation2 + $0xd8] sm:$0xf]
      %v3230 = vld [vmem:[#allocation2 + $0xdc] sm:$0xff]
      %v3231 = vld [vmem:[#allocation2 + $0xe4] sm:$0xff]
      %v3232 = vld [vmem:[#allocation2 + $0xec] sm:$0xf]
      %v3233 = vld [vmem:[#allocation2 + $0xf0] sm:$0xff]
      %v3234 = vld [vmem:[#allocation2 + $0xf8] sm:$0xff]
      %v3235 = vld [vmem:[#allocation2 + $0x100] sm:$0xf]
      %v3236 = vld [vmem:[#allocation2 + $0x104] sm:$0xff]
      %v3237 = vld [vmem:[#allocation2 + $0x10c] sm:$0xff]
      %v3238 = vld [vmem:[#allocation2 + $0x114] sm:$0xf]
      %v3239 = vld [vmem:[#allocation2 + $0x118] sm:$0xff]
      %v3240 = vld [vmem:[#allocation2 + $0x120] sm:$0xff]
      %v3241 = vld [vmem:[#allocation2 + $0x128] sm:$0xf]
      %v3242 = vld [vmem:[#allocation2 + $0x12c] sm:$0xff]
      %v3243 = vld [vmem:[#allocation2 + $0x134] sm:$0xff]
      %v3244 = vld [vmem:[#allocation2 + $0x13c] sm:$0xf]
      %v3245 = vld [vmem:[#allocation2 + $0x140] sm:$0xff]
      %v3246 = vld [vmem:[#allocation2 + $0x148] sm:$0xff]
      %v3247 = vld [vmem:[#allocation2 + $0x150] sm:$0xf]
      %v3248 = vld [vmem:[#allocation2 + $0x154] sm:$0xff]
      %v3249 = vld [vmem:[#allocation2 + $0x15c] sm:$0xff]
      %v3250 = vld [vmem:[#allocation2 + $0x164] sm:$0xf]
      %v3251 = vld [vmem:[%s6] sm:$0xff]
      %3253 = vset.pattern.permute.xlu0 0
      %3254 = vperm.xlu0 %3253, %v3251
      %v3255 = vpop.permute.xlu0 %3254
      %v3258 = vunpack.c.l.b16 %v3196
      %v3259 = vunpack.c.h.b16 %v3196
      %v3260 = vpack.c.b16 %v3258, %v3258
      %v3261 = vpack.c.b16 %v3259, %v3259
      %v3317 = vunpack.c.l.b16 %v3197
      %v3318 = vunpack.c.h.b16 %v3197
      %v3319 = vunpack.c.l.b16 %v3198
      %v3320 = vunpack.c.h.b16 %v3198
      %v3321 = vunpack.c.l.b16 %v3199
      %v3322 = vunpack.c.l.b16 %v3200
      %v3323 = vunpack.c.h.b16 %v3200
      %v3324 = vunpack.c.l.b16 %v3201
      %v3325 = vunpack.c.h.b16 %v3201
      %v3326 = vunpack.c.l.b16 %v3202
      %v3327 = vunpack.c.l.b16 %v3203
      %v3328 = vunpack.c.h.b16 %v3203
      %v3329 = vunpack.c.l.b16 %v3204
      %v3330 = vunpack.c.h.b16 %v3204
      %v3331 = vunpack.c.l.b16 %v3205
      %v3332 = vunpack.c.l.b16 %v3206
      %v3333 = vunpack.c.h.b16 %v3206
      %v3334 = vunpack.c.l.b16 %v3207
      %v3335 = vunpack.c.h.b16 %v3207
      %v3336 = vunpack.c.l.b16 %v3208
      %v3337 = vunpack.c.l.b16 %v3209
      %v3338 = vunpack.c.h.b16 %v3209
      %v3339 = vunpack.c.l.b16 %v3210
      %v3340 = vunpack.c.h.b16 %v3210
      %v3341 = vunpack.c.l.b16 %v3211
      %v3342 = vunpack.c.l.b16 %v3212
      %v3343 = vunpack.c.h.b16 %v3212
      %v3344 = vunpack.c.l.b16 %v3213
      %v3345 = vunpack.c.h.b16 %v3213
      %v3346 = vunpack.c.l.b16 %v3214
      %v3347 = vunpack.c.l.b16 %v3215
      %v3348 = vunpack.c.h.b16 %v3215
      %v3349 = vunpack.c.l.b16 %v3216
      %v3350 = vunpack.c.h.b16 %v3216
      %v3351 = vunpack.c.l.b16 %v3217
      %v3352 = vunpack.c.l.b16 %v3218
      %v3353 = vunpack.c.h.b16 %v3218
      %v3354 = vunpack.c.l.b16 %v3219
      %v3355 = vunpack.c.h.b16 %v3219
      %v3356 = vunpack.c.l.b16 %v3220
      %v3357 = vunpack.c.l.b16 %v3221
      %v3358 = vunpack.c.h.b16 %v3221
      %v3359 = vunpack.c.l.b16 %v3222
      %v3360 = vunpack.c.h.b16 %v3222
      %v3361 = vunpack.c.l.b16 %v3223
      %v3362 = vunpack.c.l.b16 %v3224
      %v3363 = vunpack.c.h.b16 %v3224
      %v3364 = vunpack.c.l.b16 %v3225
      %v3365 = vunpack.c.h.b16 %v3225
      %v3366 = vunpack.c.l.b16 %v3226
      %v3367 = vunpack.c.l.b16 %v3227
      %v3368 = vunpack.c.h.b16 %v3227
      %v3369 = vunpack.c.l.b16 %v3228
      %v3370 = vunpack.c.h.b16 %v3228
      %v3371 = vunpack.c.l.b16 %v3229
      %v3372 = vunpack.c.l.b16 %v3230
      %v3373 = vunpack.c.h.b16 %v3230
      %v3374 = vunpack.c.l.b16 %v3231
      %v3375 = vunpack.c.h.b16 %v3231
      %v3376 = vunpack.c.l.b16 %v3232
      %v3377 = vunpack.c.l.b16 %v3233
      %v3378 = vunpack.c.h.b16 %v3233
      %v3379 = vunpack.c.l.b16 %v3234
      %v3380 = vunpack.c.h.b16 %v3234
      %v3381 = vunpack.c.l.b16 %v3235
      %v3382 = vunpack.c.l.b16 %v3236
      %v3383 = vunpack.c.h.b16 %v3236
      %v3384 = vunpack.c.l.b16 %v3237
      %v3385 = vunpack.c.h.b16 %v3237
      %v3386 = vunpack.c.l.b16 %v3238
      %v3387 = vunpack.c.l.b16 %v3239
      %v3388 = vunpack.c.h.b16 %v3239
      %v3389 = vunpack.c.l.b16 %v3240
      %v3390 = vunpack.c.h.b16 %v3240
      %v3391 = vunpack.c.l.b16 %v3241
      %v3392 = vunpack.c.l.b16 %v3242
      %v3393 = vunpack.c.h.b16 %v3242
      %v3394 = vunpack.c.l.b16 %v3243
      %v3395 = vunpack.c.h.b16 %v3243
      %v3396 = vunpack.c.l.b16 %v3244
      %v3397 = vunpack.c.l.b16 %v3245
      %v3398 = vunpack.c.h.b16 %v3245
      %v3399 = vunpack.c.l.b16 %v3246
      %v3400 = vunpack.c.h.b16 %v3246
      %v3401 = vunpack.c.l.b16 %v3247
      %v3402 = vunpack.c.l.b16 %v3248
      %v3403 = vunpack.c.h.b16 %v3248
      %v3404 = vunpack.c.l.b16 %v3249
      %v3405 = vunpack.c.h.b16 %v3249
      %v3406 = vunpack.c.l.b16 %v3250
      %v3407 = vpack.c.b16 %v3322, %v3317
      %v3408 = vpack.c.b16 %v3323, %v3318
      %v3409 = vpack.c.b16 %v3324, %v3319
      %v3410 = vpack.c.b16 %v3325, %v3320
      %v3411 = vpack.c.b16 %v3326, %v3321
      %v3412 = vpack.c.b16 %v3332, %v3327
      %v3413 = vpack.c.b16 %v3333, %v3328
      %v3414 = vpack.c.b16 %v3334, %v3329
      %v3415 = vpack.c.b16 %v3335, %v3330
      %v3416 = vpack.c.b16 %v3336, %v3331
      %v3417 = vpack.c.b16 %v3342, %v3337
      %v3418 = vpack.c.b16 %v3343, %v3338
      %v3419 = vpack.c.b16 %v3344, %v3339
      %v3420 = vpack.c.b16 %v3345, %v3340
      %v3421 = vpack.c.b16 %v3346, %v3341
      %v3422 = vpack.c.b16 %v3352, %v3347
      %v3423 = vpack.c.b16 %v3353, %v3348
      %v3424 = vpack.c.b16 %v3354, %v3349
      %v3425 = vpack.c.b16 %v3355, %v3350
      %v3426 = vpack.c.b16 %v3356, %v3351
      %v3427 = vpack.c.b16 %v3362, %v3357
      %v3428 = vpack.c.b16 %v3363, %v3358
      %v3429 = vpack.c.b16 %v3364, %v3359
      %v3430 = vpack.c.b16 %v3365, %v3360
      %v3431 = vpack.c.b16 %v3366, %v3361
      %v3432 = vpack.c.b16 %v3372, %v3367
      %v3433 = vpack.c.b16 %v3373, %v3368
      %v3434 = vpack.c.b16 %v3374, %v3369
      %v3435 = vpack.c.b16 %v3375, %v3370
      %v3436 = vpack.c.b16 %v3376, %v3371
      %v3437 = vpack.c.b16 %v3382, %v3377
      %v3438 = vpack.c.b16 %v3383, %v3378
      %v3439 = vpack.c.b16 %v3384, %v3379
      %v3440 = vpack.c.b16 %v3385, %v3380
      %v3441 = vpack.c.b16 %v3386, %v3381
      %v3442 = vpack.c.b16 %v3392, %v3387
      %v3443 = vpack.c.b16 %v3393, %v3388
      %v3444 = vpack.c.b16 %v3394, %v3389
      %v3445 = vpack.c.b16 %v3395, %v3390
      %v3446 = vpack.c.b16 %v3396, %v3391
      %v3447 = vpack.c.b16 %v3402, %v3397
      %v3448 = vpack.c.b16 %v3403, %v3398
      %v3449 = vpack.c.b16 %v3404, %v3399
      %v3450 = vpack.c.b16 %v3405, %v3400
      %v3451 = vpack.c.b16 %v3406, %v3401
      %v3498 = vsel %vm2674, %v3261, 0
      %3500 = vmatpush.bf16.msra.mxu0 %v3442
      %3501 = vmatpush.bf16.msra.mxu0 %v3437
      %3502 = vmatpush.bf16.msra.mxu0 %v3432
      %3503 = vmatpush.bf16.msra.mxu0 %v3427
      %3504 = vmatpush.bf16.msra.mxu0 %v3422
      %3505 = vmatpush.bf16.msra.mxu0 %v3417
      %3506 = vmatpush.bf16.msra.mxu0 %v3412
      %3507 = vmatpush.bf16.msra.mxu0 %v3407
      %3508 = vmatmul.bf16.gmra.mxu0 %v3260
      %v3509 = vpop.f32.mrf.mxu0
      %v3510 = vadd.f32 %v3255, %v3509
      %v3511 = vpop.f32.mrf.mxu0
      %3512 = vdwg.mxu0
      %3513 = vmatpush.bf16.msra.mxu0 0
      %3514 = vmatpush.bf16.msra.mxu0 0
      %3515 = vmatpush.bf16.msra.mxu0 0
      %3516 = vmatpush.bf16.msra.mxu0 0
      %3517 = vmatpush.bf16.msra.mxu0 0
      %3518 = vmatpush.bf16.msra.mxu0 0
      %3519 = vmatpush.bf16.msra.mxu0 0
      %3520 = vmatpush.bf16.msra.mxu0 %v3447
      %3521 = vmatmul.bf16.gmra.mxu0 %v3498
      %v3522 = vpop.f32.mrf.mxu0
      %v3523 = vadd.f32 %v3510, %v3522
      %v3524 = vpop.f32.mrf.mxu0
      %3525 = vdwg.mxu0
      %3526 = vmatpush.bf16.msra.mxu0 %v3443
      %3527 = vmatpush.bf16.msra.mxu0 %v3438
      %3528 = vmatpush.bf16.msra.mxu0 %v3433
      %3529 = vmatpush.bf16.msra.mxu0 %v3428
      %3530 = vmatpush.bf16.msra.mxu0 %v3423
      %3531 = vmatpush.bf16.msra.mxu0 %v3418
      %3532 = vmatpush.bf16.msra.mxu0 %v3413
      %3533 = vmatpush.bf16.msra.mxu0 %v3408
      %3534 = vmatmul.bf16.gmra.mxu0 %v3260
      %v3535 = vpop.f32.mrf.mxu0
      %v3536 = vadd.f32 %v3255, %v3535
      %v3537 = vpop.f32.mrf.mxu0
      %3538 = vdwg.mxu0
      %3539 = vmatpush.bf16.msra.mxu0 0
      %3540 = vmatpush.bf16.msra.mxu0 0
      %3541 = vmatpush.bf16.msra.mxu0 0
      %3542 = vmatpush.bf16.msra.mxu0 0
      %3543 = vmatpush.bf16.msra.mxu0 0
      %3544 = vmatpush.bf16.msra.mxu0 0
      %3545 = vmatpush.bf16.msra.mxu0 0
      %3546 = vmatpush.bf16.msra.mxu0 %v3448
      %3547 = vmatmul.bf16.gmra.mxu0 %v3498
      %v3548 = vpop.f32.mrf.mxu0
      %v3549 = vadd.f32 %v3536, %v3548
      %v3550 = vpop.f32.mrf.mxu0
      %3551 = vdwg.mxu0
      %3552 = vmatpush.bf16.msra.mxu0 %v3444
      %3553 = vmatpush.bf16.msra.mxu0 %v3439
      %3554 = vmatpush.bf16.msra.mxu0 %v3434
      %3555 = vmatpush.bf16.msra.mxu0 %v3429
      %3556 = vmatpush.bf16.msra.mxu0 %v3424
      %3557 = vmatpush.bf16.msra.mxu0 %v3419
      %3558 = vmatpush.bf16.msra.mxu0 %v3414
      %3559 = vmatpush.bf16.msra.mxu0 %v3409
      %3560 = vmatmul.bf16.gmra.mxu0 %v3260
      %v3561 = vpop.f32.mrf.mxu0
      %v3562 = vadd.f32 %v3255, %v3561
      %v3563 = vpop.f32.mrf.mxu0
      %3564 = vdwg.mxu0
      %3565 = vmatpush.bf16.msra.mxu0 0
      %3566 = vmatpush.bf16.msra.mxu0 0
      %3567 = vmatpush.bf16.msra.mxu0 0
      %3568 = vmatpush.bf16.msra.mxu0 0
      %3569 = vmatpush.bf16.msra.mxu0 0
      %3570 = vmatpush.bf16.msra.mxu0 0
      %3571 = vmatpush.bf16.msra.mxu0 0
      %3572 = vmatpush.bf16.msra.mxu0 %v3449
      %3573 = vmatmul.bf16.gmra.mxu0 %v3498
      %v3574 = vpop.f32.mrf.mxu0
      %v3575 = vadd.f32 %v3562, %v3574
      %v3576 = vpop.f32.mrf.mxu0
      %3577 = vdwg.mxu0
      %3578 = vmatpush.bf16.msra.mxu0 %v3445
      %3579 = vmatpush.bf16.msra.mxu0 %v3440
      %3580 = vmatpush.bf16.msra.mxu0 %v3435
      %3581 = vmatpush.bf16.msra.mxu0 %v3430
      %3582 = vmatpush.bf16.msra.mxu0 %v3425
      %3583 = vmatpush.bf16.msra.mxu0 %v3420
      %3584 = vmatpush.bf16.msra.mxu0 %v3415
      %3585 = vmatpush.bf16.msra.mxu0 %v3410
      %3586 = vmatmul.bf16.gmra.mxu0 %v3260
      %v3587 = vpop.f32.mrf.mxu0
      %v3588 = vadd.f32 %v3255, %v3587
      %v3589 = vpop.f32.mrf.mxu0
      %3590 = vdwg.mxu0
      %3591 = vmatpush.bf16.msra.mxu0 0
      %3592 = vmatpush.bf16.msra.mxu0 0
      %3593 = vmatpush.bf16.msra.mxu0 0
      %3594 = vmatpush.bf16.msra.mxu0 0
      %3595 = vmatpush.bf16.msra.mxu0 0
      %3596 = vmatpush.bf16.msra.mxu0 0
      %3597 = vmatpush.bf16.msra.mxu0 0
      %3598 = vmatpush.bf16.msra.mxu0 %v3450
      %3599 = vmatmul.bf16.gmra.mxu0 %v3498
      %v3600 = vpop.f32.mrf.mxu0
      %v3601 = vadd.f32 %v3588, %v3600
      %v3602 = vpop.f32.mrf.mxu0
      %3603 = vdwg.mxu0
      %3604 = vmatpush.bf16.msra.mxu0 %v3446
      %3605 = vmatpush.bf16.msra.mxu0 %v3441
      %3606 = vmatpush.bf16.msra.mxu0 %v3436
      %3607 = vmatpush.bf16.msra.mxu0 %v3431
      %3608 = vmatpush.bf16.msra.mxu0 %v3426
      %3609 = vmatpush.bf16.msra.mxu0 %v3421
      %3610 = vmatpush.bf16.msra.mxu0 %v3416
      %3611 = vmatpush.bf16.msra.mxu0 %v3411
      %3612 = vmatmul.bf16.gmra.mxu0 %v3260
      %v3613 = vpop.f32.mrf.mxu0
      %v3614 = vadd.f32 %v3255, %v3613
      %v3615 = vpop.f32.mrf.mxu0
      %3616 = vdwg.mxu0
      %3617 = vmatpush.bf16.msra.mxu0 0
      %3618 = vmatpush.bf16.msra.mxu0 0
      %3619 = vmatpush.bf16.msra.mxu0 0
      %3620 = vmatpush.bf16.msra.mxu0 0
      %3621 = vmatpush.bf16.msra.mxu0 0
      %3622 = vmatpush.bf16.msra.mxu0 0
      %3623 = vmatpush.bf16.msra.mxu0 0
      %3624 = vmatpush.bf16.msra.mxu0 %v3451
      %3625 = vmatmul.bf16.gmra.mxu0 %v3498
      %v3626 = vpop.f32.mrf.mxu0
      %v3627 = vadd.f32 %v3614, %v3626
      %v3628 = vpop.f32.mrf.mxu0
      %3629 = vdwg.mxu0
      %vm3630 = vcmp.ge.f32.partialorder %v3523, 0.0
      %vm3631 = vcmp.ge.f32.partialorder %v3549, 0.0
      %vm3632 = vcmp.ge.f32.partialorder %v3575, 0.0
      %vm3633 = vcmp.ge.f32.partialorder %v3601, 0.0
      %vm3634 = vcmp.ge.f32.partialorder %v3627, 0.0
      %v3635 = vmul.f32 %v3523, 0.1
      %v3636 = vmul.f32 %v3549, 0.1
      %v3637 = vmul.f32 %v3575, 0.1
      %v3638 = vmul.f32 %v3601, 0.1
      %v3639 = vmul.f32 %v3627, 0.1
      %v3640 = vsel %vm3630, %v3523, %v3635
      %v3641 = vsel %vm3631, %v3549, %v3636
      %v3642 = vsel %vm3632, %v3575, %v3637
      %v3643 = vsel %vm3633, %v3601, %v3638
      %v3644 = vsel %vm3634, %v3627, %v3639
      %v3645 = vld [vmem:[%s7] sm:$0x1]
      %v3646 = vpack.c.bf16 %v3640, %v3640
      %v3647 = vpack.c.bf16 %v3641, %v3641
      %v3648 = vpack.c.bf16 %v3642, %v3642
      %v3649 = vpack.c.bf16 %v3643, %v3643
      %v3650 = vpack.c.bf16 %v3644, %v3644
      %v3651 = vld [vmem:[#allocation3] sm:$0x1]
      %3653 = vset.pattern.permute.xlu0 0
      %3654 = vperm.xlu0 %3653, %v3651
      %v3655 = vpop.permute.xlu0 %3654
      %v3657 = vperm.slane %v3655, 0
      %vm3658 = vcmask 64512
      %v3660 = vsel %vm3658, %v3645, 0
      %v3663 = vsel %vm615, %v3646, 0
      %v3666 = vsel %vm615, %v3647, 0
      %v3669 = vsel %vm615, %v3648, 0
      %v3672 = vsel %vm615, %v3649, 0
      %v3675 = vsel %vm615, %v3650, 0
      %3677 = vmatpush.bf16.msra.mxu0 0
      %3678 = vmatpush.bf16.msra.mxu0 0
      %3679 = vmatpush.bf16.msra.mxu0 0
      %3680 = vmatpush.bf16.msra.mxu0 0
      %3681 = vmatpush.bf16.msra.mxu0 0
      %3682 = vmatpush.bf16.msra.mxu0 0
      %3683 = vmatpush.bf16.msra.mxu0 0
      %3684 = vmatpush.bf16.msra.mxu0 %v3663
      %3685 = vmatmul.bf16.gmra.mxu0 %v3660
      %v3686 = vpop.f32.mrf.mxu0
      %v3687 = vadd.f32 %v3657, %v3686
      %v3688 = vpop.f32.mrf.mxu0
      %3689 = vdwg.mxu0
      %3690 = vmatpush.bf16.msra.mxu0 0
      %3691 = vmatpush.bf16.msra.mxu0 0
      %3692 = vmatpush.bf16.msra.mxu0 0
      %3693 = vmatpush.bf16.msra.mxu0 0
      %3694 = vmatpush.bf16.msra.mxu0 0
      %3695 = vmatpush.bf16.msra.mxu0 0
      %3696 = vmatpush.bf16.msra.mxu0 0
      %3697 = vmatpush.bf16.msra.mxu0 %v3666
      %3698 = vmatmul.bf16.gmra.mxu0 %v3660
      %v3699 = vpop.f32.mrf.mxu0
      %v3700 = vadd.f32 %v3657, %v3699
      %v3701 = vpop.f32.mrf.mxu0
      %3702 = vdwg.mxu0
      %3703 = vmatpush.bf16.msra.mxu0 0
      %3704 = vmatpush.bf16.msra.mxu0 0
      %3705 = vmatpush.bf16.msra.mxu0 0
      %3706 = vmatpush.bf16.msra.mxu0 0
      %3707 = vmatpush.bf16.msra.mxu0 0
      %3708 = vmatpush.bf16.msra.mxu0 0
      %3709 = vmatpush.bf16.msra.mxu0 0
      %3710 = vmatpush.bf16.msra.mxu0 %v3669
      %3711 = vmatmul.bf16.gmra.mxu0 %v3660
      %v3712 = vpop.f32.mrf.mxu0
      %v3713 = vadd.f32 %v3657, %v3712
      %v3714 = vpop.f32.mrf.mxu0
      %3715 = vdwg.mxu0
      %3716 = vmatpush.bf16.msra.mxu0 0
      %3717 = vmatpush.bf16.msra.mxu0 0
      %3718 = vmatpush.bf16.msra.mxu0 0
      %3719 = vmatpush.bf16.msra.mxu0 0
      %3720 = vmatpush.bf16.msra.mxu0 0
      %3721 = vmatpush.bf16.msra.mxu0 0
      %3722 = vmatpush.bf16.msra.mxu0 0
      %3723 = vmatpush.bf16.msra.mxu0 %v3672
      %3724 = vmatmul.bf16.gmra.mxu0 %v3660
      %v3725 = vpop.f32.mrf.mxu0
      %v3726 = vadd.f32 %v3657, %v3725
      %v3727 = vpop.f32.mrf.mxu0
      %3728 = vdwg.mxu0
      %3729 = vmatpush.bf16.msra.mxu0 0
      %3730 = vmatpush.bf16.msra.mxu0 0
      %3731 = vmatpush.bf16.msra.mxu0 0
      %3732 = vmatpush.bf16.msra.mxu0 0
      %3733 = vmatpush.bf16.msra.mxu0 0
      %3734 = vmatpush.bf16.msra.mxu0 0
      %3735 = vmatpush.bf16.msra.mxu0 0
      %3736 = vmatpush.bf16.msra.mxu0 %v3675
      %3737 = vmatmul.bf16.gmra.mxu0 %v3660
      %v3738 = vpop.f32.mrf.mxu0
      %v3739 = vadd.f32 %v3657, %v3738
      %v3740 = vpop.f32.mrf.mxu0
      %3741 = vdwg.mxu0
      %v3747 = vrot.slane %v3700, 7
      %v3748 = vrot.slane %v3713, 6
      %v3749 = vrot.slane %v3726, 5
      %v3750 = vrot.slane %v3739, 4
      %vm3751 = vcmask 1040384
      %v3752 = vsel %vm3751, %v3687, %v3747
      %vm3753 = vcmask 1041408
      %v3754 = vsel %vm3753, %v3752, %v3748
      %vm3755 = vcmask 1043459
      %v3756 = vsel %vm3755, %v3749, %v3750
      %vm3757 = vcmask 1042432
      %v3758 = vsel %vm3757, %v3754, %v3756
      %v3760 = vlaneseq
      %vm3761 = vcmp.ge.s32.totalorder %v3760, 0
      %vm3762 = vcmp.lt.s32.totalorder %v3760, 640
      %vm3763 = vmand %vm3761, %vm3762
      %3764 = vst.msk [vmem:[%s332] sm:$0x1f] %vm3763, %v3758
      %p3765 = scmp.lt.s32.totalorder %s22, 1
      %s3766 = scalar_select %p3765, %s22, 1
      %s3767 = smul.addr %s3766, 5
      %s3768 = scalar_lea.vmem %s9, %s3767
      // Predicated region
      $region57: #{tcrnet_lite_forward.1} parent=55 // pred_check
        %p3769 = pneg %p234
      $region58: #{tcrnet_lite_forward.1} parent=55 // pred_check_branch
        %3771 = sbr.rel (%p3769) target = $region60
      $region59: #{tcrnet_lite_forward.1} parent=55 // pred_region
        _
      $region60: #{tcrnet_lite_forward.1} parent=55 // pred_fallthru
        _
    $region56: #{tcrnet_lite_forward.1} parent=5 // pred_fallthru
      _
    %p3772 = scmp.le.s32.totalorder 2, %s17
    // Predicated region
    $region61: #{tcrnet_lite_forward.1} parent=5 // pred_check
      %p3773 = pneg %p3772
    $region62: #{tcrnet_lite_forward.1} parent=5 // pred_check_branch
      %3775 = sbr.rel (%p3773) target = $region64
    $region63: #{tcrnet_lite_forward.1} parent=5 // pred_region
      %s3776 = ssub.s32 %s17, 2
      // Predicated region
      $region65: #{tcrnet_lite_forward.1} parent=63 // pred_check
        %p3777 = pneg %p240
      $region66: #{tcrnet_lite_forward.1} parent=63 // pred_check_branch
        %3779 = sbr.rel (%p3777) target = $region68
      $region67: #{tcrnet_lite_forward.1} parent=63 // pred_region
        %p3780 = scmp.lt.s32.totalorder %s23, 1
        %s3781 = scalar_select %p3780, %s23, 1
        %s3782 = smul.addr %s3781, 5
        %s3783 = scalar_lea.vmem %s9, %s3782
      $region68: #{tcrnet_lite_forward.1} parent=63 // pred_fallthru
        _
    $region64: #{tcrnet_lite_forward.1} parent=5 // pred_fallthru
      _
  $region6: #{tcrnet_lite_forward.1} parent=0 // loop_footer
    %s21 = sadd.s32 1, %s17
  $region7: #{tcrnet_lite_forward.1} parent=0 // loop_footer_branch
    %16 = sbr.rel target = $region3
  $region8: #{tcrnet_lite_forward.1} parent=0 // loop_exit
    _

</llo_original>
